<compile_context>
chip_gen: v7x
topology: tpu7x:2x2x1
jax: 0.10.0
libtpu: 0.0.40
codegen_flags: <defaults>
</compile_context>

<pallas_src>
import jax
import jax.numpy as jnp
import numpy as np
from jax.experimental import pallas as pl
from jax.experimental.pallas import tpu as pltpu


def channel_gate_kernel(x_ref, wc_ref, bc_ref, wfc_ref, bfc_ref, o_ref):
    # x_ref:   (C, H, W, TB)   input block, batch in lanes
    # wc_ref:  (3*3*C*C,)      SMEM flat conv weight, index ((kh*3+kw)*C + ci)*C + co
    # bc_ref:  (C,)            SMEM conv bias
    # wfc_ref: (C, C)          VMEM fc weight (out, in)
    # bfc_ref: (C, 1)          VMEM fc bias (column)
    # o_ref:   (C, TB)         output gates, batch in lanes
    C, H, W, TB = x_ref.shape
    oh = (H - 3) // 2 + 1          # PyTorch valid-conv stride-2 output size
    ow = (W - 3) // 2 + 1

    # Per-output-channel accumulators, (oh, ow, TB): batch stays in lanes.
    accs = [jnp.zeros((oh, ow, TB), jnp.float32) for _ in range(C)]

    # 3x3 stride-2 valid conv: 9 strided taps, scalar-weight (SMEM) x vector MACs.
    # NOTE: fully unrolled over (kh, kw, ci, co); fine for small C. For large C
    # (9*C approaching 128) switch this to an im2col MXU matmul instead.
    for kh in range(3):
        for kw in range(3):
            # Only the positions the stride-2 conv actually reads (stride only
            # on non-lane dims; lane dim TB stays contiguous).
            taps = x_ref[:, pl.ds(kh, oh, stride=2),
                         pl.ds(kw, ow, stride=2), :].astype(jnp.float32)  # (C, oh, ow, TB)
            for ci in range(C):
                tap = taps[ci]                                  # (oh, ow, TB)
                base = ((kh * 3 + kw) * C + ci) * C
                for co in range(C):
                    accs[co] = accs[co] + wc_ref[base + co] * tap

    # Conv bias + ReLU, then global average pool -> gap: (C, TB)
    inv_hw = 1.0 / float(oh * ow)
    pooled = []
    for co in range(C):
        conv = jnp.maximum(accs[co] + bc_ref[co], 0.0)          # bias + ReLU
        pooled.append(jnp.sum(conv, axis=(0, 1)) * inv_hw)      # GAP -> (TB,)
    gap = jnp.stack(pooled, axis=0)                             # (C, TB)

    # Linear (x @ W.T + b) as one 2D matmul, then ReLU -> sigmoid -> round.
    y = jnp.dot(wfc_ref[...].astype(jnp.float32), gap,
                preferred_element_type=jnp.float32)             # (C, TB)
    y = y + bfc_ref[...].astype(jnp.float32)
    y = jnp.maximum(y, 0.0)
    y = jax.nn.sigmoid(y)
    o_ref[...] = jnp.round(y).astype(o_ref.dtype)


def channel_gate(x, w_conv, b_conv, w_fc, b_fc, *, batch_tile=None):
    """x: (N, C, H, W) f32; w_conv: (C, C, 3, 3) [OIHW]; b_conv: (C,);
    w_fc: (C, C) [out, in]; b_fc: (C,). Returns (N, C) f32 of {0., 1.} gates."""
    N, C, H, W = x.shape
    assert H >= 3 and W >= 3, "3x3 valid conv needs H, W >= 3"

    # Batch tile: lane-dense up to 128. (On v7x, for large N, keep the grid
    # length >= 2 so both TensorCores get work; with tb = min(N, 128) that
    # holds whenever N > 128.)
    tb = batch_tile if batch_tile is not None else min(N, 128)
    grid = (pl.cdiv(N, tb),)

    # Batch-in-lanes layout for the input; flatten conv params for SMEM scalars.
    x_t = jnp.transpose(x, (1, 2, 3, 0))                          # (C, H, W, N)
    wc_flat = jnp.transpose(w_conv, (2, 3, 1, 0)).reshape(-1)     # (kh, kw, ci, co)
    bfc_col = b_fc.reshape(C, 1)

    out_cn = pl.pallas_call(
        channel_gate_kernel,
        out_shape=jax.ShapeDtypeStruct((C, N), jnp.float32),
        grid_spec=pltpu.PrefetchScalarGridSpec(
            num_scalar_prefetch=0,
            grid=grid,
            in_specs=[
                pl.BlockSpec((C, H, W, tb), lambda b: (0, 0, 0, b)),
                pl.BlockSpec(memory_space=pltpu.MemorySpace.SMEM),   # conv weight (flat)
                pl.BlockSpec(memory_space=pltpu.MemorySpace.SMEM),   # conv bias
                pl.BlockSpec((C, C), lambda b: (0, 0)),              # fc weight
                pl.BlockSpec((C, 1), lambda b: (0, 0)),              # fc bias
            ],
            out_specs=pl.BlockSpec((C, tb), lambda b: (0, b)),
        ),
        compiler_params=pltpu.CompilerParams(
            dimension_semantics=("parallel",),
            vmem_limit_bytes=32 * 1024 * 1024,   # safe on v5e/v6e/v7x; workload needs ~1 MiB
        ),
    )(x_t, wc_flat, b_conv, w_fc, bfc_col)

    # TODO(synk): torch.squeeze collapses the batch dim when N == 1 (PyTorch
    # returns shape (C,)); this wrapper always returns (N, C).
    return out_cn.T


def channel_gate_reference(x, w_conv, b_conv, w_fc, b_fc):
    """Pure-JAX reference mirroring the PyTorch forward pass."""
    conv = jax.lax.conv_general_dilated(
        x, w_conv, window_strides=(2, 2), padding="VALID",
        dimension_numbers=("NCHW", "OIHW", "NCHW"))
    conv = jnp.maximum(conv + b_conv[None, :, None, None], 0.0)
    gap = jnp.mean(conv, axis=(2, 3))                             # (N, C)
    y = gap @ w_fc.T + b_fc
    y = jnp.maximum(y, 0.0)
    y = jax.nn.sigmoid(y)
    return jnp.round(y)


if __name__ == "__main__":
    key = jax.random.PRNGKey(0)
    kx, kwc, kbc, kwf, kbf = jax.random.split(key, 5)

    N, C, H, W = 2, 4, 16, 16
    x = jax.random.normal(kx, (N, C, H, W), jnp.float32)
    # deterministic synthetic parameters (shapes from ChannelGate.__init__)
    w_conv = jax.random.normal(kwc, (C, C, 3, 3), jnp.float32) * 0.2
    b_conv = jax.random.normal(kbc, (C,), jnp.float32) * 0.1
    w_fc = jax.random.normal(kwf, (C, C), jnp.float32) * 0.5
    b_fc = jax.random.normal(kbf, (C,), jnp.float32) * 0.1

    out = channel_gate(x, w_conv, b_conv, w_fc, b_fc)
    out = jax.block_until_ready(out)

    ref = channel_gate_reference(x, w_conv, b_conv, w_fc, b_fc)
    assert out.shape == (N, C) and out.dtype == jnp.float32
    np.testing.assert_allclose(np.asarray(out), np.asarray(ref), atol=1e-6)
    print("KERNEL_OK")
</pallas_src>

<mosaic_0001>
module attributes {stable_mosaic.version = 11 : i64} {
  func.func @channel_gate_kernel(%arg0: i32, %arg1: memref<4x16x16x2xf32, #tpu.memory_space<vmem>>, %arg2: memref<144xf32, #tpu.memory_space<smem>>, %arg3: memref<4xf32, #tpu.memory_space<smem>>, %arg4: memref<4x4xf32, #tpu.memory_space<vmem>>, %arg5: memref<4x1xf32, #tpu.memory_space<vmem>>, %arg6: memref<4x2xf32, #tpu.memory_space<vmem>>) attributes {dimension_semantics = [#tpu.dimension_semantics<parallel>], iteration_bounds = array<i64: 1>, scalar_prefetch = 0 : i64, scratch_operands = 0 : i64, tpu.core_type = #tpu.core_type<tc>, window_params = [{transform_indices = @transform_0, window_bounds = array<i64: 4, 16, 16, 2>}, {transform_indices = @transform_1, window_bounds = array<i64: 144>}, {transform_indices = @transform_2, window_bounds = array<i64: 4>}, {pipeline_mode = #tpu.pipeline_mode<synchronous>, transform_indices = @transform_3, window_bounds = array<i64: 4, 4>}, {pipeline_mode = #tpu.pipeline_mode<synchronous>, transform_indices = @transform_4, window_bounds = array<i64: 4, 1>}, {transform_indices = @transform_5, window_bounds = array<i64: 4, 2>}]} {
    %cst = arith.constant 0.000000e+00 : f32
    %0 = vector.broadcast %cst : f32 to vector<7x7x2xf32>
    %cst_0 = arith.constant 0.000000e+00 : f32
    %1 = vector.broadcast %cst_0 : f32 to vector<7x7x2xf32>
    %cst_1 = arith.constant 0.000000e+00 : f32
    %2 = vector.broadcast %cst_1 : f32 to vector<7x7x2xf32>
    %cst_2 = arith.constant 0.000000e+00 : f32
    %3 = vector.broadcast %cst_2 : f32 to vector<7x7x2xf32>
    %c0 = arith.constant 0 : index
    %c0_3 = arith.constant 0 : index
    %c0_4 = arith.constant 0 : index
    %c0_5 = arith.constant 0 : index
    %4 = tpu.strided_load %arg1[%c0, %c0_3, %c0_4, %c0_5] {strides = array<i32: 1, 2, 2, 1>} : memref<4x16x16x2xf32, #tpu.memory_space<vmem>>, vector<4x7x7x2xf32>
    %5 = vector.extract_strided_slice %4 {offsets = [0, 0, 0, 0], sizes = [1, 7, 7, 2], strides = [1, 1, 1, 1]} : vector<4x7x7x2xf32> to vector<1x7x7x2xf32>
    %6 = vector.shape_cast %5 : vector<1x7x7x2xf32> to vector<7x7x2xf32>
    %c0_6 = arith.constant 0 : index
    %7 = memref.load %arg2[%c0_6] : memref<144xf32, #tpu.memory_space<smem>>
    %8 = vector.broadcast %7 : f32 to vector<7x7x2xf32>
    %9 = arith.mulf %8, %6 : vector<7x7x2xf32>
    %10 = arith.addf %0, %9 : vector<7x7x2xf32>
    %c1 = arith.constant 1 : index
    %11 = memref.load %arg2[%c1] : memref<144xf32, #tpu.memory_space<smem>>
    %12 = vector.broadcast %11 : f32 to vector<7x7x2xf32>
    %13 = arith.mulf %12, %6 : vector<7x7x2xf32>
    %14 = arith.addf %1, %13 : vector<7x7x2xf32>
    %c2 = arith.constant 2 : index
    %15 = memref.load %arg2[%c2] : memref<144xf32, #tpu.memory_space<smem>>
    %16 = vector.broadcast %15 : f32 to vector<7x7x2xf32>
    %17 = arith.mulf %16, %6 : vector<7x7x2xf32>
    %18 = arith.addf %2, %17 : vector<7x7x2xf32>
    %c3 = arith.constant 3 : index
    %19 = memref.load %arg2[%c3] : memref<144xf32, #tpu.memory_space<smem>>
    %20 = vector.broadcast %19 : f32 to vector<7x7x2xf32>
    %21 = arith.mulf %20, %6 : vector<7x7x2xf32>
    %22 = arith.addf %3, %21 : vector<7x7x2xf32>
    %23 = vector.extract_strided_slice %4 {offsets = [1, 0, 0, 0], sizes = [1, 7, 7, 2], strides = [1, 1, 1, 1]} : vector<4x7x7x2xf32> to vector<1x7x7x2xf32>
    %24 = vector.shape_cast %23 : vector<1x7x7x2xf32> to vector<7x7x2xf32>
    %c4 = arith.constant 4 : index
    %25 = memref.load %arg2[%c4] : memref<144xf32, #tpu.memory_space<smem>>
    %26 = vector.broadcast %25 : f32 to vector<7x7x2xf32>
    %27 = arith.mulf %26, %24 : vector<7x7x2xf32>
    %28 = arith.addf %10, %27 : vector<7x7x2xf32>
    %c5 = arith.constant 5 : index
    %29 = memref.load %arg2[%c5] : memref<144xf32, #tpu.memory_space<smem>>
    %30 = vector.broadcast %29 : f32 to vector<7x7x2xf32>
    %31 = arith.mulf %30, %24 : vector<7x7x2xf32>
    %32 = arith.addf %14, %31 : vector<7x7x2xf32>
    %c6 = arith.constant 6 : index
    %33 = memref.load %arg2[%c6] : memref<144xf32, #tpu.memory_space<smem>>
    %34 = vector.broadcast %33 : f32 to vector<7x7x2xf32>
    %35 = arith.mulf %34, %24 : vector<7x7x2xf32>
    %36 = arith.addf %18, %35 : vector<7x7x2xf32>
    %c7 = arith.constant 7 : index
    %37 = memref.load %arg2[%c7] : memref<144xf32, #tpu.memory_space<smem>>
    %38 = vector.broadcast %37 : f32 to vector<7x7x2xf32>
    %39 = arith.mulf %38, %24 : vector<7x7x2xf32>
    %40 = arith.addf %22, %39 : vector<7x7x2xf32>
    %41 = vector.extract_strided_slice %4 {offsets = [2, 0, 0, 0], sizes = [1, 7, 7, 2], strides = [1, 1, 1, 1]} : vector<4x7x7x2xf32> to vector<1x7x7x2xf32>
    %42 = vector.shape_cast %41 : vector<1x7x7x2xf32> to vector<7x7x2xf32>
    %c8 = arith.constant 8 : index
    %43 = memref.load %arg2[%c8] : memref<144xf32, #tpu.memory_space<smem>>
    %44 = vector.broadcast %43 : f32 to vector<7x7x2xf32>
    %45 = arith.mulf %44, %42 : vector<7x7x2xf32>
    %46 = arith.addf %28, %45 : vector<7x7x2xf32>
    %c9 = arith.constant 9 : index
    %47 = memref.load %arg2[%c9] : memref<144xf32, #tpu.memory_space<smem>>
    %48 = vector.broadcast %47 : f32 to vector<7x7x2xf32>
    %49 = arith.mulf %48, %42 : vector<7x7x2xf32>
    %50 = arith.addf %32, %49 : vector<7x7x2xf32>
    %c10 = arith.constant 10 : index
    %51 = memref.load %arg2[%c10] : memref<144xf32, #tpu.memory_space<smem>>
    %52 = vector.broadcast %51 : f32 to vector<7x7x2xf32>
    %53 = arith.mulf %52, %42 : vector<7x7x2xf32>
    %54 = arith.addf %36, %53 : vector<7x7x2xf32>
    %c11 = arith.constant 11 : index
    %55 = memref.load %arg2[%c11] : memref<144xf32, #tpu.memory_space<smem>>
    %56 = vector.broadcast %55 : f32 to vector<7x7x2xf32>
    %57 = arith.mulf %56, %42 : vector<7x7x2xf32>
    %58 = arith.addf %40, %57 : vector<7x7x2xf32>
    %59 = vector.extract_strided_slice %4 {offsets = [3, 0, 0, 0], sizes = [1, 7, 7, 2], strides = [1, 1, 1, 1]} : vector<4x7x7x2xf32> to vector<1x7x7x2xf32>
    %60 = vector.shape_cast %59 : vector<1x7x7x2xf32> to vector<7x7x2xf32>
    %c12 = arith.constant 12 : index
    %61 = memref.load %arg2[%c12] : memref<144xf32, #tpu.memory_space<smem>>
    %62 = vector.broadcast %61 : f32 to vector<7x7x2xf32>
    %63 = arith.mulf %62, %60 : vector<7x7x2xf32>
    %64 = arith.addf %46, %63 : vector<7x7x2xf32>
    %c13 = arith.constant 13 : index
    %65 = memref.load %arg2[%c13] : memref<144xf32, #tpu.memory_space<smem>>
    %66 = vector.broadcast %65 : f32 to vector<7x7x2xf32>
    %67 = arith.mulf %66, %60 : vector<7x7x2xf32>
    %68 = arith.addf %50, %67 : vector<7x7x2xf32>
    %c14 = arith.constant 14 : index
    %69 = memref.load %arg2[%c14] : memref<144xf32, #tpu.memory_space<smem>>
    %70 = vector.broadcast %69 : f32 to vector<7x7x2xf32>
    %71 = arith.mulf %70, %60 : vector<7x7x2xf32>
    %72 = arith.addf %54, %71 : vector<7x7x2xf32>
    %c15 = arith.constant 15 : index
    %73 = memref.load %arg2[%c15] : memref<144xf32, #tpu.memory_space<smem>>
    %74 = vector.broadcast %73 : f32 to vector<7x7x2xf32>
    %75 = arith.mulf %74, %60 : vector<7x7x2xf32>
    %76 = arith.addf %58, %75 : vector<7x7x2xf32>
    %c0_7 = arith.constant 0 : index
    %c0_8 = arith.constant 0 : index
    %c1_9 = arith.constant 1 : index
    %c0_10 = arith.constant 0 : index
    %77 = tpu.strided_load %arg1[%c0_7, %c0_8, %c1_9, %c0_10] {strides = array<i32: 1, 2, 2, 1>} : memref<4x16x16x2xf32, #tpu.memory_space<vmem>>, vector<4x7x7x2xf32>
    %78 = vector.extract_strided_slice %77 {offsets = [0, 0, 0, 0], sizes = [1, 7, 7, 2], strides = [1, 1, 1, 1]} : vector<4x7x7x2xf32> to vector<1x7x7x2xf32>
    %79 = vector.shape_cast %78 : vector<1x7x7x2xf32> to vector<7x7x2xf32>
    %c16 = arith.constant 16 : index
    %80 = memref.load %arg2[%c16] : memref<144xf32, #tpu.memory_space<smem>>
    %81 = vector.broadcast %80 : f32 to vector<7x7x2xf32>
    %82 = arith.mulf %81, %79 : vector<7x7x2xf32>
    %83 = arith.addf %64, %82 : vector<7x7x2xf32>
    %c17 = arith.constant 17 : index
    %84 = memref.load %arg2[%c17] : memref<144xf32, #tpu.memory_space<smem>>
    %85 = vector.broadcast %84 : f32 to vector<7x7x2xf32>
    %86 = arith.mulf %85, %79 : vector<7x7x2xf32>
    %87 = arith.addf %68, %86 : vector<7x7x2xf32>
    %c18 = arith.constant 18 : index
    %88 = memref.load %arg2[%c18] : memref<144xf32, #tpu.memory_space<smem>>
    %89 = vector.broadcast %88 : f32 to vector<7x7x2xf32>
    %90 = arith.mulf %89, %79 : vector<7x7x2xf32>
    %91 = arith.addf %72, %90 : vector<7x7x2xf32>
    %c19 = arith.constant 19 : index
    %92 = memref.load %arg2[%c19] : memref<144xf32, #tpu.memory_space<smem>>
    %93 = vector.broadcast %92 : f32 to vector<7x7x2xf32>
    %94 = arith.mulf %93, %79 : vector<7x7x2xf32>
    %95 = arith.addf %76, %94 : vector<7x7x2xf32>
    %96 = vector.extract_strided_slice %77 {offsets = [1, 0, 0, 0], sizes = [1, 7, 7, 2], strides = [1, 1, 1, 1]} : vector<4x7x7x2xf32> to vector<1x7x7x2xf32>
    %97 = vector.shape_cast %96 : vector<1x7x7x2xf32> to vector<7x7x2xf32>
    %c20 = arith.constant 20 : index
    %98 = memref.load %arg2[%c20] : memref<144xf32, #tpu.memory_space<smem>>
    %99 = vector.broadcast %98 : f32 to vector<7x7x2xf32>
    %100 = arith.mulf %99, %97 : vector<7x7x2xf32>
    %101 = arith.addf %83, %100 : vector<7x7x2xf32>
    %c21 = arith.constant 21 : index
    %102 = memref.load %arg2[%c21] : memref<144xf32, #tpu.memory_space<smem>>
    %103 = vector.broadcast %102 : f32 to vector<7x7x2xf32>
    %104 = arith.mulf %103, %97 : vector<7x7x2xf32>
    %105 = arith.addf %87, %104 : vector<7x7x2xf32>
    %c22 = arith.constant 22 : index
    %106 = memref.load %arg2[%c22] : memref<144xf32, #tpu.memory_space<smem>>
    %107 = vector.broadcast %106 : f32 to vector<7x7x2xf32>
    %108 = arith.mulf %107, %97 : vector<7x7x2xf32>
    %109 = arith.addf %91, %108 : vector<7x7x2xf32>
    %c23 = arith.constant 23 : index
    %110 = memref.load %arg2[%c23] : memref<144xf32, #tpu.memory_space<smem>>
    %111 = vector.broadcast %110 : f32 to vector<7x7x2xf32>
    %112 = arith.mulf %111, %97 : vector<7x7x2xf32>
    %113 = arith.addf %95, %112 : vector<7x7x2xf32>
    %114 = vector.extract_strided_slice %77 {offsets = [2, 0, 0, 0], sizes = [1, 7, 7, 2], strides = [1, 1, 1, 1]} : vector<4x7x7x2xf32> to vector<1x7x7x2xf32>
    %115 = vector.shape_cast %114 : vector<1x7x7x2xf32> to vector<7x7x2xf32>
    %c24 = arith.constant 24 : index
    %116 = memref.load %arg2[%c24] : memref<144xf32, #tpu.memory_space<smem>>
    %117 = vector.broadcast %116 : f32 to vector<7x7x2xf32>
    %118 = arith.mulf %117, %115 : vector<7x7x2xf32>
    %119 = arith.addf %101, %118 : vector<7x7x2xf32>
    %c25 = arith.constant 25 : index
    %120 = memref.load %arg2[%c25] : memref<144xf32, #tpu.memory_space<smem>>
    %121 = vector.broadcast %120 : f32 to vector<7x7x2xf32>
    %122 = arith.mulf %121, %115 : vector<7x7x2xf32>
    %123 = arith.addf %105, %122 : vector<7x7x2xf32>
    %c26 = arith.constant 26 : index
    %124 = memref.load %arg2[%c26] : memref<144xf32, #tpu.memory_space<smem>>
    %125 = vector.broadcast %124 : f32 to vector<7x7x2xf32>
    %126 = arith.mulf %125, %115 : vector<7x7x2xf32>
    %127 = arith.addf %109, %126 : vector<7x7x2xf32>
    %c27 = arith.constant 27 : index
    %128 = memref.load %arg2[%c27] : memref<144xf32, #tpu.memory_space<smem>>
    %129 = vector.broadcast %128 : f32 to vector<7x7x2xf32>
    %130 = arith.mulf %129, %115 : vector<7x7x2xf32>
    %131 = arith.addf %113, %130 : vector<7x7x2xf32>
    %132 = vector.extract_strided_slice %77 {offsets = [3, 0, 0, 0], sizes = [1, 7, 7, 2], strides = [1, 1, 1, 1]} : vector<4x7x7x2xf32> to vector<1x7x7x2xf32>
    %133 = vector.shape_cast %132 : vector<1x7x7x2xf32> to vector<7x7x2xf32>
    %c28 = arith.constant 28 : index
    %134 = memref.load %arg2[%c28] : memref<144xf32, #tpu.memory_space<smem>>
    %135 = vector.broadcast %134 : f32 to vector<7x7x2xf32>
    %136 = arith.mulf %135, %133 : vector<7x7x2xf32>
    %137 = arith.addf %119, %136 : vector<7x7x2xf32>
    %c29 = arith.constant 29 : index
    %138 = memref.load %arg2[%c29] : memref<144xf32, #tpu.memory_space<smem>>
    %139 = vector.broadcast %138 : f32 to vector<7x7x2xf32>
    %140 = arith.mulf %139, %133 : vector<7x7x2xf32>
    %141 = arith.addf %123, %140 : vector<7x7x2xf32>
    %c30 = arith.constant 30 : index
    %142 = memref.load %arg2[%c30] : memref<144xf32, #tpu.memory_space<smem>>
    %143 = vector.broadcast %142 : f32 to vector<7x7x2xf32>
    %144 = arith.mulf %143, %133 : vector<7x7x2xf32>
    %145 = arith.addf %127, %144 : vector<7x7x2xf32>
    %c31 = arith.constant 31 : index
    %146 = memref.load %arg2[%c31] : memref<144xf32, #tpu.memory_space<smem>>
    %147 = vector.broadcast %146 : f32 to vector<7x7x2xf32>
    %148 = arith.mulf %147, %133 : vector<7x7x2xf32>
    %149 = arith.addf %131, %148 : vector<7x7x2xf32>
    %c0_11 = arith.constant 0 : index
    %c0_12 = arith.constant 0 : index
    %c2_13 = arith.constant 2 : index
    %c0_14 = arith.constant 0 : index
    %150 = tpu.strided_load %arg1[%c0_11, %c0_12, %c2_13, %c0_14] {strides = array<i32: 1, 2, 2, 1>} : memref<4x16x16x2xf32, #tpu.memory_space<vmem>>, vector<4x7x7x2xf32>
    %151 = vector.extract_strided_slice %150 {offsets = [0, 0, 0, 0], sizes = [1, 7, 7, 2], strides = [1, 1, 1, 1]} : vector<4x7x7x2xf32> to vector<1x7x7x2xf32>
    %152 = vector.shape_cast %151 : vector<1x7x7x2xf32> to vector<7x7x2xf32>
    %c32 = arith.constant 32 : index
    %153 = memref.load %arg2[%c32] : memref<144xf32, #tpu.memory_space<smem>>
    %154 = vector.broadcast %153 : f32 to vector<7x7x2xf32>
    %155 = arith.mulf %154, %152 : vector<7x7x2xf32>
    %156 = arith.addf %137, %155 : vector<7x7x2xf32>
    %c33 = arith.constant 33 : index
    %157 = memref.load %arg2[%c33] : memref<144xf32, #tpu.memory_space<smem>>
    %158 = vector.broadcast %157 : f32 to vector<7x7x2xf32>
    %159 = arith.mulf %158, %152 : vector<7x7x2xf32>
    %160 = arith.addf %141, %159 : vector<7x7x2xf32>
    %c34 = arith.constant 34 : index
    %161 = memref.load %arg2[%c34] : memref<144xf32, #tpu.memory_space<smem>>
    %162 = vector.broadcast %161 : f32 to vector<7x7x2xf32>
    %163 = arith.mulf %162, %152 : vector<7x7x2xf32>
    %164 = arith.addf %145, %163 : vector<7x7x2xf32>
    %c35 = arith.constant 35 : index
    %165 = memref.load %arg2[%c35] : memref<144xf32, #tpu.memory_space<smem>>
    %166 = vector.broadcast %165 : f32 to vector<7x7x2xf32>
    %167 = arith.mulf %166, %152 : vector<7x7x2xf32>
    %168 = arith.addf %149, %167 : vector<7x7x2xf32>
    %169 = vector.extract_strided_slice %150 {offsets = [1, 0, 0, 0], sizes = [1, 7, 7, 2], strides = [1, 1, 1, 1]} : vector<4x7x7x2xf32> to vector<1x7x7x2xf32>
    %170 = vector.shape_cast %169 : vector<1x7x7x2xf32> to vector<7x7x2xf32>
    %c36 = arith.constant 36 : index
    %171 = memref.load %arg2[%c36] : memref<144xf32, #tpu.memory_space<smem>>
    %172 = vector.broadcast %171 : f32 to vector<7x7x2xf32>
    %173 = arith.mulf %172, %170 : vector<7x7x2xf32>
    %174 = arith.addf %156, %173 : vector<7x7x2xf32>
    %c37 = arith.constant 37 : index
    %175 = memref.load %arg2[%c37] : memref<144xf32, #tpu.memory_space<smem>>
    %176 = vector.broadcast %175 : f32 to vector<7x7x2xf32>
    %177 = arith.mulf %176, %170 : vector<7x7x2xf32>
    %178 = arith.addf %160, %177 : vector<7x7x2xf32>
    %c38 = arith.constant 38 : index
    %179 = memref.load %arg2[%c38] : memref<144xf32, #tpu.memory_space<smem>>
    %180 = vector.broadcast %179 : f32 to vector<7x7x2xf32>
    %181 = arith.mulf %180, %170 : vector<7x7x2xf32>
    %182 = arith.addf %164, %181 : vector<7x7x2xf32>
    %c39 = arith.constant 39 : index
    %183 = memref.load %arg2[%c39] : memref<144xf32, #tpu.memory_space<smem>>
    %184 = vector.broadcast %183 : f32 to vector<7x7x2xf32>
    %185 = arith.mulf %184, %170 : vector<7x7x2xf32>
    %186 = arith.addf %168, %185 : vector<7x7x2xf32>
    %187 = vector.extract_strided_slice %150 {offsets = [2, 0, 0, 0], sizes = [1, 7, 7, 2], strides = [1, 1, 1, 1]} : vector<4x7x7x2xf32> to vector<1x7x7x2xf32>
    %188 = vector.shape_cast %187 : vector<1x7x7x2xf32> to vector<7x7x2xf32>
    %c40 = arith.constant 40 : index
    %189 = memref.load %arg2[%c40] : memref<144xf32, #tpu.memory_space<smem>>
    %190 = vector.broadcast %189 : f32 to vector<7x7x2xf32>
    %191 = arith.mulf %190, %188 : vector<7x7x2xf32>
    %192 = arith.addf %174, %191 : vector<7x7x2xf32>
    %c41 = arith.constant 41 : index
    %193 = memref.load %arg2[%c41] : memref<144xf32, #tpu.memory_space<smem>>
    %194 = vector.broadcast %193 : f32 to vector<7x7x2xf32>
    %195 = arith.mulf %194, %188 : vector<7x7x2xf32>
    %196 = arith.addf %178, %195 : vector<7x7x2xf32>
    %c42 = arith.constant 42 : index
    %197 = memref.load %arg2[%c42] : memref<144xf32, #tpu.memory_space<smem>>
    %198 = vector.broadcast %197 : f32 to vector<7x7x2xf32>
    %199 = arith.mulf %198, %188 : vector<7x7x2xf32>
    %200 = arith.addf %182, %199 : vector<7x7x2xf32>
    %c43 = arith.constant 43 : index
    %201 = memref.load %arg2[%c43] : memref<144xf32, #tpu.memory_space<smem>>
    %202 = vector.broadcast %201 : f32 to vector<7x7x2xf32>
    %203 = arith.mulf %202, %188 : vector<7x7x2xf32>
    %204 = arith.addf %186, %203 : vector<7x7x2xf32>
    %205 = vector.extract_strided_slice %150 {offsets = [3, 0, 0, 0], sizes = [1, 7, 7, 2], strides = [1, 1, 1, 1]} : vector<4x7x7x2xf32> to vector<1x7x7x2xf32>
    %206 = vector.shape_cast %205 : vector<1x7x7x2xf32> to vector<7x7x2xf32>
    %c44 = arith.constant 44 : index
    %207 = memref.load %arg2[%c44] : memref<144xf32, #tpu.memory_space<smem>>
    %208 = vector.broadcast %207 : f32 to vector<7x7x2xf32>
    %209 = arith.mulf %208, %206 : vector<7x7x2xf32>
    %210 = arith.addf %192, %209 : vector<7x7x2xf32>
    %c45 = arith.constant 45 : index
    %211 = memref.load %arg2[%c45] : memref<144xf32, #tpu.memory_space<smem>>
    %212 = vector.broadcast %211 : f32 to vector<7x7x2xf32>
    %213 = arith.mulf %212, %206 : vector<7x7x2xf32>
    %214 = arith.addf %196, %213 : vector<7x7x2xf32>
    %c46 = arith.constant 46 : index
    %215 = memref.load %arg2[%c46] : memref<144xf32, #tpu.memory_space<smem>>
    %216 = vector.broadcast %215 : f32 to vector<7x7x2xf32>
    %217 = arith.mulf %216, %206 : vector<7x7x2xf32>
    %218 = arith.addf %200, %217 : vector<7x7x2xf32>
    %c47 = arith.constant 47 : index
    %219 = memref.load %arg2[%c47] : memref<144xf32, #tpu.memory_space<smem>>
    %220 = vector.broadcast %219 : f32 to vector<7x7x2xf32>
    %221 = arith.mulf %220, %206 : vector<7x7x2xf32>
    %222 = arith.addf %204, %221 : vector<7x7x2xf32>
    %c0_15 = arith.constant 0 : index
    %c1_16 = arith.constant 1 : index
    %c0_17 = arith.constant 0 : index
    %c0_18 = arith.constant 0 : index
    %223 = tpu.strided_load %arg1[%c0_15, %c1_16, %c0_17, %c0_18] {strides = array<i32: 1, 2, 2, 1>} : memref<4x16x16x2xf32, #tpu.memory_space<vmem>>, vector<4x7x7x2xf32>
    %224 = vector.extract_strided_slice %223 {offsets = [0, 0, 0, 0], sizes = [1, 7, 7, 2], strides = [1, 1, 1, 1]} : vector<4x7x7x2xf32> to vector<1x7x7x2xf32>
    %225 = vector.shape_cast %224 : vector<1x7x7x2xf32> to vector<7x7x2xf32>
    %c48 = arith.constant 48 : index
    %226 = memref.load %arg2[%c48] : memref<144xf32, #tpu.memory_space<smem>>
    %227 = vector.broadcast %226 : f32 to vector<7x7x2xf32>
    %228 = arith.mulf %227, %225 : vector<7x7x2xf32>
    %229 = arith.addf %210, %228 : vector<7x7x2xf32>
    %c49 = arith.constant 49 : index
    %230 = memref.load %arg2[%c49] : memref<144xf32, #tpu.memory_space<smem>>
    %231 = vector.broadcast %230 : f32 to vector<7x7x2xf32>
    %232 = arith.mulf %231, %225 : vector<7x7x2xf32>
    %233 = arith.addf %214, %232 : vector<7x7x2xf32>
    %c50 = arith.constant 50 : index
    %234 = memref.load %arg2[%c50] : memref<144xf32, #tpu.memory_space<smem>>
    %235 = vector.broadcast %234 : f32 to vector<7x7x2xf32>
    %236 = arith.mulf %235, %225 : vector<7x7x2xf32>
    %237 = arith.addf %218, %236 : vector<7x7x2xf32>
    %c51 = arith.constant 51 : index
    %238 = memref.load %arg2[%c51] : memref<144xf32, #tpu.memory_space<smem>>
    %239 = vector.broadcast %238 : f32 to vector<7x7x2xf32>
    %240 = arith.mulf %239, %225 : vector<7x7x2xf32>
    %241 = arith.addf %222, %240 : vector<7x7x2xf32>
    %242 = vector.extract_strided_slice %223 {offsets = [1, 0, 0, 0], sizes = [1, 7, 7, 2], strides = [1, 1, 1, 1]} : vector<4x7x7x2xf32> to vector<1x7x7x2xf32>
    %243 = vector.shape_cast %242 : vector<1x7x7x2xf32> to vector<7x7x2xf32>
    %c52 = arith.constant 52 : index
    %244 = memref.load %arg2[%c52] : memref<144xf32, #tpu.memory_space<smem>>
    %245 = vector.broadcast %244 : f32 to vector<7x7x2xf32>
    %246 = arith.mulf %245, %243 : vector<7x7x2xf32>
    %247 = arith.addf %229, %246 : vector<7x7x2xf32>
    %c53 = arith.constant 53 : index
    %248 = memref.load %arg2[%c53] : memref<144xf32, #tpu.memory_space<smem>>
    %249 = vector.broadcast %248 : f32 to vector<7x7x2xf32>
    %250 = arith.mulf %249, %243 : vector<7x7x2xf32>
    %251 = arith.addf %233, %250 : vector<7x7x2xf32>
    %c54 = arith.constant 54 : index
    %252 = memref.load %arg2[%c54] : memref<144xf32, #tpu.memory_space<smem>>
    %253 = vector.broadcast %252 : f32 to vector<7x7x2xf32>
    %254 = arith.mulf %253, %243 : vector<7x7x2xf32>
    %255 = arith.addf %237, %254 : vector<7x7x2xf32>
    %c55 = arith.constant 55 : index
    %256 = memref.load %arg2[%c55] : memref<144xf32, #tpu.memory_space<smem>>
    %257 = vector.broadcast %256 : f32 to vector<7x7x2xf32>
    %258 = arith.mulf %257, %243 : vector<7x7x2xf32>
    %259 = arith.addf %241, %258 : vector<7x7x2xf32>
    %260 = vector.extract_strided_slice %223 {offsets = [2, 0, 0, 0], sizes = [1, 7, 7, 2], strides = [1, 1, 1, 1]} : vector<4x7x7x2xf32> to vector<1x7x7x2xf32>
    %261 = vector.shape_cast %260 : vector<1x7x7x2xf32> to vector<7x7x2xf32>
    %c56 = arith.constant 56 : index
    %262 = memref.load %arg2[%c56] : memref<144xf32, #tpu.memory_space<smem>>
    %263 = vector.broadcast %262 : f32 to vector<7x7x2xf32>
    %264 = arith.mulf %263, %261 : vector<7x7x2xf32>
    %265 = arith.addf %247, %264 : vector<7x7x2xf32>
    %c57 = arith.constant 57 : index
    %266 = memref.load %arg2[%c57] : memref<144xf32, #tpu.memory_space<smem>>
    %267 = vector.broadcast %266 : f32 to vector<7x7x2xf32>
    %268 = arith.mulf %267, %261 : vector<7x7x2xf32>
    %269 = arith.addf %251, %268 : vector<7x7x2xf32>
    %c58 = arith.constant 58 : index
    %270 = memref.load %arg2[%c58] : memref<144xf32, #tpu.memory_space<smem>>
    %271 = vector.broadcast %270 : f32 to vector<7x7x2xf32>
    %272 = arith.mulf %271, %261 : vector<7x7x2xf32>
    %273 = arith.addf %255, %272 : vector<7x7x2xf32>
    %c59 = arith.constant 59 : index
    %274 = memref.load %arg2[%c59] : memref<144xf32, #tpu.memory_space<smem>>
    %275 = vector.broadcast %274 : f32 to vector<7x7x2xf32>
    %276 = arith.mulf %275, %261 : vector<7x7x2xf32>
    %277 = arith.addf %259, %276 : vector<7x7x2xf32>
    %278 = vector.extract_strided_slice %223 {offsets = [3, 0, 0, 0], sizes = [1, 7, 7, 2], strides = [1, 1, 1, 1]} : vector<4x7x7x2xf32> to vector<1x7x7x2xf32>
    %279 = vector.shape_cast %278 : vector<1x7x7x2xf32> to vector<7x7x2xf32>
    %c60 = arith.constant 60 : index
    %280 = memref.load %arg2[%c60] : memref<144xf32, #tpu.memory_space<smem>>
    %281 = vector.broadcast %280 : f32 to vector<7x7x2xf32>
    %282 = arith.mulf %281, %279 : vector<7x7x2xf32>
    %283 = arith.addf %265, %282 : vector<7x7x2xf32>
    %c61 = arith.constant 61 : index
    %284 = memref.load %arg2[%c61] : memref<144xf32, #tpu.memory_space<smem>>
    %285 = vector.broadcast %284 : f32 to vector<7x7x2xf32>
    %286 = arith.mulf %285, %279 : vector<7x7x2xf32>
    %287 = arith.addf %269, %286 : vector<7x7x2xf32>
    %c62 = arith.constant 62 : index
    %288 = memref.load %arg2[%c62] : memref<144xf32, #tpu.memory_space<smem>>
    %289 = vector.broadcast %288 : f32 to vector<7x7x2xf32>
    %290 = arith.mulf %289, %279 : vector<7x7x2xf32>
    %291 = arith.addf %273, %290 : vector<7x7x2xf32>
    %c63 = arith.constant 63 : index
    %292 = memref.load %arg2[%c63] : memref<144xf32, #tpu.memory_space<smem>>
    %293 = vector.broadcast %292 : f32 to vector<7x7x2xf32>
    %294 = arith.mulf %293, %279 : vector<7x7x2xf32>
    %295 = arith.addf %277, %294 : vector<7x7x2xf32>
    %c0_19 = arith.constant 0 : index
    %c1_20 = arith.constant 1 : index
    %c1_21 = arith.constant 1 : index
    %c0_22 = arith.constant 0 : index
    %296 = tpu.strided_load %arg1[%c0_19, %c1_20, %c1_21, %c0_22] {strides = array<i32: 1, 2, 2, 1>} : memref<4x16x16x2xf32, #tpu.memory_space<vmem>>, vector<4x7x7x2xf32>
    %297 = vector.extract_strided_slice %296 {offsets = [0, 0, 0, 0], sizes = [1, 7, 7, 2], strides = [1, 1, 1, 1]} : vector<4x7x7x2xf32> to vector<1x7x7x2xf32>
    %298 = vector.shape_cast %297 : vector<1x7x7x2xf32> to vector<7x7x2xf32>
    %c64 = arith.constant 64 : index
    %299 = memref.load %arg2[%c64] : memref<144xf32, #tpu.memory_space<smem>>
    %300 = vector.broadcast %299 : f32 to vector<7x7x2xf32>
    %301 = arith.mulf %300, %298 : vector<7x7x2xf32>
    %302 = arith.addf %283, %301 : vector<7x7x2xf32>
    %c65 = arith.constant 65 : index
    %303 = memref.load %arg2[%c65] : memref<144xf32, #tpu.memory_space<smem>>
    %304 = vector.broadcast %303 : f32 to vector<7x7x2xf32>
    %305 = arith.mulf %304, %298 : vector<7x7x2xf32>
    %306 = arith.addf %287, %305 : vector<7x7x2xf32>
    %c66 = arith.constant 66 : index
    %307 = memref.load %arg2[%c66] : memref<144xf32, #tpu.memory_space<smem>>
    %308 = vector.broadcast %307 : f32 to vector<7x7x2xf32>
    %309 = arith.mulf %308, %298 : vector<7x7x2xf32>
    %310 = arith.addf %291, %309 : vector<7x7x2xf32>
    %c67 = arith.constant 67 : index
    %311 = memref.load %arg2[%c67] : memref<144xf32, #tpu.memory_space<smem>>
    %312 = vector.broadcast %311 : f32 to vector<7x7x2xf32>
    %313 = arith.mulf %312, %298 : vector<7x7x2xf32>
    %314 = arith.addf %295, %313 : vector<7x7x2xf32>
    %315 = vector.extract_strided_slice %296 {offsets = [1, 0, 0, 0], sizes = [1, 7, 7, 2], strides = [1, 1, 1, 1]} : vector<4x7x7x2xf32> to vector<1x7x7x2xf32>
    %316 = vector.shape_cast %315 : vector<1x7x7x2xf32> to vector<7x7x2xf32>
    %c68 = arith.constant 68 : index
    %317 = memref.load %arg2[%c68] : memref<144xf32, #tpu.memory_space<smem>>
    %318 = vector.broadcast %317 : f32 to vector<7x7x2xf32>
    %319 = arith.mulf %318, %316 : vector<7x7x2xf32>
    %320 = arith.addf %302, %319 : vector<7x7x2xf32>
    %c69 = arith.constant 69 : index
    %321 = memref.load %arg2[%c69] : memref<144xf32, #tpu.memory_space<smem>>
    %322 = vector.broadcast %321 : f32 to vector<7x7x2xf32>
    %323 = arith.mulf %322, %316 : vector<7x7x2xf32>
    %324 = arith.addf %306, %323 : vector<7x7x2xf32>
    %c70 = arith.constant 70 : index
    %325 = memref.load %arg2[%c70] : memref<144xf32, #tpu.memory_space<smem>>
    %326 = vector.broadcast %325 : f32 to vector<7x7x2xf32>
    %327 = arith.mulf %326, %316 : vector<7x7x2xf32>
    %328 = arith.addf %310, %327 : vector<7x7x2xf32>
    %c71 = arith.constant 71 : index
    %329 = memref.load %arg2[%c71] : memref<144xf32, #tpu.memory_space<smem>>
    %330 = vector.broadcast %329 : f32 to vector<7x7x2xf32>
    %331 = arith.mulf %330, %316 : vector<7x7x2xf32>
    %332 = arith.addf %314, %331 : vector<7x7x2xf32>
    %333 = vector.extract_strided_slice %296 {offsets = [2, 0, 0, 0], sizes = [1, 7, 7, 2], strides = [1, 1, 1, 1]} : vector<4x7x7x2xf32> to vector<1x7x7x2xf32>
    %334 = vector.shape_cast %333 : vector<1x7x7x2xf32> to vector<7x7x2xf32>
    %c72 = arith.constant 72 : index
    %335 = memref.load %arg2[%c72] : memref<144xf32, #tpu.memory_space<smem>>
    %336 = vector.broadcast %335 : f32 to vector<7x7x2xf32>
    %337 = arith.mulf %336, %334 : vector<7x7x2xf32>
    %338 = arith.addf %320, %337 : vector<7x7x2xf32>
    %c73 = arith.constant 73 : index
    %339 = memref.load %arg2[%c73] : memref<144xf32, #tpu.memory_space<smem>>
    %340 = vector.broadcast %339 : f32 to vector<7x7x2xf32>
    %341 = arith.mulf %340, %334 : vector<7x7x2xf32>
    %342 = arith.addf %324, %341 : vector<7x7x2xf32>
    %c74 = arith.constant 74 : index
    %343 = memref.load %arg2[%c74] : memref<144xf32, #tpu.memory_space<smem>>
    %344 = vector.broadcast %343 : f32 to vector<7x7x2xf32>
    %345 = arith.mulf %344, %334 : vector<7x7x2xf32>
    %346 = arith.addf %328, %345 : vector<7x7x2xf32>
    %c75 = arith.constant 75 : index
    %347 = memref.load %arg2[%c75] : memref<144xf32, #tpu.memory_space<smem>>
    %348 = vector.broadcast %347 : f32 to vector<7x7x2xf32>
    %349 = arith.mulf %348, %334 : vector<7x7x2xf32>
    %350 = arith.addf %332, %349 : vector<7x7x2xf32>
    %351 = vector.extract_strided_slice %296 {offsets = [3, 0, 0, 0], sizes = [1, 7, 7, 2], strides = [1, 1, 1, 1]} : vector<4x7x7x2xf32> to vector<1x7x7x2xf32>
    %352 = vector.shape_cast %351 : vector<1x7x7x2xf32> to vector<7x7x2xf32>
    %c76 = arith.constant 76 : index
    %353 = memref.load %arg2[%c76] : memref<144xf32, #tpu.memory_space<smem>>
    %354 = vector.broadcast %353 : f32 to vector<7x7x2xf32>
    %355 = arith.mulf %354, %352 : vector<7x7x2xf32>
    %356 = arith.addf %338, %355 : vector<7x7x2xf32>
    %c77 = arith.constant 77 : index
    %357 = memref.load %arg2[%c77] : memref<144xf32, #tpu.memory_space<smem>>
    %358 = vector.broadcast %357 : f32 to vector<7x7x2xf32>
    %359 = arith.mulf %358, %352 : vector<7x7x2xf32>
    %360 = arith.addf %342, %359 : vector<7x7x2xf32>
    %c78 = arith.constant 78 : index
    %361 = memref.load %arg2[%c78] : memref<144xf32, #tpu.memory_space<smem>>
    %362 = vector.broadcast %361 : f32 to vector<7x7x2xf32>
    %363 = arith.mulf %362, %352 : vector<7x7x2xf32>
    %364 = arith.addf %346, %363 : vector<7x7x2xf32>
    %c79 = arith.constant 79 : index
    %365 = memref.load %arg2[%c79] : memref<144xf32, #tpu.memory_space<smem>>
    %366 = vector.broadcast %365 : f32 to vector<7x7x2xf32>
    %367 = arith.mulf %366, %352 : vector<7x7x2xf32>
    %368 = arith.addf %350, %367 : vector<7x7x2xf32>
    %c0_23 = arith.constant 0 : index
    %c1_24 = arith.constant 1 : index
    %c2_25 = arith.constant 2 : index
    %c0_26 = arith.constant 0 : index
    %369 = tpu.strided_load %arg1[%c0_23, %c1_24, %c2_25, %c0_26] {strides = array<i32: 1, 2, 2, 1>} : memref<4x16x16x2xf32, #tpu.memory_space<vmem>>, vector<4x7x7x2xf32>
    %370 = vector.extract_strided_slice %369 {offsets = [0, 0, 0, 0], sizes = [1, 7, 7, 2], strides = [1, 1, 1, 1]} : vector<4x7x7x2xf32> to vector<1x7x7x2xf32>
    %371 = vector.shape_cast %370 : vector<1x7x7x2xf32> to vector<7x7x2xf32>
    %c80 = arith.constant 80 : index
    %372 = memref.load %arg2[%c80] : memref<144xf32, #tpu.memory_space<smem>>
    %373 = vector.broadcast %372 : f32 to vector<7x7x2xf32>
    %374 = arith.mulf %373, %371 : vector<7x7x2xf32>
    %375 = arith.addf %356, %374 : vector<7x7x2xf32>
    %c81 = arith.constant 81 : index
    %376 = memref.load %arg2[%c81] : memref<144xf32, #tpu.memory_space<smem>>
    %377 = vector.broadcast %376 : f32 to vector<7x7x2xf32>
    %378 = arith.mulf %377, %371 : vector<7x7x2xf32>
    %379 = arith.addf %360, %378 : vector<7x7x2xf32>
    %c82 = arith.constant 82 : index
    %380 = memref.load %arg2[%c82] : memref<144xf32, #tpu.memory_space<smem>>
    %381 = vector.broadcast %380 : f32 to vector<7x7x2xf32>
    %382 = arith.mulf %381, %371 : vector<7x7x2xf32>
    %383 = arith.addf %364, %382 : vector<7x7x2xf32>
    %c83 = arith.constant 83 : index
    %384 = memref.load %arg2[%c83] : memref<144xf32, #tpu.memory_space<smem>>
    %385 = vector.broadcast %384 : f32 to vector<7x7x2xf32>
    %386 = arith.mulf %385, %371 : vector<7x7x2xf32>
    %387 = arith.addf %368, %386 : vector<7x7x2xf32>
    %388 = vector.extract_strided_slice %369 {offsets = [1, 0, 0, 0], sizes = [1, 7, 7, 2], strides = [1, 1, 1, 1]} : vector<4x7x7x2xf32> to vector<1x7x7x2xf32>
    %389 = vector.shape_cast %388 : vector<1x7x7x2xf32> to vector<7x7x2xf32>
    %c84 = arith.constant 84 : index
    %390 = memref.load %arg2[%c84] : memref<144xf32, #tpu.memory_space<smem>>
    %391 = vector.broadcast %390 : f32 to vector<7x7x2xf32>
    %392 = arith.mulf %391, %389 : vector<7x7x2xf32>
    %393 = arith.addf %375, %392 : vector<7x7x2xf32>
    %c85 = arith.constant 85 : index
    %394 = memref.load %arg2[%c85] : memref<144xf32, #tpu.memory_space<smem>>
    %395 = vector.broadcast %394 : f32 to vector<7x7x2xf32>
    %396 = arith.mulf %395, %389 : vector<7x7x2xf32>
    %397 = arith.addf %379, %396 : vector<7x7x2xf32>
    %c86 = arith.constant 86 : index
    %398 = memref.load %arg2[%c86] : memref<144xf32, #tpu.memory_space<smem>>
    %399 = vector.broadcast %398 : f32 to vector<7x7x2xf32>
    %400 = arith.mulf %399, %389 : vector<7x7x2xf32>
    %401 = arith.addf %383, %400 : vector<7x7x2xf32>
    %c87 = arith.constant 87 : index
    %402 = memref.load %arg2[%c87] : memref<144xf32, #tpu.memory_space<smem>>
    %403 = vector.broadcast %402 : f32 to vector<7x7x2xf32>
    %404 = arith.mulf %403, %389 : vector<7x7x2xf32>
    %405 = arith.addf %387, %404 : vector<7x7x2xf32>
    %406 = vector.extract_strided_slice %369 {offsets = [2, 0, 0, 0], sizes = [1, 7, 7, 2], strides = [1, 1, 1, 1]} : vector<4x7x7x2xf32> to vector<1x7x7x2xf32>
    %407 = vector.shape_cast %406 : vector<1x7x7x2xf32> to vector<7x7x2xf32>
    %c88 = arith.constant 88 : index
    %408 = memref.load %arg2[%c88] : memref<144xf32, #tpu.memory_space<smem>>
    %409 = vector.broadcast %408 : f32 to vector<7x7x2xf32>
    %410 = arith.mulf %409, %407 : vector<7x7x2xf32>
    %411 = arith.addf %393, %410 : vector<7x7x2xf32>
    %c89 = arith.constant 89 : index
    %412 = memref.load %arg2[%c89] : memref<144xf32, #tpu.memory_space<smem>>
    %413 = vector.broadcast %412 : f32 to vector<7x7x2xf32>
    %414 = arith.mulf %413, %407 : vector<7x7x2xf32>
    %415 = arith.addf %397, %414 : vector<7x7x2xf32>
    %c90 = arith.constant 90 : index
    %416 = memref.load %arg2[%c90] : memref<144xf32, #tpu.memory_space<smem>>
    %417 = vector.broadcast %416 : f32 to vector<7x7x2xf32>
    %418 = arith.mulf %417, %407 : vector<7x7x2xf32>
    %419 = arith.addf %401, %418 : vector<7x7x2xf32>
    %c91 = arith.constant 91 : index
    %420 = memref.load %arg2[%c91] : memref<144xf32, #tpu.memory_space<smem>>
    %421 = vector.broadcast %420 : f32 to vector<7x7x2xf32>
    %422 = arith.mulf %421, %407 : vector<7x7x2xf32>
    %423 = arith.addf %405, %422 : vector<7x7x2xf32>
    %424 = vector.extract_strided_slice %369 {offsets = [3, 0, 0, 0], sizes = [1, 7, 7, 2], strides = [1, 1, 1, 1]} : vector<4x7x7x2xf32> to vector<1x7x7x2xf32>
    %425 = vector.shape_cast %424 : vector<1x7x7x2xf32> to vector<7x7x2xf32>
    %c92 = arith.constant 92 : index
    %426 = memref.load %arg2[%c92] : memref<144xf32, #tpu.memory_space<smem>>
    %427 = vector.broadcast %426 : f32 to vector<7x7x2xf32>
    %428 = arith.mulf %427, %425 : vector<7x7x2xf32>
    %429 = arith.addf %411, %428 : vector<7x7x2xf32>
    %c93 = arith.constant 93 : index
    %430 = memref.load %arg2[%c93] : memref<144xf32, #tpu.memory_space<smem>>
    %431 = vector.broadcast %430 : f32 to vector<7x7x2xf32>
    %432 = arith.mulf %431, %425 : vector<7x7x2xf32>
    %433 = arith.addf %415, %432 : vector<7x7x2xf32>
    %c94 = arith.constant 94 : index
    %434 = memref.load %arg2[%c94] : memref<144xf32, #tpu.memory_space<smem>>
    %435 = vector.broadcast %434 : f32 to vector<7x7x2xf32>
    %436 = arith.mulf %435, %425 : vector<7x7x2xf32>
    %437 = arith.addf %419, %436 : vector<7x7x2xf32>
    %c95 = arith.constant 95 : index
    %438 = memref.load %arg2[%c95] : memref<144xf32, #tpu.memory_space<smem>>
    %439 = vector.broadcast %438 : f32 to vector<7x7x2xf32>
    %440 = arith.mulf %439, %425 : vector<7x7x2xf32>
    %441 = arith.addf %423, %440 : vector<7x7x2xf32>
    %c0_27 = arith.constant 0 : index
    %c2_28 = arith.constant 2 : index
    %c0_29 = arith.constant 0 : index
    %c0_30 = arith.constant 0 : index
    %442 = tpu.strided_load %arg1[%c0_27, %c2_28, %c0_29, %c0_30] {strides = array<i32: 1, 2, 2, 1>} : memref<4x16x16x2xf32, #tpu.memory_space<vmem>>, vector<4x7x7x2xf32>
    %443 = vector.extract_strided_slice %442 {offsets = [0, 0, 0, 0], sizes = [1, 7, 7, 2], strides = [1, 1, 1, 1]} : vector<4x7x7x2xf32> to vector<1x7x7x2xf32>
    %444 = vector.shape_cast %443 : vector<1x7x7x2xf32> to vector<7x7x2xf32>
    %c96 = arith.constant 96 : index
    %445 = memref.load %arg2[%c96] : memref<144xf32, #tpu.memory_space<smem>>
    %446 = vector.broadcast %445 : f32 to vector<7x7x2xf32>
    %447 = arith.mulf %446, %444 : vector<7x7x2xf32>
    %448 = arith.addf %429, %447 : vector<7x7x2xf32>
    %c97 = arith.constant 97 : index
    %449 = memref.load %arg2[%c97] : memref<144xf32, #tpu.memory_space<smem>>
    %450 = vector.broadcast %449 : f32 to vector<7x7x2xf32>
    %451 = arith.mulf %450, %444 : vector<7x7x2xf32>
    %452 = arith.addf %433, %451 : vector<7x7x2xf32>
    %c98 = arith.constant 98 : index
    %453 = memref.load %arg2[%c98] : memref<144xf32, #tpu.memory_space<smem>>
    %454 = vector.broadcast %453 : f32 to vector<7x7x2xf32>
    %455 = arith.mulf %454, %444 : vector<7x7x2xf32>
    %456 = arith.addf %437, %455 : vector<7x7x2xf32>
    %c99 = arith.constant 99 : index
    %457 = memref.load %arg2[%c99] : memref<144xf32, #tpu.memory_space<smem>>
    %458 = vector.broadcast %457 : f32 to vector<7x7x2xf32>
    %459 = arith.mulf %458, %444 : vector<7x7x2xf32>
    %460 = arith.addf %441, %459 : vector<7x7x2xf32>
    %461 = vector.extract_strided_slice %442 {offsets = [1, 0, 0, 0], sizes = [1, 7, 7, 2], strides = [1, 1, 1, 1]} : vector<4x7x7x2xf32> to vector<1x7x7x2xf32>
    %462 = vector.shape_cast %461 : vector<1x7x7x2xf32> to vector<7x7x2xf32>
    %c100 = arith.constant 100 : index
    %463 = memref.load %arg2[%c100] : memref<144xf32, #tpu.memory_space<smem>>
    %464 = vector.broadcast %463 : f32 to vector<7x7x2xf32>
    %465 = arith.mulf %464, %462 : vector<7x7x2xf32>
    %466 = arith.addf %448, %465 : vector<7x7x2xf32>
    %c101 = arith.constant 101 : index
    %467 = memref.load %arg2[%c101] : memref<144xf32, #tpu.memory_space<smem>>
    %468 = vector.broadcast %467 : f32 to vector<7x7x2xf32>
    %469 = arith.mulf %468, %462 : vector<7x7x2xf32>
    %470 = arith.addf %452, %469 : vector<7x7x2xf32>
    %c102 = arith.constant 102 : index
    %471 = memref.load %arg2[%c102] : memref<144xf32, #tpu.memory_space<smem>>
    %472 = vector.broadcast %471 : f32 to vector<7x7x2xf32>
    %473 = arith.mulf %472, %462 : vector<7x7x2xf32>
    %474 = arith.addf %456, %473 : vector<7x7x2xf32>
    %c103 = arith.constant 103 : index
    %475 = memref.load %arg2[%c103] : memref<144xf32, #tpu.memory_space<smem>>
    %476 = vector.broadcast %475 : f32 to vector<7x7x2xf32>
    %477 = arith.mulf %476, %462 : vector<7x7x2xf32>
    %478 = arith.addf %460, %477 : vector<7x7x2xf32>
    %479 = vector.extract_strided_slice %442 {offsets = [2, 0, 0, 0], sizes = [1, 7, 7, 2], strides = [1, 1, 1, 1]} : vector<4x7x7x2xf32> to vector<1x7x7x2xf32>
    %480 = vector.shape_cast %479 : vector<1x7x7x2xf32> to vector<7x7x2xf32>
    %c104 = arith.constant 104 : index
    %481 = memref.load %arg2[%c104] : memref<144xf32, #tpu.memory_space<smem>>
    %482 = vector.broadcast %481 : f32 to vector<7x7x2xf32>
    %483 = arith.mulf %482, %480 : vector<7x7x2xf32>
    %484 = arith.addf %466, %483 : vector<7x7x2xf32>
    %c105 = arith.constant 105 : index
    %485 = memref.load %arg2[%c105] : memref<144xf32, #tpu.memory_space<smem>>
    %486 = vector.broadcast %485 : f32 to vector<7x7x2xf32>
    %487 = arith.mulf %486, %480 : vector<7x7x2xf32>
    %488 = arith.addf %470, %487 : vector<7x7x2xf32>
    %c106 = arith.constant 106 : index
    %489 = memref.load %arg2[%c106] : memref<144xf32, #tpu.memory_space<smem>>
    %490 = vector.broadcast %489 : f32 to vector<7x7x2xf32>
    %491 = arith.mulf %490, %480 : vector<7x7x2xf32>
    %492 = arith.addf %474, %491 : vector<7x7x2xf32>
    %c107 = arith.constant 107 : index
    %493 = memref.load %arg2[%c107] : memref<144xf32, #tpu.memory_space<smem>>
    %494 = vector.broadcast %493 : f32 to vector<7x7x2xf32>
    %495 = arith.mulf %494, %480 : vector<7x7x2xf32>
    %496 = arith.addf %478, %495 : vector<7x7x2xf32>
    %497 = vector.extract_strided_slice %442 {offsets = [3, 0, 0, 0], sizes = [1, 7, 7, 2], strides = [1, 1, 1, 1]} : vector<4x7x7x2xf32> to vector<1x7x7x2xf32>
    %498 = vector.shape_cast %497 : vector<1x7x7x2xf32> to vector<7x7x2xf32>
    %c108 = arith.constant 108 : index
    %499 = memref.load %arg2[%c108] : memref<144xf32, #tpu.memory_space<smem>>
    %500 = vector.broadcast %499 : f32 to vector<7x7x2xf32>
    %501 = arith.mulf %500, %498 : vector<7x7x2xf32>
    %502 = arith.addf %484, %501 : vector<7x7x2xf32>
    %c109 = arith.constant 109 : index
    %503 = memref.load %arg2[%c109] : memref<144xf32, #tpu.memory_space<smem>>
    %504 = vector.broadcast %503 : f32 to vector<7x7x2xf32>
    %505 = arith.mulf %504, %498 : vector<7x7x2xf32>
    %506 = arith.addf %488, %505 : vector<7x7x2xf32>
    %c110 = arith.constant 110 : index
    %507 = memref.load %arg2[%c110] : memref<144xf32, #tpu.memory_space<smem>>
    %508 = vector.broadcast %507 : f32 to vector<7x7x2xf32>
    %509 = arith.mulf %508, %498 : vector<7x7x2xf32>
    %510 = arith.addf %492, %509 : vector<7x7x2xf32>
    %c111 = arith.constant 111 : index
    %511 = memref.load %arg2[%c111] : memref<144xf32, #tpu.memory_space<smem>>
    %512 = vector.broadcast %511 : f32 to vector<7x7x2xf32>
    %513 = arith.mulf %512, %498 : vector<7x7x2xf32>
    %514 = arith.addf %496, %513 : vector<7x7x2xf32>
    %c0_31 = arith.constant 0 : index
    %c2_32 = arith.constant 2 : index
    %c1_33 = arith.constant 1 : index
    %c0_34 = arith.constant 0 : index
    %515 = tpu.strided_load %arg1[%c0_31, %c2_32, %c1_33, %c0_34] {strides = array<i32: 1, 2, 2, 1>} : memref<4x16x16x2xf32, #tpu.memory_space<vmem>>, vector<4x7x7x2xf32>
    %516 = vector.extract_strided_slice %515 {offsets = [0, 0, 0, 0], sizes = [1, 7, 7, 2], strides = [1, 1, 1, 1]} : vector<4x7x7x2xf32> to vector<1x7x7x2xf32>
    %517 = vector.shape_cast %516 : vector<1x7x7x2xf32> to vector<7x7x2xf32>
    %c112 = arith.constant 112 : index
    %518 = memref.load %arg2[%c112] : memref<144xf32, #tpu.memory_space<smem>>
    %519 = vector.broadcast %518 : f32 to vector<7x7x2xf32>
    %520 = arith.mulf %519, %517 : vector<7x7x2xf32>
    %521 = arith.addf %502, %520 : vector<7x7x2xf32>
    %c113 = arith.constant 113 : index
    %522 = memref.load %arg2[%c113] : memref<144xf32, #tpu.memory_space<smem>>
    %523 = vector.broadcast %522 : f32 to vector<7x7x2xf32>
    %524 = arith.mulf %523, %517 : vector<7x7x2xf32>
    %525 = arith.addf %506, %524 : vector<7x7x2xf32>
    %c114 = arith.constant 114 : index
    %526 = memref.load %arg2[%c114] : memref<144xf32, #tpu.memory_space<smem>>
    %527 = vector.broadcast %526 : f32 to vector<7x7x2xf32>
    %528 = arith.mulf %527, %517 : vector<7x7x2xf32>
    %529 = arith.addf %510, %528 : vector<7x7x2xf32>
    %c115 = arith.constant 115 : index
    %530 = memref.load %arg2[%c115] : memref<144xf32, #tpu.memory_space<smem>>
    %531 = vector.broadcast %530 : f32 to vector<7x7x2xf32>
    %532 = arith.mulf %531, %517 : vector<7x7x2xf32>
    %533 = arith.addf %514, %532 : vector<7x7x2xf32>
    %534 = vector.extract_strided_slice %515 {offsets = [1, 0, 0, 0], sizes = [1, 7, 7, 2], strides = [1, 1, 1, 1]} : vector<4x7x7x2xf32> to vector<1x7x7x2xf32>
    %535 = vector.shape_cast %534 : vector<1x7x7x2xf32> to vector<7x7x2xf32>
    %c116 = arith.constant 116 : index
    %536 = memref.load %arg2[%c116] : memref<144xf32, #tpu.memory_space<smem>>
    %537 = vector.broadcast %536 : f32 to vector<7x7x2xf32>
    %538 = arith.mulf %537, %535 : vector<7x7x2xf32>
    %539 = arith.addf %521, %538 : vector<7x7x2xf32>
    %c117 = arith.constant 117 : index
    %540 = memref.load %arg2[%c117] : memref<144xf32, #tpu.memory_space<smem>>
    %541 = vector.broadcast %540 : f32 to vector<7x7x2xf32>
    %542 = arith.mulf %541, %535 : vector<7x7x2xf32>
    %543 = arith.addf %525, %542 : vector<7x7x2xf32>
    %c118 = arith.constant 118 : index
    %544 = memref.load %arg2[%c118] : memref<144xf32, #tpu.memory_space<smem>>
    %545 = vector.broadcast %544 : f32 to vector<7x7x2xf32>
    %546 = arith.mulf %545, %535 : vector<7x7x2xf32>
    %547 = arith.addf %529, %546 : vector<7x7x2xf32>
    %c119 = arith.constant 119 : index
    %548 = memref.load %arg2[%c119] : memref<144xf32, #tpu.memory_space<smem>>
    %549 = vector.broadcast %548 : f32 to vector<7x7x2xf32>
    %550 = arith.mulf %549, %535 : vector<7x7x2xf32>
    %551 = arith.addf %533, %550 : vector<7x7x2xf32>
    %552 = vector.extract_strided_slice %515 {offsets = [2, 0, 0, 0], sizes = [1, 7, 7, 2], strides = [1, 1, 1, 1]} : vector<4x7x7x2xf32> to vector<1x7x7x2xf32>
    %553 = vector.shape_cast %552 : vector<1x7x7x2xf32> to vector<7x7x2xf32>
    %c120 = arith.constant 120 : index
    %554 = memref.load %arg2[%c120] : memref<144xf32, #tpu.memory_space<smem>>
    %555 = vector.broadcast %554 : f32 to vector<7x7x2xf32>
    %556 = arith.mulf %555, %553 : vector<7x7x2xf32>
    %557 = arith.addf %539, %556 : vector<7x7x2xf32>
    %c121 = arith.constant 121 : index
    %558 = memref.load %arg2[%c121] : memref<144xf32, #tpu.memory_space<smem>>
    %559 = vector.broadcast %558 : f32 to vector<7x7x2xf32>
    %560 = arith.mulf %559, %553 : vector<7x7x2xf32>
    %561 = arith.addf %543, %560 : vector<7x7x2xf32>
    %c122 = arith.constant 122 : index
    %562 = memref.load %arg2[%c122] : memref<144xf32, #tpu.memory_space<smem>>
    %563 = vector.broadcast %562 : f32 to vector<7x7x2xf32>
    %564 = arith.mulf %563, %553 : vector<7x7x2xf32>
    %565 = arith.addf %547, %564 : vector<7x7x2xf32>
    %c123 = arith.constant 123 : index
    %566 = memref.load %arg2[%c123] : memref<144xf32, #tpu.memory_space<smem>>
    %567 = vector.broadcast %566 : f32 to vector<7x7x2xf32>
    %568 = arith.mulf %567, %553 : vector<7x7x2xf32>
    %569 = arith.addf %551, %568 : vector<7x7x2xf32>
    %570 = vector.extract_strided_slice %515 {offsets = [3, 0, 0, 0], sizes = [1, 7, 7, 2], strides = [1, 1, 1, 1]} : vector<4x7x7x2xf32> to vector<1x7x7x2xf32>
    %571 = vector.shape_cast %570 : vector<1x7x7x2xf32> to vector<7x7x2xf32>
    %c124 = arith.constant 124 : index
    %572 = memref.load %arg2[%c124] : memref<144xf32, #tpu.memory_space<smem>>
    %573 = vector.broadcast %572 : f32 to vector<7x7x2xf32>
    %574 = arith.mulf %573, %571 : vector<7x7x2xf32>
    %575 = arith.addf %557, %574 : vector<7x7x2xf32>
    %c125 = arith.constant 125 : index
    %576 = memref.load %arg2[%c125] : memref<144xf32, #tpu.memory_space<smem>>
    %577 = vector.broadcast %576 : f32 to vector<7x7x2xf32>
    %578 = arith.mulf %577, %571 : vector<7x7x2xf32>
    %579 = arith.addf %561, %578 : vector<7x7x2xf32>
    %c126 = arith.constant 126 : index
    %580 = memref.load %arg2[%c126] : memref<144xf32, #tpu.memory_space<smem>>
    %581 = vector.broadcast %580 : f32 to vector<7x7x2xf32>
    %582 = arith.mulf %581, %571 : vector<7x7x2xf32>
    %583 = arith.addf %565, %582 : vector<7x7x2xf32>
    %c127 = arith.constant 127 : index
    %584 = memref.load %arg2[%c127] : memref<144xf32, #tpu.memory_space<smem>>
    %585 = vector.broadcast %584 : f32 to vector<7x7x2xf32>
    %586 = arith.mulf %585, %571 : vector<7x7x2xf32>
    %587 = arith.addf %569, %586 : vector<7x7x2xf32>
    %c0_35 = arith.constant 0 : index
    %c2_36 = arith.constant 2 : index
    %c2_37 = arith.constant 2 : index
    %c0_38 = arith.constant 0 : index
    %588 = tpu.strided_load %arg1[%c0_35, %c2_36, %c2_37, %c0_38] {strides = array<i32: 1, 2, 2, 1>} : memref<4x16x16x2xf32, #tpu.memory_space<vmem>>, vector<4x7x7x2xf32>
    %589 = vector.extract_strided_slice %588 {offsets = [0, 0, 0, 0], sizes = [1, 7, 7, 2], strides = [1, 1, 1, 1]} : vector<4x7x7x2xf32> to vector<1x7x7x2xf32>
    %590 = vector.shape_cast %589 : vector<1x7x7x2xf32> to vector<7x7x2xf32>
    %c128 = arith.constant 128 : index
    %591 = memref.load %arg2[%c128] : memref<144xf32, #tpu.memory_space<smem>>
    %592 = vector.broadcast %591 : f32 to vector<7x7x2xf32>
    %593 = arith.mulf %592, %590 : vector<7x7x2xf32>
    %594 = arith.addf %575, %593 : vector<7x7x2xf32>
    %c129 = arith.constant 129 : index
    %595 = memref.load %arg2[%c129] : memref<144xf32, #tpu.memory_space<smem>>
    %596 = vector.broadcast %595 : f32 to vector<7x7x2xf32>
    %597 = arith.mulf %596, %590 : vector<7x7x2xf32>
    %598 = arith.addf %579, %597 : vector<7x7x2xf32>
    %c130 = arith.constant 130 : index
    %599 = memref.load %arg2[%c130] : memref<144xf32, #tpu.memory_space<smem>>
    %600 = vector.broadcast %599 : f32 to vector<7x7x2xf32>
    %601 = arith.mulf %600, %590 : vector<7x7x2xf32>
    %602 = arith.addf %583, %601 : vector<7x7x2xf32>
    %c131 = arith.constant 131 : index
    %603 = memref.load %arg2[%c131] : memref<144xf32, #tpu.memory_space<smem>>
    %604 = vector.broadcast %603 : f32 to vector<7x7x2xf32>
    %605 = arith.mulf %604, %590 : vector<7x7x2xf32>
    %606 = arith.addf %587, %605 : vector<7x7x2xf32>
    %607 = vector.extract_strided_slice %588 {offsets = [1, 0, 0, 0], sizes = [1, 7, 7, 2], strides = [1, 1, 1, 1]} : vector<4x7x7x2xf32> to vector<1x7x7x2xf32>
    %608 = vector.shape_cast %607 : vector<1x7x7x2xf32> to vector<7x7x2xf32>
    %c132 = arith.constant 132 : index
    %609 = memref.load %arg2[%c132] : memref<144xf32, #tpu.memory_space<smem>>
    %610 = vector.broadcast %609 : f32 to vector<7x7x2xf32>
    %611 = arith.mulf %610, %608 : vector<7x7x2xf32>
    %612 = arith.addf %594, %611 : vector<7x7x2xf32>
    %c133 = arith.constant 133 : index
    %613 = memref.load %arg2[%c133] : memref<144xf32, #tpu.memory_space<smem>>
    %614 = vector.broadcast %613 : f32 to vector<7x7x2xf32>
    %615 = arith.mulf %614, %608 : vector<7x7x2xf32>
    %616 = arith.addf %598, %615 : vector<7x7x2xf32>
    %c134 = arith.constant 134 : index
    %617 = memref.load %arg2[%c134] : memref<144xf32, #tpu.memory_space<smem>>
    %618 = vector.broadcast %617 : f32 to vector<7x7x2xf32>
    %619 = arith.mulf %618, %608 : vector<7x7x2xf32>
    %620 = arith.addf %602, %619 : vector<7x7x2xf32>
    %c135 = arith.constant 135 : index
    %621 = memref.load %arg2[%c135] : memref<144xf32, #tpu.memory_space<smem>>
    %622 = vector.broadcast %621 : f32 to vector<7x7x2xf32>
    %623 = arith.mulf %622, %608 : vector<7x7x2xf32>
    %624 = arith.addf %606, %623 : vector<7x7x2xf32>
    %625 = vector.extract_strided_slice %588 {offsets = [2, 0, 0, 0], sizes = [1, 7, 7, 2], strides = [1, 1, 1, 1]} : vector<4x7x7x2xf32> to vector<1x7x7x2xf32>
    %626 = vector.shape_cast %625 : vector<1x7x7x2xf32> to vector<7x7x2xf32>
    %c136 = arith.constant 136 : index
    %627 = memref.load %arg2[%c136] : memref<144xf32, #tpu.memory_space<smem>>
    %628 = vector.broadcast %627 : f32 to vector<7x7x2xf32>
    %629 = arith.mulf %628, %626 : vector<7x7x2xf32>
    %630 = arith.addf %612, %629 : vector<7x7x2xf32>
    %c137 = arith.constant 137 : index
    %631 = memref.load %arg2[%c137] : memref<144xf32, #tpu.memory_space<smem>>
    %632 = vector.broadcast %631 : f32 to vector<7x7x2xf32>
    %633 = arith.mulf %632, %626 : vector<7x7x2xf32>
    %634 = arith.addf %616, %633 : vector<7x7x2xf32>
    %c138 = arith.constant 138 : index
    %635 = memref.load %arg2[%c138] : memref<144xf32, #tpu.memory_space<smem>>
    %636 = vector.broadcast %635 : f32 to vector<7x7x2xf32>
    %637 = arith.mulf %636, %626 : vector<7x7x2xf32>
    %638 = arith.addf %620, %637 : vector<7x7x2xf32>
    %c139 = arith.constant 139 : index
    %639 = memref.load %arg2[%c139] : memref<144xf32, #tpu.memory_space<smem>>
    %640 = vector.broadcast %639 : f32 to vector<7x7x2xf32>
    %641 = arith.mulf %640, %626 : vector<7x7x2xf32>
    %642 = arith.addf %624, %641 : vector<7x7x2xf32>
    %643 = vector.extract_strided_slice %588 {offsets = [3, 0, 0, 0], sizes = [1, 7, 7, 2], strides = [1, 1, 1, 1]} : vector<4x7x7x2xf32> to vector<1x7x7x2xf32>
    %644 = vector.shape_cast %643 : vector<1x7x7x2xf32> to vector<7x7x2xf32>
    %c140 = arith.constant 140 : index
    %645 = memref.load %arg2[%c140] : memref<144xf32, #tpu.memory_space<smem>>
    %646 = vector.broadcast %645 : f32 to vector<7x7x2xf32>
    %647 = arith.mulf %646, %644 : vector<7x7x2xf32>
    %648 = arith.addf %630, %647 : vector<7x7x2xf32>
    %c141 = arith.constant 141 : index
    %649 = memref.load %arg2[%c141] : memref<144xf32, #tpu.memory_space<smem>>
    %650 = vector.broadcast %649 : f32 to vector<7x7x2xf32>
    %651 = arith.mulf %650, %644 : vector<7x7x2xf32>
    %652 = arith.addf %634, %651 : vector<7x7x2xf32>
    %c142 = arith.constant 142 : index
    %653 = memref.load %arg2[%c142] : memref<144xf32, #tpu.memory_space<smem>>
    %654 = vector.broadcast %653 : f32 to vector<7x7x2xf32>
    %655 = arith.mulf %654, %644 : vector<7x7x2xf32>
    %656 = arith.addf %638, %655 : vector<7x7x2xf32>
    %c143 = arith.constant 143 : index
    %657 = memref.load %arg2[%c143] : memref<144xf32, #tpu.memory_space<smem>>
    %658 = vector.broadcast %657 : f32 to vector<7x7x2xf32>
    %659 = arith.mulf %658, %644 : vector<7x7x2xf32>
    %660 = arith.addf %642, %659 : vector<7x7x2xf32>
    %c0_39 = arith.constant 0 : index
    %661 = memref.load %arg3[%c0_39] : memref<4xf32, #tpu.memory_space<smem>>
    %662 = vector.broadcast %661 : f32 to vector<7x7x2xf32>
    %663 = arith.addf %648, %662 : vector<7x7x2xf32>
    %cst_40 = arith.constant 0.000000e+00 : f32
    %664 = vector.broadcast %cst_40 : f32 to vector<7x7x2xf32>
    %665 = arith.maximumf %663, %664 : vector<7x7x2xf32>
    %cst_41 = arith.constant dense<0.000000e+00> : vector<2xf32>
    %666 = vector.multi_reduction <add>, %665, %cst_41 [0, 1] : vector<7x7x2xf32> to vector<2xf32>
    %cst_42 = arith.constant 0.0204081628 : f32
    %667 = vector.broadcast %cst_42 : f32 to vector<2xf32>
    %668 = arith.mulf %666, %667 : vector<2xf32>
    %c1_43 = arith.constant 1 : index
    %669 = memref.load %arg3[%c1_43] : memref<4xf32, #tpu.memory_space<smem>>
    %670 = vector.broadcast %669 : f32 to vector<7x7x2xf32>
    %671 = arith.addf %652, %670 : vector<7x7x2xf32>
    %cst_44 = arith.constant 0.000000e+00 : f32
    %672 = vector.broadcast %cst_44 : f32 to vector<7x7x2xf32>
    %673 = arith.maximumf %671, %672 : vector<7x7x2xf32>
    %cst_45 = arith.constant dense<0.000000e+00> : vector<2xf32>
    %674 = vector.multi_reduction <add>, %673, %cst_45 [0, 1] : vector<7x7x2xf32> to vector<2xf32>
    %cst_46 = arith.constant 0.0204081628 : f32
    %675 = vector.broadcast %cst_46 : f32 to vector<2xf32>
    %676 = arith.mulf %674, %675 : vector<2xf32>
    %c2_47 = arith.constant 2 : index
    %677 = memref.load %arg3[%c2_47] : memref<4xf32, #tpu.memory_space<smem>>
    %678 = vector.broadcast %677 : f32 to vector<7x7x2xf32>
    %679 = arith.addf %656, %678 : vector<7x7x2xf32>
    %cst_48 = arith.constant 0.000000e+00 : f32
    %680 = vector.broadcast %cst_48 : f32 to vector<7x7x2xf32>
    %681 = arith.maximumf %679, %680 : vector<7x7x2xf32>
    %cst_49 = arith.constant dense<0.000000e+00> : vector<2xf32>
    %682 = vector.multi_reduction <add>, %681, %cst_49 [0, 1] : vector<7x7x2xf32> to vector<2xf32>
    %cst_50 = arith.constant 0.0204081628 : f32
    %683 = vector.broadcast %cst_50 : f32 to vector<2xf32>
    %684 = arith.mulf %682, %683 : vector<2xf32>
    %c3_51 = arith.constant 3 : index
    %685 = memref.load %arg3[%c3_51] : memref<4xf32, #tpu.memory_space<smem>>
    %686 = vector.broadcast %685 : f32 to vector<7x7x2xf32>
    %687 = arith.addf %660, %686 : vector<7x7x2xf32>
    %cst_52 = arith.constant 0.000000e+00 : f32
    %688 = vector.broadcast %cst_52 : f32 to vector<7x7x2xf32>
    %689 = arith.maximumf %687, %688 : vector<7x7x2xf32>
    %cst_53 = arith.constant dense<0.000000e+00> : vector<2xf32>
    %690 = vector.multi_reduction <add>, %689, %cst_53 [0, 1] : vector<7x7x2xf32> to vector<2xf32>
    %cst_54 = arith.constant 0.0204081628 : f32
    %691 = vector.broadcast %cst_54 : f32 to vector<2xf32>
    %692 = arith.mulf %690, %691 : vector<2xf32>
    %693 = vector.shape_cast %668 : vector<2xf32> to vector<1x2xf32>
    %694 = vector.shape_cast %676 : vector<2xf32> to vector<1x2xf32>
    %695 = vector.shape_cast %684 : vector<2xf32> to vector<1x2xf32>
    %696 = vector.shape_cast %692 : vector<2xf32> to vector<1x2xf32>
    %697 = tpu.concatenate %693, %694, %695, %696 in 0 : vector<1x2xf32>, vector<1x2xf32>, vector<1x2xf32>, vector<1x2xf32> -> vector<4x2xf32>
    %c0_55 = arith.constant 0 : index
    %c0_56 = arith.constant 0 : index
    %698 = vector.load %arg4[%c0_55, %c0_56] : memref<4x4xf32, #tpu.memory_space<vmem>>, vector<4x4xf32>
    %cst_57 = arith.constant dense<0.000000e+00> : vector<4x2xf32>
    %699 = tpu.matmul %698, %697, %cst_57 {dimension_numbers = #tpu.dot_dimension_numbers<[1], [0], [0], [1], [0, 0, 1, 1], [], []>} : vector<4x4xf32>, vector<4x2xf32>, vector<4x2xf32> -> vector<4x2xf32>
    %c0_58 = arith.constant 0 : index
    %c0_59 = arith.constant 0 : index
    %700 = vector.load %arg5[%c0_58, %c0_59] : memref<4x1xf32, #tpu.memory_space<vmem>>, vector<4x1xf32>
    %701 = vector.broadcast %700 : vector<4x1xf32> to vector<4x2xf32>
    %702 = arith.addf %699, %701 : vector<4x2xf32>
    %cst_60 = arith.constant 0.000000e+00 : f32
    %703 = vector.broadcast %cst_60 : f32 to vector<4x2xf32>
    %704 = arith.maximumf %702, %703 : vector<4x2xf32>
    %705 = arith.negf %704 : vector<4x2xf32>
    %706 = math.exp %705 : vector<4x2xf32>
    %cst_61 = arith.constant 1.000000e+00 : f32
    %707 = vector.broadcast %cst_61 : f32 to vector<4x2xf32>
    %708 = arith.addf %707, %706 : vector<4x2xf32>
    %709 = arith.divf %707, %708 : vector<4x2xf32>
    %710 = math.roundeven %709 : vector<4x2xf32>
    %c0_62 = arith.constant 0 : index
    %c0_63 = arith.constant 0 : index
    %711 = vector.load %arg6[%c0_62, %c0_63] : memref<4x2xf32, #tpu.memory_space<vmem>>, vector<4x2xf32>
    tpu.vector_store %arg6[%c0_62, %c0_63], %710 {strides = array<i32>} : memref<4x2xf32, #tpu.memory_space<vmem>>, vector<4x2xf32>,
    return
  }
  func.func @transform_0(%arg0: i32) -> (i32, i32, i32, i32) {
    %c0_i32 = arith.constant 0 : i32
    %c0_i32_0 = arith.constant 0 : i32
    %c0_i32_1 = arith.constant 0 : i32
    %c0_i32_2 = arith.constant 0 : i32
    return %c0_i32, %c0_i32_0, %c0_i32_1, %arg0 : i32, i32, i32, i32
  }
  func.func @transform_1(%arg0: i32) -> i32 {
    %c0_i32 = arith.constant 0 : i32
    %c0_i32_0 = arith.constant 0 : i32
    return %c0_i32 : i32
  }
  func.func @transform_2(%arg0: i32) -> i32 {
    %c0_i32 = arith.constant 0 : i32
    %c0_i32_0 = arith.constant 0 : i32
    return %c0_i32 : i32
  }
  func.func @transform_3(%arg0: i32) -> (i32, i32) {
    %c0_i32 = arith.constant 0 : i32
    %c0_i32_0 = arith.constant 0 : i32
    %c0_i32_1 = arith.constant 0 : i32
    return %c0_i32, %c0_i32_0 : i32, i32
  }
  func.func @transform_4(%arg0: i32) -> (i32, i32) {
    %c0_i32 = arith.constant 0 : i32
    %c0_i32_0 = arith.constant 0 : i32
    %c0_i32_1 = arith.constant 0 : i32
    return %c0_i32, %c0_i32_0 : i32, i32
  }
  func.func @transform_5(%arg0: i32) -> (i32, i32) {
    %c0_i32 = arith.constant 0 : i32
    %c0_i32_0 = arith.constant 0 : i32
    return %c0_i32, %arg0 : i32, i32
  }
}

</mosaic_0001>

<llo_original>
// kernel: tpu_custom_call.1
$region0: #{tpu_custom_call.1}
  #allocation0 [shape = 'u32[]', space=smem, size = 0x4, offset = 0x4, fixed_abs, tag = 'smem constant byte address 0x4 - core index']
  #allocation1 [shape = 'u32[144,128]{1,0:T(1,128)}', space=vmem, size = 0x12000, scoped, tag = 'internal scratch']
  %s0 = inlined_call_operand.vmem [shape: f32[4,16,16,2], index: 0, kind: input, shape index: {}]
  %s1 = inlined_call_operand.vmem [shape: f32[144], index: 1, kind: input, shape index: {}]
  %s2 = inlined_call_operand.vmem [shape: f32[4], index: 2, kind: input, shape index: {}]
  %s3 = inlined_call_operand.vmem [shape: f32[4,4], index: 3, kind: input, shape index: {}]
  %s4 = inlined_call_operand.vmem [shape: f32[4,1], index: 4, kind: input, shape index: {}]
  %s5 = inlined_call_operand.vmem [shape: f32[4,2], index: 5, kind: output, shape index: {}]
  %s6 = sld [smem:[#allocation0]]
  $region38: #{tpu_custom_call.1} parent=0
    _
  %s8 = ssub.s32 1, %s6
  %s9 = scalar_select 0, %s8, %s6
  $region1: #{tpu_custom_call.1} parent=0
    #allocation2 [shape = 'u8[1024]{0}', space=smem, size = 0x400, scoped, tag = 'input window, operand 1, single buffered']
    #allocation3 [shape = 's32[1]{0}', space=sflag, size = 0x4, scoped, tag = 'scoped memory for tpu_custom_call.1']
    #allocation4 [shape = 'u8[512]{0}', space=smem, size = 0x200, scoped, tag = 'input window, operand 2, single buffered']
    #allocation5 [shape = 's32[1]{0}', space=sflag, size = 0x4, scoped, tag = 'scoped memory for tpu_custom_call.1']
    %10 = vsyncpa [#allocation3], 0
    %11 = vsyncpa [#allocation5], 0
    // Predicated region
    $region2: #{tpu_custom_call.1} parent=1 // pred_check
      _
    $region3: #{tpu_custom_call.1} parent=1 // pred_check_branch
      %13 = sbr.rel (0) target = $region5
    $region4: #{tpu_custom_call.1} parent=1 // pred_region
      _
    $region5: #{tpu_custom_call.1} parent=1 // pred_fallthru
      _
    // Predicated region
    $region6: #{tpu_custom_call.1} parent=1 // pred_check
      _
    $region7: #{tpu_custom_call.1} parent=1 // pred_check_branch
      %15 = sbr.rel (0) target = $region9
    $region8: #{tpu_custom_call.1} parent=1 // pred_region
      %s17 = ssub.s32 32, 32
      %18 = vsyncadd [#allocation3], %s17
      %s20 = sshll.u32 %s1, 4
      %s21 = int_to_ptr.vmem [resolvable:$true] %s20
      %23 = dma.vmem_to_smem %s21, 32, [#allocation2], [#allocation3]
    $region9: #{tpu_custom_call.1} parent=1 // pred_fallthru
      _
    // Predicated region
    $region10: #{tpu_custom_call.1} parent=1 // pred_check
      _
    $region11: #{tpu_custom_call.1} parent=1 // pred_check_branch
      %25 = sbr.rel (0) target = $region13
    $region12: #{tpu_custom_call.1} parent=1 // pred_region
      %s27 = ssub.s32 16, 16
      %28 = vsyncadd [#allocation5], %s27
      %s30 = sshll.u32 %s2, 4
      %s31 = int_to_ptr.vmem [resolvable:$true] %s30
      %33 = dma.vmem_to_smem %s31, 16, [#allocation4], [#allocation5]
    $region13: #{tpu_custom_call.1} parent=1 // pred_fallthru
      _
    // Predicated region
    $region14: #{tpu_custom_call.1} parent=1 // pred_check
      _
    $region15: #{tpu_custom_call.1} parent=1 // pred_check_branch
      %35 = sbr.rel (0) target = $region17
    $region16: #{tpu_custom_call.1} parent=1 // pred_region
      _
    $region17: #{tpu_custom_call.1} parent=1 // pred_fallthru
      _
    // Predicated region
    $region18: #{tpu_custom_call.1} parent=1 // pred_check
      _
    $region19: #{tpu_custom_call.1} parent=1 // pred_check_branch
      %37 = sbr.rel (0) target = $region21
    $region20: #{tpu_custom_call.1} parent=1 // pred_region
      _
    $region21: #{tpu_custom_call.1} parent=1 // pred_fallthru
      _
    // Predicated region
    $region22: #{tpu_custom_call.1} parent=1 // pred_check
      _
    $region23: #{tpu_custom_call.1} parent=1 // pred_check_branch
      %39 = sbr.rel (0) target = $region25
    $region24: #{tpu_custom_call.1} parent=1 // pred_region
      %40 = dma.done [#allocation3], 32
    $region25: #{tpu_custom_call.1} parent=1 // pred_fallthru
      _
    // Predicated region
    $region26: #{tpu_custom_call.1} parent=1 // pred_check
      _
    $region27: #{tpu_custom_call.1} parent=1 // pred_check_branch
      %42 = sbr.rel (0) target = $region29
    $region28: #{tpu_custom_call.1} parent=1 // pred_region
      %43 = dma.done [#allocation5], 16
    $region29: #{tpu_custom_call.1} parent=1 // pred_fallthru
      _
    %44 = sfence
    %v45 = vld [vmem:[%s0] ss:$2 sm:$0x7f]
    %s46 = scalar_lea.vmem %s0, 32
    %v47 = vld [vmem:[%s46] ss:$2 sm:$0x7f]
    %s48 = scalar_lea.vmem %s0, 64
    %v49 = vld [vmem:[%s48] ss:$2 sm:$0x7f]
    %s50 = scalar_lea.vmem %s0, 96
    %v51 = vld [vmem:[%s50] ss:$2 sm:$0x7f]
    %s52 = scalar_lea.vmem %s0, 128
    %v53 = vld [vmem:[%s52] ss:$2 sm:$0x7f]
    %s54 = scalar_lea.vmem %s0, 160
    %v55 = vld [vmem:[%s54] ss:$2 sm:$0x7f]
    %s56 = scalar_lea.vmem %s0, 192
    %v57 = vld [vmem:[%s56] ss:$2 sm:$0x7f]
    %s58 = scalar_lea.vmem %s0, 256
    %v59 = vld [vmem:[%s58] ss:$2 sm:$0x7f]
    %s60 = scalar_lea.vmem %s0, 288
    %v61 = vld [vmem:[%s60] ss:$2 sm:$0x7f]
    %s62 = scalar_lea.vmem %s0, 320
    %v63 = vld [vmem:[%s62] ss:$2 sm:$0x7f]
    %s64 = scalar_lea.vmem %s0, 352
    %v65 = vld [vmem:[%s64] ss:$2 sm:$0x7f]
    %s66 = scalar_lea.vmem %s0, 384
    %v67 = vld [vmem:[%s66] ss:$2 sm:$0x7f]
    %s68 = scalar_lea.vmem %s0, 416
    %v69 = vld [vmem:[%s68] ss:$2 sm:$0x7f]
    %s70 = scalar_lea.vmem %s0, 448
    %v71 = vld [vmem:[%s70] ss:$2 sm:$0x7f]
    %s72 = scalar_lea.vmem %s0, 512
    %v73 = vld [vmem:[%s72] ss:$2 sm:$0x7f]
    %s74 = scalar_lea.vmem %s0, 544
    %v75 = vld [vmem:[%s74] ss:$2 sm:$0x7f]
    %s76 = scalar_lea.vmem %s0, 576
    %v77 = vld [vmem:[%s76] ss:$2 sm:$0x7f]
    %s78 = scalar_lea.vmem %s0, 608
    %v79 = vld [vmem:[%s78] ss:$2 sm:$0x7f]
    %s80 = scalar_lea.vmem %s0, 640
    %v81 = vld [vmem:[%s80] ss:$2 sm:$0x7f]
    %s82 = scalar_lea.vmem %s0, 672
    %v83 = vld [vmem:[%s82] ss:$2 sm:$0x7f]
    %s84 = scalar_lea.vmem %s0, 704
    %v85 = vld [vmem:[%s84] ss:$2 sm:$0x7f]
    %s86 = scalar_lea.vmem %s0, 768
    %v87 = vld [vmem:[%s86] ss:$2 sm:$0x7f]
    %s88 = scalar_lea.vmem %s0, 800
    %v89 = vld [vmem:[%s88] ss:$2 sm:$0x7f]
    %s90 = scalar_lea.vmem %s0, 832
    %v91 = vld [vmem:[%s90] ss:$2 sm:$0x7f]
    %s92 = scalar_lea.vmem %s0, 864
    %v93 = vld [vmem:[%s92] ss:$2 sm:$0x7f]
    %s94 = scalar_lea.vmem %s0, 896
    %v95 = vld [vmem:[%s94] ss:$2 sm:$0x7f]
    %s96 = scalar_lea.vmem %s0, 928
    %v97 = vld [vmem:[%s96] ss:$2 sm:$0x7f]
    %s98 = scalar_lea.vmem %s0, 960
    %v99 = vld [vmem:[%s98] ss:$2 sm:$0x7f]
    %s100 = sld [smem:[#allocation2]]
    %v101 = vstv %s100
    %v102 = vmul.f32 %v101, %v45
    %v103 = vmul.f32 %v101, %v47
    %v104 = vmul.f32 %v101, %v49
    %v105 = vmul.f32 %v101, %v51
    %v106 = vmul.f32 %v101, %v53
    %v107 = vmul.f32 %v101, %v55
    %v108 = vmul.f32 %v101, %v57
    %v109 = vadd.f32 %v102, 0.0
    %v110 = vadd.f32 %v103, 0.0
    %v111 = vadd.f32 %v104, 0.0
    %v112 = vadd.f32 %v105, 0.0
    %v113 = vadd.f32 %v106, 0.0
    %v114 = vadd.f32 %v107, 0.0
    %v115 = vadd.f32 %v108, 0.0
    %s116 = sld [smem:[#allocation2 + $0x1]]
    %v117 = vstv %s116
    %v118 = vmul.f32 %v117, %v45
    %v119 = vmul.f32 %v117, %v47
    %v120 = vmul.f32 %v117, %v49
    %v121 = vmul.f32 %v117, %v51
    %v122 = vmul.f32 %v117, %v53
    %v123 = vmul.f32 %v117, %v55
    %v124 = vmul.f32 %v117, %v57
    %v125 = vadd.f32 %v118, 0.0
    %v126 = vadd.f32 %v119, 0.0
    %v127 = vadd.f32 %v120, 0.0
    %v128 = vadd.f32 %v121, 0.0
    %v129 = vadd.f32 %v122, 0.0
    %v130 = vadd.f32 %v123, 0.0
    %v131 = vadd.f32 %v124, 0.0
    %s132 = sld [smem:[#allocation2 + $0x2]]
    %v133 = vstv %s132
    %v134 = vmul.f32 %v133, %v45
    %v135 = vmul.f32 %v133, %v47
    %v136 = vmul.f32 %v133, %v49
    %v137 = vmul.f32 %v133, %v51
    %v138 = vmul.f32 %v133, %v53
    %v139 = vmul.f32 %v133, %v55
    %v140 = vmul.f32 %v133, %v57
    %v141 = vadd.f32 %v134, 0.0
    %v142 = vadd.f32 %v135, 0.0
    %v143 = vadd.f32 %v136, 0.0
    %v144 = vadd.f32 %v137, 0.0
    %v145 = vadd.f32 %v138, 0.0
    %v146 = vadd.f32 %v139, 0.0
    %v147 = vadd.f32 %v140, 0.0
    %s148 = sld [smem:[#allocation2 + $0x3]]
    %v149 = vstv %s148
    %v150 = vmul.f32 %v149, %v45
    %v151 = vmul.f32 %v149, %v47
    %v152 = vmul.f32 %v149, %v49
    %v153 = vmul.f32 %v149, %v51
    %v154 = vmul.f32 %v149, %v53
    %v155 = vmul.f32 %v149, %v55
    %v156 = vmul.f32 %v149, %v57
    %v157 = vadd.f32 %v150, 0.0
    %v158 = vadd.f32 %v151, 0.0
    %v159 = vadd.f32 %v152, 0.0
    %v160 = vadd.f32 %v153, 0.0
    %v161 = vadd.f32 %v154, 0.0
    %v162 = vadd.f32 %v155, 0.0
    %v163 = vadd.f32 %v156, 0.0
    %s164 = sld [smem:[#allocation2 + $0x4]]
    %v165 = vstv %s164
    %v166 = vmul.f32 %v165, %v59
    %v167 = vmul.f32 %v165, %v61
    %v168 = vmul.f32 %v165, %v63
    %v169 = vmul.f32 %v165, %v65
    %v170 = vmul.f32 %v165, %v67
    %v171 = vmul.f32 %v165, %v69
    %v172 = vmul.f32 %v165, %v71
    %v173 = vadd.f32 %v109, %v166
    %v174 = vadd.f32 %v110, %v167
    %v175 = vadd.f32 %v111, %v168
    %v176 = vadd.f32 %v112, %v169
    %v177 = vadd.f32 %v113, %v170
    %v178 = vadd.f32 %v114, %v171
    %v179 = vadd.f32 %v115, %v172
    %s180 = sld [smem:[#allocation2 + $0x5]]
    %v181 = vstv %s180
    %v182 = vmul.f32 %v181, %v59
    %v183 = vmul.f32 %v181, %v61
    %v184 = vmul.f32 %v181, %v63
    %v185 = vmul.f32 %v181, %v65
    %v186 = vmul.f32 %v181, %v67
    %v187 = vmul.f32 %v181, %v69
    %v188 = vmul.f32 %v181, %v71
    %v189 = vadd.f32 %v125, %v182
    %v190 = vadd.f32 %v126, %v183
    %v191 = vadd.f32 %v127, %v184
    %v192 = vadd.f32 %v128, %v185
    %v193 = vadd.f32 %v129, %v186
    %v194 = vadd.f32 %v130, %v187
    %v195 = vadd.f32 %v131, %v188
    %s196 = sld [smem:[#allocation2 + $0x6]]
    %v197 = vstv %s196
    %v198 = vmul.f32 %v197, %v59
    %v199 = vmul.f32 %v197, %v61
    %v200 = vmul.f32 %v197, %v63
    %v201 = vmul.f32 %v197, %v65
    %v202 = vmul.f32 %v197, %v67
    %v203 = vmul.f32 %v197, %v69
    %v204 = vmul.f32 %v197, %v71
    %v205 = vadd.f32 %v141, %v198
    %v206 = vadd.f32 %v142, %v199
    %v207 = vadd.f32 %v143, %v200
    %v208 = vadd.f32 %v144, %v201
    %v209 = vadd.f32 %v145, %v202
    %v210 = vadd.f32 %v146, %v203
    %v211 = vadd.f32 %v147, %v204
    %s212 = sld [smem:[#allocation2 + $0x7]]
    %v213 = vstv %s212
    %v214 = vmul.f32 %v213, %v59
    %v215 = vmul.f32 %v213, %v61
    %v216 = vmul.f32 %v213, %v63
    %v217 = vmul.f32 %v213, %v65
    %v218 = vmul.f32 %v213, %v67
    %v219 = vmul.f32 %v213, %v69
    %v220 = vmul.f32 %v213, %v71
    %v221 = vadd.f32 %v157, %v214
    %v222 = vadd.f32 %v158, %v215
    %v223 = vadd.f32 %v159, %v216
    %v224 = vadd.f32 %v160, %v217
    %v225 = vadd.f32 %v161, %v218
    %v226 = vadd.f32 %v162, %v219
    %v227 = vadd.f32 %v163, %v220
    %s228 = sld [smem:[#allocation2 + $0x8]]
    %v229 = vstv %s228
    %v230 = vmul.f32 %v229, %v73
    %v231 = vmul.f32 %v229, %v75
    %v232 = vmul.f32 %v229, %v77
    %v233 = vmul.f32 %v229, %v79
    %v234 = vmul.f32 %v229, %v81
    %v235 = vmul.f32 %v229, %v83
    %v236 = vmul.f32 %v229, %v85
    %v237 = vadd.f32 %v173, %v230
    %v238 = vadd.f32 %v174, %v231
    %v239 = vadd.f32 %v175, %v232
    %v240 = vadd.f32 %v176, %v233
    %v241 = vadd.f32 %v177, %v234
    %v242 = vadd.f32 %v178, %v235
    %v243 = vadd.f32 %v179, %v236
    %s244 = sld [smem:[#allocation2 + $0x9]]
    %v245 = vstv %s244
    %v246 = vmul.f32 %v245, %v73
    %v247 = vmul.f32 %v245, %v75
    %v248 = vmul.f32 %v245, %v77
    %v249 = vmul.f32 %v245, %v79
    %v250 = vmul.f32 %v245, %v81
    %v251 = vmul.f32 %v245, %v83
    %v252 = vmul.f32 %v245, %v85
    %v253 = vadd.f32 %v189, %v246
    %v254 = vadd.f32 %v190, %v247
    %v255 = vadd.f32 %v191, %v248
    %v256 = vadd.f32 %v192, %v249
    %v257 = vadd.f32 %v193, %v250
    %v258 = vadd.f32 %v194, %v251
    %v259 = vadd.f32 %v195, %v252
    %s260 = sld [smem:[#allocation2 + $0xa]]
    %v261 = vstv %s260
    %v262 = vmul.f32 %v261, %v73
    %v263 = vmul.f32 %v261, %v75
    %v264 = vmul.f32 %v261, %v77
    %v265 = vmul.f32 %v261, %v79
    %v266 = vmul.f32 %v261, %v81
    %v267 = vmul.f32 %v261, %v83
    %v268 = vmul.f32 %v261, %v85
    %v269 = vadd.f32 %v205, %v262
    %v270 = vadd.f32 %v206, %v263
    %v271 = vadd.f32 %v207, %v264
    %v272 = vadd.f32 %v208, %v265
    %v273 = vadd.f32 %v209, %v266
    %v274 = vadd.f32 %v210, %v267
    %v275 = vadd.f32 %v211, %v268
    %s276 = sld [smem:[#allocation2 + $0xb]]
    %v277 = vstv %s276
    %v278 = vmul.f32 %v277, %v73
    %v279 = vmul.f32 %v277, %v75
    %v280 = vmul.f32 %v277, %v77
    %v281 = vmul.f32 %v277, %v79
    %v282 = vmul.f32 %v277, %v81
    %v283 = vmul.f32 %v277, %v83
    %v284 = vmul.f32 %v277, %v85
    %v285 = vadd.f32 %v221, %v278
    %v286 = vadd.f32 %v222, %v279
    %v287 = vadd.f32 %v223, %v280
    %v288 = vadd.f32 %v224, %v281
    %v289 = vadd.f32 %v225, %v282
    %v290 = vadd.f32 %v226, %v283
    %v291 = vadd.f32 %v227, %v284
    %s292 = sld [smem:[#allocation2 + $0xc]]
    %v293 = vstv %s292
    %v294 = vmul.f32 %v293, %v87
    %v295 = vmul.f32 %v293, %v89
    %v296 = vmul.f32 %v293, %v91
    %v297 = vmul.f32 %v293, %v93
    %v298 = vmul.f32 %v293, %v95
    %v299 = vmul.f32 %v293, %v97
    %v300 = vmul.f32 %v293, %v99
    %v301 = vadd.f32 %v237, %v294
    %v302 = vadd.f32 %v238, %v295
    %v303 = vadd.f32 %v239, %v296
    %v304 = vadd.f32 %v240, %v297
    %v305 = vadd.f32 %v241, %v298
    %v306 = vadd.f32 %v242, %v299
    %v307 = vadd.f32 %v243, %v300
    %s308 = sld [smem:[#allocation2 + $0xd]]
    %v309 = vstv %s308
    %v310 = vmul.f32 %v309, %v87
    %v311 = vmul.f32 %v309, %v89
    %v312 = vmul.f32 %v309, %v91
    %v313 = vmul.f32 %v309, %v93
    %v314 = vmul.f32 %v309, %v95
    %v315 = vmul.f32 %v309, %v97
    %v316 = vmul.f32 %v309, %v99
    %v317 = vadd.f32 %v253, %v310
    %v318 = vadd.f32 %v254, %v311
    %v319 = vadd.f32 %v255, %v312
    %v320 = vadd.f32 %v256, %v313
    %v321 = vadd.f32 %v257, %v314
    %v322 = vadd.f32 %v258, %v315
    %v323 = vadd.f32 %v259, %v316
    %s324 = sld [smem:[#allocation2 + $0xe]]
    %v325 = vstv %s324
    %v326 = vmul.f32 %v325, %v87
    %v327 = vmul.f32 %v325, %v89
    %v328 = vmul.f32 %v325, %v91
    %v329 = vmul.f32 %v325, %v93
    %v330 = vmul.f32 %v325, %v95
    %v331 = vmul.f32 %v325, %v97
    %v332 = vmul.f32 %v325, %v99
    %v333 = vadd.f32 %v269, %v326
    %v334 = vadd.f32 %v270, %v327
    %v335 = vadd.f32 %v271, %v328
    %v336 = vadd.f32 %v272, %v329
    %v337 = vadd.f32 %v273, %v330
    %v338 = vadd.f32 %v274, %v331
    %v339 = vadd.f32 %v275, %v332
    %s340 = sld [smem:[#allocation2 + $0xf]]
    %v341 = vstv %s340
    %v342 = vmul.f32 %v341, %v87
    %v343 = vmul.f32 %v341, %v89
    %v344 = vmul.f32 %v341, %v91
    %v345 = vmul.f32 %v341, %v93
    %v346 = vmul.f32 %v341, %v95
    %v347 = vmul.f32 %v341, %v97
    %v348 = vmul.f32 %v341, %v99
    %v349 = vadd.f32 %v285, %v342
    %v350 = vadd.f32 %v286, %v343
    %v351 = vadd.f32 %v287, %v344
    %v352 = vadd.f32 %v288, %v345
    %v353 = vadd.f32 %v289, %v346
    %v354 = vadd.f32 %v290, %v347
    %v355 = vadd.f32 %v291, %v348
    %s356 = scalar_lea.vmem %s0, 1
    %v357 = vld [vmem:[%s356] ss:$2 sm:$0x7f]
    %s358 = scalar_lea.vmem %s0, 33
    %v359 = vld [vmem:[%s358] ss:$2 sm:$0x7f]
    %s360 = scalar_lea.vmem %s0, 65
    %v361 = vld [vmem:[%s360] ss:$2 sm:$0x7f]
    %s362 = scalar_lea.vmem %s0, 97
    %v363 = vld [vmem:[%s362] ss:$2 sm:$0x7f]
    %s364 = scalar_lea.vmem %s0, 129
    %v365 = vld [vmem:[%s364] ss:$2 sm:$0x7f]
    %s366 = scalar_lea.vmem %s0, 161
    %v367 = vld [vmem:[%s366] ss:$2 sm:$0x7f]
    %s368 = scalar_lea.vmem %s0, 193
    %v369 = vld [vmem:[%s368] ss:$2 sm:$0x7f]
    %s370 = scalar_lea.vmem %s0, 257
    %v371 = vld [vmem:[%s370] ss:$2 sm:$0x7f]
    %s372 = scalar_lea.vmem %s0, 289
    %v373 = vld [vmem:[%s372] ss:$2 sm:$0x7f]
    %s374 = scalar_lea.vmem %s0, 321
    %v375 = vld [vmem:[%s374] ss:$2 sm:$0x7f]
    %s376 = scalar_lea.vmem %s0, 353
    %v377 = vld [vmem:[%s376] ss:$2 sm:$0x7f]
    %s378 = scalar_lea.vmem %s0, 385
    %v379 = vld [vmem:[%s378] ss:$2 sm:$0x7f]
    %s380 = scalar_lea.vmem %s0, 417
    %v381 = vld [vmem:[%s380] ss:$2 sm:$0x7f]
    %s382 = scalar_lea.vmem %s0, 449
    %v383 = vld [vmem:[%s382] ss:$2 sm:$0x7f]
    %s384 = scalar_lea.vmem %s0, 513
    %v385 = vld [vmem:[%s384] ss:$2 sm:$0x7f]
    %s386 = scalar_lea.vmem %s0, 545
    %v387 = vld [vmem:[%s386] ss:$2 sm:$0x7f]
    %s388 = scalar_lea.vmem %s0, 577
    %v389 = vld [vmem:[%s388] ss:$2 sm:$0x7f]
    %s390 = scalar_lea.vmem %s0, 609
    %v391 = vld [vmem:[%s390] ss:$2 sm:$0x7f]
    %s392 = scalar_lea.vmem %s0, 641
    %v393 = vld [vmem:[%s392] ss:$2 sm:$0x7f]
    %s394 = scalar_lea.vmem %s0, 673
    %v395 = vld [vmem:[%s394] ss:$2 sm:$0x7f]
    %s396 = scalar_lea.vmem %s0, 705
    %v397 = vld [vmem:[%s396] ss:$2 sm:$0x7f]
    %s398 = scalar_lea.vmem %s0, 769
    %v399 = vld [vmem:[%s398] ss:$2 sm:$0x7f]
    %s400 = scalar_lea.vmem %s0, 801
    %v401 = vld [vmem:[%s400] ss:$2 sm:$0x7f]
    %s402 = scalar_lea.vmem %s0, 833
    %v403 = vld [vmem:[%s402] ss:$2 sm:$0x7f]
    %s404 = scalar_lea.vmem %s0, 865
    %v405 = vld [vmem:[%s404] ss:$2 sm:$0x7f]
    %s406 = scalar_lea.vmem %s0, 897
    %v407 = vld [vmem:[%s406] ss:$2 sm:$0x7f]
    %s408 = scalar_lea.vmem %s0, 929
    %v409 = vld [vmem:[%s408] ss:$2 sm:$0x7f]
    %s410 = scalar_lea.vmem %s0, 961
    %v411 = vld [vmem:[%s410] ss:$2 sm:$0x7f]
    %s412 = sld [smem:[#allocation2 + $0x10]]
    %v413 = vstv %s412
    %v414 = vmul.f32 %v413, %v357
    %v415 = vmul.f32 %v413, %v359
    %v416 = vmul.f32 %v413, %v361
    %v417 = vmul.f32 %v413, %v363
    %v418 = vmul.f32 %v413, %v365
    %v419 = vmul.f32 %v413, %v367
    %v420 = vmul.f32 %v413, %v369
    %v421 = vadd.f32 %v301, %v414
    %v422 = vadd.f32 %v302, %v415
    %v423 = vadd.f32 %v303, %v416
    %v424 = vadd.f32 %v304, %v417
    %v425 = vadd.f32 %v305, %v418
    %v426 = vadd.f32 %v306, %v419
    %v427 = vadd.f32 %v307, %v420
    %s428 = sld [smem:[#allocation2 + $0x11]]
    %v429 = vstv %s428
    %v430 = vmul.f32 %v429, %v357
    %v431 = vmul.f32 %v429, %v359
    %v432 = vmul.f32 %v429, %v361
    %v433 = vmul.f32 %v429, %v363
    %v434 = vmul.f32 %v429, %v365
    %v435 = vmul.f32 %v429, %v367
    %v436 = vmul.f32 %v429, %v369
    %v437 = vadd.f32 %v317, %v430
    %v438 = vadd.f32 %v318, %v431
    %v439 = vadd.f32 %v319, %v432
    %v440 = vadd.f32 %v320, %v433
    %v441 = vadd.f32 %v321, %v434
    %v442 = vadd.f32 %v322, %v435
    %v443 = vadd.f32 %v323, %v436
    %s444 = sld [smem:[#allocation2 + $0x12]]
    %v445 = vstv %s444
    %v446 = vmul.f32 %v445, %v357
    %v447 = vmul.f32 %v445, %v359
    %v448 = vmul.f32 %v445, %v361
    %v449 = vmul.f32 %v445, %v363
    %v450 = vmul.f32 %v445, %v365
    %v451 = vmul.f32 %v445, %v367
    %v452 = vmul.f32 %v445, %v369
    %v453 = vadd.f32 %v333, %v446
    %v454 = vadd.f32 %v334, %v447
    %v455 = vadd.f32 %v335, %v448
    %v456 = vadd.f32 %v336, %v449
    %v457 = vadd.f32 %v337, %v450
    %v458 = vadd.f32 %v338, %v451
    %v459 = vadd.f32 %v339, %v452
    %s460 = sld [smem:[#allocation2 + $0x13]]
    %v461 = vstv %s460
    %v462 = vmul.f32 %v461, %v357
    %v463 = vmul.f32 %v461, %v359
    %v464 = vmul.f32 %v461, %v361
    %v465 = vmul.f32 %v461, %v363
    %v466 = vmul.f32 %v461, %v365
    %v467 = vmul.f32 %v461, %v367
    %v468 = vmul.f32 %v461, %v369
    %v469 = vadd.f32 %v349, %v462
    %v470 = vadd.f32 %v350, %v463
    %v471 = vadd.f32 %v351, %v464
    %v472 = vadd.f32 %v352, %v465
    %v473 = vadd.f32 %v353, %v466
    %v474 = vadd.f32 %v354, %v467
    %v475 = vadd.f32 %v355, %v468
    %s476 = sld [smem:[#allocation2 + $0x14]]
    %v477 = vstv %s476
    %v478 = vmul.f32 %v477, %v371
    %v479 = vmul.f32 %v477, %v373
    %v480 = vmul.f32 %v477, %v375
    %v481 = vmul.f32 %v477, %v377
    %v482 = vmul.f32 %v477, %v379
    %v483 = vmul.f32 %v477, %v381
    %v484 = vmul.f32 %v477, %v383
    %v485 = vadd.f32 %v421, %v478
    %v486 = vadd.f32 %v422, %v479
    %v487 = vadd.f32 %v423, %v480
    %v488 = vadd.f32 %v424, %v481
    %v489 = vadd.f32 %v425, %v482
    %v490 = vadd.f32 %v426, %v483
    %v491 = vadd.f32 %v427, %v484
    %s492 = sld [smem:[#allocation2 + $0x15]]
    %v493 = vstv %s492
    %v494 = vmul.f32 %v493, %v371
    %v495 = vmul.f32 %v493, %v373
    %v496 = vmul.f32 %v493, %v375
    %v497 = vmul.f32 %v493, %v377
    %v498 = vmul.f32 %v493, %v379
    %v499 = vmul.f32 %v493, %v381
    %v500 = vmul.f32 %v493, %v383
    %v501 = vadd.f32 %v437, %v494
    %v502 = vadd.f32 %v438, %v495
    %v503 = vadd.f32 %v439, %v496
    %v504 = vadd.f32 %v440, %v497
    %v505 = vadd.f32 %v441, %v498
    %v506 = vadd.f32 %v442, %v499
    %v507 = vadd.f32 %v443, %v500
    %s508 = sld [smem:[#allocation2 + $0x16]]
    %v509 = vstv %s508
    %v510 = vmul.f32 %v509, %v371
    %v511 = vmul.f32 %v509, %v373
    %v512 = vmul.f32 %v509, %v375
    %v513 = vmul.f32 %v509, %v377
    %v514 = vmul.f32 %v509, %v379
    %v515 = vmul.f32 %v509, %v381
    %v516 = vmul.f32 %v509, %v383
    %v517 = vadd.f32 %v453, %v510
    %v518 = vadd.f32 %v454, %v511
    %v519 = vadd.f32 %v455, %v512
    %v520 = vadd.f32 %v456, %v513
    %v521 = vadd.f32 %v457, %v514
    %v522 = vadd.f32 %v458, %v515
    %v523 = vadd.f32 %v459, %v516
    %s524 = sld [smem:[#allocation2 + $0x17]]
    %v525 = vstv %s524
    %v526 = vmul.f32 %v525, %v371
    %v527 = vmul.f32 %v525, %v373
    %v528 = vmul.f32 %v525, %v375
    %v529 = vmul.f32 %v525, %v377
    %v530 = vmul.f32 %v525, %v379
    %v531 = vmul.f32 %v525, %v381
    %v532 = vmul.f32 %v525, %v383
    %v533 = vadd.f32 %v469, %v526
    %v534 = vadd.f32 %v470, %v527
    %v535 = vadd.f32 %v471, %v528
    %v536 = vadd.f32 %v472, %v529
    %v537 = vadd.f32 %v473, %v530
    %v538 = vadd.f32 %v474, %v531
    %v539 = vadd.f32 %v475, %v532
    %s540 = sld [smem:[#allocation2 + $0x18]]
    %v541 = vstv %s540
    %v542 = vmul.f32 %v541, %v385
    %v543 = vmul.f32 %v541, %v387
    %v544 = vmul.f32 %v541, %v389
    %v545 = vmul.f32 %v541, %v391
    %v546 = vmul.f32 %v541, %v393
    %v547 = vmul.f32 %v541, %v395
    %v548 = vmul.f32 %v541, %v397
    %v549 = vadd.f32 %v485, %v542
    %v550 = vadd.f32 %v486, %v543
    %v551 = vadd.f32 %v487, %v544
    %v552 = vadd.f32 %v488, %v545
    %v553 = vadd.f32 %v489, %v546
    %v554 = vadd.f32 %v490, %v547
    %v555 = vadd.f32 %v491, %v548
    %s556 = sld [smem:[#allocation2 + $0x19]]
    %v557 = vstv %s556
    %v558 = vmul.f32 %v557, %v385
    %v559 = vmul.f32 %v557, %v387
    %v560 = vmul.f32 %v557, %v389
    %v561 = vmul.f32 %v557, %v391
    %v562 = vmul.f32 %v557, %v393
    %v563 = vmul.f32 %v557, %v395
    %v564 = vmul.f32 %v557, %v397
    %v565 = vadd.f32 %v501, %v558
    %v566 = vadd.f32 %v502, %v559
    %v567 = vadd.f32 %v503, %v560
    %v568 = vadd.f32 %v504, %v561
    %v569 = vadd.f32 %v505, %v562
    %v570 = vadd.f32 %v506, %v563
    %v571 = vadd.f32 %v507, %v564
    %s572 = sld [smem:[#allocation2 + $0x1a]]
    %v573 = vstv %s572
    %v574 = vmul.f32 %v573, %v385
    %v575 = vmul.f32 %v573, %v387
    %v576 = vmul.f32 %v573, %v389
    %v577 = vmul.f32 %v573, %v391
    %v578 = vmul.f32 %v573, %v393
    %v579 = vmul.f32 %v573, %v395
    %v580 = vmul.f32 %v573, %v397
    %v581 = vadd.f32 %v517, %v574
    %v582 = vadd.f32 %v518, %v575
    %v583 = vadd.f32 %v519, %v576
    %v584 = vadd.f32 %v520, %v577
    %v585 = vadd.f32 %v521, %v578
    %v586 = vadd.f32 %v522, %v579
    %v587 = vadd.f32 %v523, %v580
    %s588 = sld [smem:[#allocation2 + $0x1b]]
    %v589 = vstv %s588
    %v590 = vmul.f32 %v589, %v385
    %v591 = vmul.f32 %v589, %v387
    %v592 = vmul.f32 %v589, %v389
    %v593 = vmul.f32 %v589, %v391
    %v594 = vmul.f32 %v589, %v393
    %v595 = vmul.f32 %v589, %v395
    %v596 = vmul.f32 %v589, %v397
    %v597 = vadd.f32 %v533, %v590
    %v598 = vadd.f32 %v534, %v591
    %v599 = vadd.f32 %v535, %v592
    %v600 = vadd.f32 %v536, %v593
    %v601 = vadd.f32 %v537, %v594
    %v602 = vadd.f32 %v538, %v595
    %v603 = vadd.f32 %v539, %v596
    %s604 = sld [smem:[#allocation2 + $0x1c]]
    %v605 = vstv %s604
    %v606 = vmul.f32 %v605, %v399
    %v607 = vmul.f32 %v605, %v401
    %v608 = vmul.f32 %v605, %v403
    %v609 = vmul.f32 %v605, %v405
    %v610 = vmul.f32 %v605, %v407
    %v611 = vmul.f32 %v605, %v409
    %v612 = vmul.f32 %v605, %v411
    %v613 = vadd.f32 %v549, %v606
    %v614 = vadd.f32 %v550, %v607
    %v615 = vadd.f32 %v551, %v608
    %v616 = vadd.f32 %v552, %v609
    %v617 = vadd.f32 %v553, %v610
    %v618 = vadd.f32 %v554, %v611
    %v619 = vadd.f32 %v555, %v612
    %s620 = sld [smem:[#allocation2 + $0x1d]]
    %v621 = vstv %s620
    %v622 = vmul.f32 %v621, %v399
    %v623 = vmul.f32 %v621, %v401
    %v624 = vmul.f32 %v621, %v403
    %v625 = vmul.f32 %v621, %v405
    %v626 = vmul.f32 %v621, %v407
    %v627 = vmul.f32 %v621, %v409
    %v628 = vmul.f32 %v621, %v411
    %v629 = vadd.f32 %v565, %v622
    %v630 = vadd.f32 %v566, %v623
    %v631 = vadd.f32 %v567, %v624
    %v632 = vadd.f32 %v568, %v625
    %v633 = vadd.f32 %v569, %v626
    %v634 = vadd.f32 %v570, %v627
    %v635 = vadd.f32 %v571, %v628
    %s636 = sld [smem:[#allocation2 + $0x1e]]
    %v637 = vstv %s636
    %v638 = vmul.f32 %v637, %v399
    %v639 = vmul.f32 %v637, %v401
    %v640 = vmul.f32 %v637, %v403
    %v641 = vmul.f32 %v637, %v405
    %v642 = vmul.f32 %v637, %v407
    %v643 = vmul.f32 %v637, %v409
    %v644 = vmul.f32 %v637, %v411
    %v645 = vadd.f32 %v581, %v638
    %v646 = vadd.f32 %v582, %v639
    %v647 = vadd.f32 %v583, %v640
    %v648 = vadd.f32 %v584, %v641
    %v649 = vadd.f32 %v585, %v642
    %v650 = vadd.f32 %v586, %v643
    %v651 = vadd.f32 %v587, %v644
    %s652 = sld [smem:[#allocation2 + $0x1f]]
    %v653 = vstv %s652
    %v654 = vmul.f32 %v653, %v399
    %v655 = vmul.f32 %v653, %v401
    %v656 = vmul.f32 %v653, %v403
    %v657 = vmul.f32 %v653, %v405
    %v658 = vmul.f32 %v653, %v407
    %v659 = vmul.f32 %v653, %v409
    %v660 = vmul.f32 %v653, %v411
    %v661 = vadd.f32 %v597, %v654
    %v662 = vadd.f32 %v598, %v655
    %v663 = vadd.f32 %v599, %v656
    %v664 = vadd.f32 %v600, %v657
    %v665 = vadd.f32 %v601, %v658
    %v666 = vadd.f32 %v602, %v659
    %v667 = vadd.f32 %v603, %v660
    %s668 = scalar_lea.vmem %s0, 2
    %v669 = vld [vmem:[%s668] ss:$2 sm:$0x7f]
    %s670 = scalar_lea.vmem %s0, 34
    %v671 = vld [vmem:[%s670] ss:$2 sm:$0x7f]
    %s672 = scalar_lea.vmem %s0, 66
    %v673 = vld [vmem:[%s672] ss:$2 sm:$0x7f]
    %s674 = scalar_lea.vmem %s0, 98
    %v675 = vld [vmem:[%s674] ss:$2 sm:$0x7f]
    %s676 = scalar_lea.vmem %s0, 130
    %v677 = vld [vmem:[%s676] ss:$2 sm:$0x7f]
    %s678 = scalar_lea.vmem %s0, 162
    %v679 = vld [vmem:[%s678] ss:$2 sm:$0x7f]
    %s680 = scalar_lea.vmem %s0, 194
    %v681 = vld [vmem:[%s680] ss:$2 sm:$0x7f]
    %s682 = scalar_lea.vmem %s0, 258
    %v683 = vld [vmem:[%s682] ss:$2 sm:$0x7f]
    %s684 = scalar_lea.vmem %s0, 290
    %v685 = vld [vmem:[%s684] ss:$2 sm:$0x7f]
    %s686 = scalar_lea.vmem %s0, 322
    %v687 = vld [vmem:[%s686] ss:$2 sm:$0x7f]
    %s688 = scalar_lea.vmem %s0, 354
    %v689 = vld [vmem:[%s688] ss:$2 sm:$0x7f]
    %s690 = scalar_lea.vmem %s0, 386
    %v691 = vld [vmem:[%s690] ss:$2 sm:$0x7f]
    %s692 = scalar_lea.vmem %s0, 418
    %v693 = vld [vmem:[%s692] ss:$2 sm:$0x7f]
    %s694 = scalar_lea.vmem %s0, 450
    %v695 = vld [vmem:[%s694] ss:$2 sm:$0x7f]
    %s696 = scalar_lea.vmem %s0, 514
    %v697 = vld [vmem:[%s696] ss:$2 sm:$0x7f]
    %s698 = scalar_lea.vmem %s0, 546
    %v699 = vld [vmem:[%s698] ss:$2 sm:$0x7f]
    %s700 = scalar_lea.vmem %s0, 578
    %v701 = vld [vmem:[%s700] ss:$2 sm:$0x7f]
    %s702 = scalar_lea.vmem %s0, 610
    %v703 = vld [vmem:[%s702] ss:$2 sm:$0x7f]
    %s704 = scalar_lea.vmem %s0, 642
    %v705 = vld [vmem:[%s704] ss:$2 sm:$0x7f]
    %s706 = scalar_lea.vmem %s0, 674
    %v707 = vld [vmem:[%s706] ss:$2 sm:$0x7f]
    %s708 = scalar_lea.vmem %s0, 706
    %v709 = vld [vmem:[%s708] ss:$2 sm:$0x7f]
    %s710 = scalar_lea.vmem %s0, 770
    %v711 = vld [vmem:[%s710] ss:$2 sm:$0x7f]
    %s712 = scalar_lea.vmem %s0, 802
    %v713 = vld [vmem:[%s712] ss:$2 sm:$0x7f]
    %s714 = scalar_lea.vmem %s0, 834
    %v715 = vld [vmem:[%s714] ss:$2 sm:$0x7f]
    %s716 = scalar_lea.vmem %s0, 866
    %v717 = vld [vmem:[%s716] ss:$2 sm:$0x7f]
    %s718 = scalar_lea.vmem %s0, 898
    %v719 = vld [vmem:[%s718] ss:$2 sm:$0x7f]
    %s720 = scalar_lea.vmem %s0, 930
    %v721 = vld [vmem:[%s720] ss:$2 sm:$0x7f]
    %s722 = scalar_lea.vmem %s0, 962
    %v723 = vld [vmem:[%s722] ss:$2 sm:$0x7f]
    %s724 = sld [smem:[#allocation2 + $0x20]]
    %v725 = vstv %s724
    %v726 = vmul.f32 %v725, %v669
    %v727 = vmul.f32 %v725, %v671
    %v728 = vmul.f32 %v725, %v673
    %v729 = vmul.f32 %v725, %v675
    %v730 = vmul.f32 %v725, %v677
    %v731 = vmul.f32 %v725, %v679
    %v732 = vmul.f32 %v725, %v681
    %v733 = vadd.f32 %v613, %v726
    %v734 = vadd.f32 %v614, %v727
    %v735 = vadd.f32 %v615, %v728
    %v736 = vadd.f32 %v616, %v729
    %v737 = vadd.f32 %v617, %v730
    %v738 = vadd.f32 %v618, %v731
    %v739 = vadd.f32 %v619, %v732
    %s740 = sld [smem:[#allocation2 + $0x21]]
    %v741 = vstv %s740
    %v742 = vmul.f32 %v741, %v669
    %v743 = vmul.f32 %v741, %v671
    %v744 = vmul.f32 %v741, %v673
    %v745 = vmul.f32 %v741, %v675
    %v746 = vmul.f32 %v741, %v677
    %v747 = vmul.f32 %v741, %v679
    %v748 = vmul.f32 %v741, %v681
    %v749 = vadd.f32 %v629, %v742
    %v750 = vadd.f32 %v630, %v743
    %v751 = vadd.f32 %v631, %v744
    %v752 = vadd.f32 %v632, %v745
    %v753 = vadd.f32 %v633, %v746
    %v754 = vadd.f32 %v634, %v747
    %v755 = vadd.f32 %v635, %v748
    %s756 = sld [smem:[#allocation2 + $0x22]]
    %v757 = vstv %s756
    %v758 = vmul.f32 %v757, %v669
    %v759 = vmul.f32 %v757, %v671
    %v760 = vmul.f32 %v757, %v673
    %v761 = vmul.f32 %v757, %v675
    %v762 = vmul.f32 %v757, %v677
    %v763 = vmul.f32 %v757, %v679
    %v764 = vmul.f32 %v757, %v681
    %v765 = vadd.f32 %v645, %v758
    %v766 = vadd.f32 %v646, %v759
    %v767 = vadd.f32 %v647, %v760
    %v768 = vadd.f32 %v648, %v761
    %v769 = vadd.f32 %v649, %v762
    %v770 = vadd.f32 %v650, %v763
    %v771 = vadd.f32 %v651, %v764
    %s772 = sld [smem:[#allocation2 + $0x23]]
    %v773 = vstv %s772
    %v774 = vmul.f32 %v773, %v669
    %v775 = vmul.f32 %v773, %v671
    %v776 = vmul.f32 %v773, %v673
    %v777 = vmul.f32 %v773, %v675
    %v778 = vmul.f32 %v773, %v677
    %v779 = vmul.f32 %v773, %v679
    %v780 = vmul.f32 %v773, %v681
    %v781 = vadd.f32 %v661, %v774
    %v782 = vadd.f32 %v662, %v775
    %v783 = vadd.f32 %v663, %v776
    %v784 = vadd.f32 %v664, %v777
    %v785 = vadd.f32 %v665, %v778
    %v786 = vadd.f32 %v666, %v779
    %v787 = vadd.f32 %v667, %v780
    %s788 = sld [smem:[#allocation2 + $0x24]]
    %v789 = vstv %s788
    %v790 = vmul.f32 %v789, %v683
    %v791 = vmul.f32 %v789, %v685
    %v792 = vmul.f32 %v789, %v687
    %v793 = vmul.f32 %v789, %v689
    %v794 = vmul.f32 %v789, %v691
    %v795 = vmul.f32 %v789, %v693
    %v796 = vmul.f32 %v789, %v695
    %v797 = vadd.f32 %v733, %v790
    %v798 = vadd.f32 %v734, %v791
    %v799 = vadd.f32 %v735, %v792
    %v800 = vadd.f32 %v736, %v793
    %v801 = vadd.f32 %v737, %v794
    %v802 = vadd.f32 %v738, %v795
    %v803 = vadd.f32 %v739, %v796
    %s804 = sld [smem:[#allocation2 + $0x25]]
    %v805 = vstv %s804
    %v806 = vmul.f32 %v805, %v683
    %v807 = vmul.f32 %v805, %v685
    %v808 = vmul.f32 %v805, %v687
    %v809 = vmul.f32 %v805, %v689
    %v810 = vmul.f32 %v805, %v691
    %v811 = vmul.f32 %v805, %v693
    %v812 = vmul.f32 %v805, %v695
    %v813 = vadd.f32 %v749, %v806
    %v814 = vadd.f32 %v750, %v807
    %v815 = vadd.f32 %v751, %v808
    %v816 = vadd.f32 %v752, %v809
    %v817 = vadd.f32 %v753, %v810
    %v818 = vadd.f32 %v754, %v811
    %v819 = vadd.f32 %v755, %v812
    %s820 = sld [smem:[#allocation2 + $0x26]]
    %v821 = vstv %s820
    %v822 = vmul.f32 %v821, %v683
    %v823 = vmul.f32 %v821, %v685
    %v824 = vmul.f32 %v821, %v687
    %v825 = vmul.f32 %v821, %v689
    %v826 = vmul.f32 %v821, %v691
    %v827 = vmul.f32 %v821, %v693
    %v828 = vmul.f32 %v821, %v695
    %v829 = vadd.f32 %v765, %v822
    %v830 = vadd.f32 %v766, %v823
    %v831 = vadd.f32 %v767, %v824
    %v832 = vadd.f32 %v768, %v825
    %v833 = vadd.f32 %v769, %v826
    %v834 = vadd.f32 %v770, %v827
    %v835 = vadd.f32 %v771, %v828
    %s836 = sld [smem:[#allocation2 + $0x27]]
    %v837 = vstv %s836
    %v838 = vmul.f32 %v837, %v683
    %v839 = vmul.f32 %v837, %v685
    %v840 = vmul.f32 %v837, %v687
    %v841 = vmul.f32 %v837, %v689
    %v842 = vmul.f32 %v837, %v691
    %v843 = vmul.f32 %v837, %v693
    %v844 = vmul.f32 %v837, %v695
    %v845 = vadd.f32 %v781, %v838
    %v846 = vadd.f32 %v782, %v839
    %v847 = vadd.f32 %v783, %v840
    %v848 = vadd.f32 %v784, %v841
    %v849 = vadd.f32 %v785, %v842
    %v850 = vadd.f32 %v786, %v843
    %v851 = vadd.f32 %v787, %v844
    %s852 = sld [smem:[#allocation2 + $0x28]]
    %v853 = vstv %s852
    %v854 = vmul.f32 %v853, %v697
    %v855 = vmul.f32 %v853, %v699
    %v856 = vmul.f32 %v853, %v701
    %v857 = vmul.f32 %v853, %v703
    %v858 = vmul.f32 %v853, %v705
    %v859 = vmul.f32 %v853, %v707
    %v860 = vmul.f32 %v853, %v709
    %v861 = vadd.f32 %v797, %v854
    %v862 = vadd.f32 %v798, %v855
    %v863 = vadd.f32 %v799, %v856
    %v864 = vadd.f32 %v800, %v857
    %v865 = vadd.f32 %v801, %v858
    %v866 = vadd.f32 %v802, %v859
    %v867 = vadd.f32 %v803, %v860
    %s868 = sld [smem:[#allocation2 + $0x29]]
    %v869 = vstv %s868
    %v870 = vmul.f32 %v869, %v697
    %v871 = vmul.f32 %v869, %v699
    %v872 = vmul.f32 %v869, %v701
    %v873 = vmul.f32 %v869, %v703
    %v874 = vmul.f32 %v869, %v705
    %v875 = vmul.f32 %v869, %v707
    %v876 = vmul.f32 %v869, %v709
    %v877 = vadd.f32 %v813, %v870
    %v878 = vadd.f32 %v814, %v871
    %v879 = vadd.f32 %v815, %v872
    %v880 = vadd.f32 %v816, %v873
    %v881 = vadd.f32 %v817, %v874
    %v882 = vadd.f32 %v818, %v875
    %v883 = vadd.f32 %v819, %v876
    %s884 = sld [smem:[#allocation2 + $0x2a]]
    %v885 = vstv %s884
    %v886 = vmul.f32 %v885, %v697
    %v887 = vmul.f32 %v885, %v699
    %v888 = vmul.f32 %v885, %v701
    %v889 = vmul.f32 %v885, %v703
    %v890 = vmul.f32 %v885, %v705
    %v891 = vmul.f32 %v885, %v707
    %v892 = vmul.f32 %v885, %v709
    %v893 = vadd.f32 %v829, %v886
    %v894 = vadd.f32 %v830, %v887
    %v895 = vadd.f32 %v831, %v888
    %v896 = vadd.f32 %v832, %v889
    %v897 = vadd.f32 %v833, %v890
    %v898 = vadd.f32 %v834, %v891
    %v899 = vadd.f32 %v835, %v892
    %s900 = sld [smem:[#allocation2 + $0x2b]]
    %v901 = vstv %s900
    %v902 = vmul.f32 %v901, %v697
    %v903 = vmul.f32 %v901, %v699
    %v904 = vmul.f32 %v901, %v701
    %v905 = vmul.f32 %v901, %v703
    %v906 = vmul.f32 %v901, %v705
    %v907 = vmul.f32 %v901, %v707
    %v908 = vmul.f32 %v901, %v709
    %v909 = vadd.f32 %v845, %v902
    %v910 = vadd.f32 %v846, %v903
    %v911 = vadd.f32 %v847, %v904
    %v912 = vadd.f32 %v848, %v905
    %v913 = vadd.f32 %v849, %v906
    %v914 = vadd.f32 %v850, %v907
    %v915 = vadd.f32 %v851, %v908
    %s916 = sld [smem:[#allocation2 + $0x2c]]
    %v917 = vstv %s916
    %v918 = vmul.f32 %v917, %v711
    %v919 = vmul.f32 %v917, %v713
    %v920 = vmul.f32 %v917, %v715
    %v921 = vmul.f32 %v917, %v717
    %v922 = vmul.f32 %v917, %v719
    %v923 = vmul.f32 %v917, %v721
    %v924 = vmul.f32 %v917, %v723
    %v925 = vadd.f32 %v861, %v918
    %v926 = vadd.f32 %v862, %v919
    %v927 = vadd.f32 %v863, %v920
    %v928 = vadd.f32 %v864, %v921
    %v929 = vadd.f32 %v865, %v922
    %v930 = vadd.f32 %v866, %v923
    %v931 = vadd.f32 %v867, %v924
    %s932 = sld [smem:[#allocation2 + $0x2d]]
    %v933 = vstv %s932
    %v934 = vmul.f32 %v933, %v711
    %v935 = vmul.f32 %v933, %v713
    %v936 = vmul.f32 %v933, %v715
    %v937 = vmul.f32 %v933, %v717
    %v938 = vmul.f32 %v933, %v719
    %v939 = vmul.f32 %v933, %v721
    %v940 = vmul.f32 %v933, %v723
    %v941 = vadd.f32 %v877, %v934
    %v942 = vadd.f32 %v878, %v935
    %v943 = vadd.f32 %v879, %v936
    %v944 = vadd.f32 %v880, %v937
    %v945 = vadd.f32 %v881, %v938
    %v946 = vadd.f32 %v882, %v939
    %v947 = vadd.f32 %v883, %v940
    %s948 = sld [smem:[#allocation2 + $0x2e]]
    %v949 = vstv %s948
    %v950 = vmul.f32 %v949, %v711
    %v951 = vmul.f32 %v949, %v713
    %v952 = vmul.f32 %v949, %v715
    %v953 = vmul.f32 %v949, %v717
    %v954 = vmul.f32 %v949, %v719
    %v955 = vmul.f32 %v949, %v721
    %v956 = vmul.f32 %v949, %v723
    %v957 = vadd.f32 %v893, %v950
    %v958 = vadd.f32 %v894, %v951
    %v959 = vadd.f32 %v895, %v952
    %v960 = vadd.f32 %v896, %v953
    %v961 = vadd.f32 %v897, %v954
    %v962 = vadd.f32 %v898, %v955
    %v963 = vadd.f32 %v899, %v956
    %s964 = sld [smem:[#allocation2 + $0x2f]]
    %v965 = vstv %s964
    %v966 = vmul.f32 %v965, %v711
    %v967 = vmul.f32 %v965, %v713
    %v968 = vmul.f32 %v965, %v715
    %v969 = vmul.f32 %v965, %v717
    %v970 = vmul.f32 %v965, %v719
    %v971 = vmul.f32 %v965, %v721
    %v972 = vmul.f32 %v965, %v723
    %v973 = vadd.f32 %v909, %v966
    %v974 = vadd.f32 %v910, %v967
    %v975 = vadd.f32 %v911, %v968
    %v976 = vadd.f32 %v912, %v969
    %v977 = vadd.f32 %v913, %v970
    %v978 = vadd.f32 %v914, %v971
    %v979 = vadd.f32 %v915, %v972
    %s980 = scalar_lea.vmem %s0, 16
    %v981 = vld [vmem:[%s980] ss:$2 sm:$0x7f]
    %s982 = scalar_lea.vmem %s980, 32
    %v983 = vld [vmem:[%s982] ss:$2 sm:$0x7f]
    %s984 = scalar_lea.vmem %s980, 64
    %v985 = vld [vmem:[%s984] ss:$2 sm:$0x7f]
    %s986 = scalar_lea.vmem %s980, 96
    %v987 = vld [vmem:[%s986] ss:$2 sm:$0x7f]
    %s988 = scalar_lea.vmem %s980, 128
    %v989 = vld [vmem:[%s988] ss:$2 sm:$0x7f]
    %s990 = scalar_lea.vmem %s980, 160
    %v991 = vld [vmem:[%s990] ss:$2 sm:$0x7f]
    %s992 = scalar_lea.vmem %s980, 192
    %v993 = vld [vmem:[%s992] ss:$2 sm:$0x7f]
    %s994 = scalar_lea.vmem %s980, 256
    %v995 = vld [vmem:[%s994] ss:$2 sm:$0x7f]
    %s996 = scalar_lea.vmem %s980, 288
    %v997 = vld [vmem:[%s996] ss:$2 sm:$0x7f]
    %s998 = scalar_lea.vmem %s980, 320
    %v999 = vld [vmem:[%s998] ss:$2 sm:$0x7f]
    %s1000 = scalar_lea.vmem %s980, 352
    %v1001 = vld [vmem:[%s1000] ss:$2 sm:$0x7f]
    %s1002 = scalar_lea.vmem %s980, 384
    %v1003 = vld [vmem:[%s1002] ss:$2 sm:$0x7f]
    %s1004 = scalar_lea.vmem %s980, 416
    %v1005 = vld [vmem:[%s1004] ss:$2 sm:$0x7f]
    %s1006 = scalar_lea.vmem %s980, 448
    %v1007 = vld [vmem:[%s1006] ss:$2 sm:$0x7f]
    %s1008 = scalar_lea.vmem %s980, 512
    %v1009 = vld [vmem:[%s1008] ss:$2 sm:$0x7f]
    %s1010 = scalar_lea.vmem %s980, 544
    %v1011 = vld [vmem:[%s1010] ss:$2 sm:$0x7f]
    %s1012 = scalar_lea.vmem %s980, 576
    %v1013 = vld [vmem:[%s1012] ss:$2 sm:$0x7f]
    %s1014 = scalar_lea.vmem %s980, 608
    %v1015 = vld [vmem:[%s1014] ss:$2 sm:$0x7f]
    %s1016 = scalar_lea.vmem %s980, 640
    %v1017 = vld [vmem:[%s1016] ss:$2 sm:$0x7f]
    %s1018 = scalar_lea.vmem %s980, 672
    %v1019 = vld [vmem:[%s1018] ss:$2 sm:$0x7f]
    %s1020 = scalar_lea.vmem %s980, 704
    %v1021 = vld [vmem:[%s1020] ss:$2 sm:$0x7f]
    %s1022 = scalar_lea.vmem %s980, 768
    %v1023 = vld [vmem:[%s1022] ss:$2 sm:$0x7f]
    %s1024 = scalar_lea.vmem %s980, 800
    %v1025 = vld [vmem:[%s1024] ss:$2 sm:$0x7f]
    %s1026 = scalar_lea.vmem %s980, 832
    %v1027 = vld [vmem:[%s1026] ss:$2 sm:$0x7f]
    %s1028 = scalar_lea.vmem %s980, 864
    %v1029 = vld [vmem:[%s1028] ss:$2 sm:$0x7f]
    %s1030 = scalar_lea.vmem %s980, 896
    %v1031 = vld [vmem:[%s1030] ss:$2 sm:$0x7f]
    %s1032 = scalar_lea.vmem %s980, 928
    %v1033 = vld [vmem:[%s1032] ss:$2 sm:$0x7f]
    %s1034 = scalar_lea.vmem %s980, 960
    %v1035 = vld [vmem:[%s1034] ss:$2 sm:$0x7f]
    %s1036 = sld [smem:[#allocation2 + $0x30]]
    %v1037 = vstv %s1036
    %v1038 = vmul.f32 %v1037, %v981
    %v1039 = vmul.f32 %v1037, %v983
    %v1040 = vmul.f32 %v1037, %v985
    %v1041 = vmul.f32 %v1037, %v987
    %v1042 = vmul.f32 %v1037, %v989
    %v1043 = vmul.f32 %v1037, %v991
    %v1044 = vmul.f32 %v1037, %v993
    %v1045 = vadd.f32 %v925, %v1038
    %v1046 = vadd.f32 %v926, %v1039
    %v1047 = vadd.f32 %v927, %v1040
    %v1048 = vadd.f32 %v928, %v1041
    %v1049 = vadd.f32 %v929, %v1042
    %v1050 = vadd.f32 %v930, %v1043
    %v1051 = vadd.f32 %v931, %v1044
    %s1052 = sld [smem:[#allocation2 + $0x31]]
    %v1053 = vstv %s1052
    %v1054 = vmul.f32 %v1053, %v981
    %v1055 = vmul.f32 %v1053, %v983
    %v1056 = vmul.f32 %v1053, %v985
    %v1057 = vmul.f32 %v1053, %v987
    %v1058 = vmul.f32 %v1053, %v989
    %v1059 = vmul.f32 %v1053, %v991
    %v1060 = vmul.f32 %v1053, %v993
    %v1061 = vadd.f32 %v941, %v1054
    %v1062 = vadd.f32 %v942, %v1055
    %v1063 = vadd.f32 %v943, %v1056
    %v1064 = vadd.f32 %v944, %v1057
    %v1065 = vadd.f32 %v945, %v1058
    %v1066 = vadd.f32 %v946, %v1059
    %v1067 = vadd.f32 %v947, %v1060
    %s1068 = sld [smem:[#allocation2 + $0x32]]
    %v1069 = vstv %s1068
    %v1070 = vmul.f32 %v1069, %v981
    %v1071 = vmul.f32 %v1069, %v983
    %v1072 = vmul.f32 %v1069, %v985
    %v1073 = vmul.f32 %v1069, %v987
    %v1074 = vmul.f32 %v1069, %v989
    %v1075 = vmul.f32 %v1069, %v991
    %v1076 = vmul.f32 %v1069, %v993
    %v1077 = vadd.f32 %v957, %v1070
    %v1078 = vadd.f32 %v958, %v1071
    %v1079 = vadd.f32 %v959, %v1072
    %v1080 = vadd.f32 %v960, %v1073
    %v1081 = vadd.f32 %v961, %v1074
    %v1082 = vadd.f32 %v962, %v1075
    %v1083 = vadd.f32 %v963, %v1076
    %s1084 = sld [smem:[#allocation2 + $0x33]]
    %v1085 = vstv %s1084
    %v1086 = vmul.f32 %v1085, %v981
    %v1087 = vmul.f32 %v1085, %v983
    %v1088 = vmul.f32 %v1085, %v985
    %v1089 = vmul.f32 %v1085, %v987
    %v1090 = vmul.f32 %v1085, %v989
    %v1091 = vmul.f32 %v1085, %v991
    %v1092 = vmul.f32 %v1085, %v993
    %v1093 = vadd.f32 %v973, %v1086
    %v1094 = vadd.f32 %v974, %v1087
    %v1095 = vadd.f32 %v975, %v1088
    %v1096 = vadd.f32 %v976, %v1089
    %v1097 = vadd.f32 %v977, %v1090
    %v1098 = vadd.f32 %v978, %v1091
    %v1099 = vadd.f32 %v979, %v1092
    %s1100 = sld [smem:[#allocation2 + $0x34]]
    %v1101 = vstv %s1100
    %v1102 = vmul.f32 %v1101, %v995
    %v1103 = vmul.f32 %v1101, %v997
    %v1104 = vmul.f32 %v1101, %v999
    %v1105 = vmul.f32 %v1101, %v1001
    %v1106 = vmul.f32 %v1101, %v1003
    %v1107 = vmul.f32 %v1101, %v1005
    %v1108 = vmul.f32 %v1101, %v1007
    %v1109 = vadd.f32 %v1045, %v1102
    %v1110 = vadd.f32 %v1046, %v1103
    %v1111 = vadd.f32 %v1047, %v1104
    %v1112 = vadd.f32 %v1048, %v1105
    %v1113 = vadd.f32 %v1049, %v1106
    %v1114 = vadd.f32 %v1050, %v1107
    %v1115 = vadd.f32 %v1051, %v1108
    %s1116 = sld [smem:[#allocation2 + $0x35]]
    %v1117 = vstv %s1116
    %v1118 = vmul.f32 %v1117, %v995
    %v1119 = vmul.f32 %v1117, %v997
    %v1120 = vmul.f32 %v1117, %v999
    %v1121 = vmul.f32 %v1117, %v1001
    %v1122 = vmul.f32 %v1117, %v1003
    %v1123 = vmul.f32 %v1117, %v1005
    %v1124 = vmul.f32 %v1117, %v1007
    %v1125 = vadd.f32 %v1061, %v1118
    %v1126 = vadd.f32 %v1062, %v1119
    %v1127 = vadd.f32 %v1063, %v1120
    %v1128 = vadd.f32 %v1064, %v1121
    %v1129 = vadd.f32 %v1065, %v1122
    %v1130 = vadd.f32 %v1066, %v1123
    %v1131 = vadd.f32 %v1067, %v1124
    %s1132 = sld [smem:[#allocation2 + $0x36]]
    %v1133 = vstv %s1132
    %v1134 = vmul.f32 %v1133, %v995
    %v1135 = vmul.f32 %v1133, %v997
    %v1136 = vmul.f32 %v1133, %v999
    %v1137 = vmul.f32 %v1133, %v1001
    %v1138 = vmul.f32 %v1133, %v1003
    %v1139 = vmul.f32 %v1133, %v1005
    %v1140 = vmul.f32 %v1133, %v1007
    %v1141 = vadd.f32 %v1077, %v1134
    %v1142 = vadd.f32 %v1078, %v1135
    %v1143 = vadd.f32 %v1079, %v1136
    %v1144 = vadd.f32 %v1080, %v1137
    %v1145 = vadd.f32 %v1081, %v1138
    %v1146 = vadd.f32 %v1082, %v1139
    %v1147 = vadd.f32 %v1083, %v1140
    %s1148 = sld [smem:[#allocation2 + $0x37]]
    %v1149 = vstv %s1148
    %v1150 = vmul.f32 %v1149, %v995
    %v1151 = vmul.f32 %v1149, %v997
    %v1152 = vmul.f32 %v1149, %v999
    %v1153 = vmul.f32 %v1149, %v1001
    %v1154 = vmul.f32 %v1149, %v1003
    %v1155 = vmul.f32 %v1149, %v1005
    %v1156 = vmul.f32 %v1149, %v1007
    %v1157 = vadd.f32 %v1093, %v1150
    %v1158 = vadd.f32 %v1094, %v1151
    %v1159 = vadd.f32 %v1095, %v1152
    %v1160 = vadd.f32 %v1096, %v1153
    %v1161 = vadd.f32 %v1097, %v1154
    %v1162 = vadd.f32 %v1098, %v1155
    %v1163 = vadd.f32 %v1099, %v1156
    %s1164 = sld [smem:[#allocation2 + $0x38]]
    %v1165 = vstv %s1164
    %v1166 = vmul.f32 %v1165, %v1009
    %v1167 = vmul.f32 %v1165, %v1011
    %v1168 = vmul.f32 %v1165, %v1013
    %v1169 = vmul.f32 %v1165, %v1015
    %v1170 = vmul.f32 %v1165, %v1017
    %v1171 = vmul.f32 %v1165, %v1019
    %v1172 = vmul.f32 %v1165, %v1021
    %v1173 = vadd.f32 %v1109, %v1166
    %v1174 = vadd.f32 %v1110, %v1167
    %v1175 = vadd.f32 %v1111, %v1168
    %v1176 = vadd.f32 %v1112, %v1169
    %v1177 = vadd.f32 %v1113, %v1170
    %v1178 = vadd.f32 %v1114, %v1171
    %v1179 = vadd.f32 %v1115, %v1172
    %s1180 = sld [smem:[#allocation2 + $0x39]]
    %v1181 = vstv %s1180
    %v1182 = vmul.f32 %v1181, %v1009
    %v1183 = vmul.f32 %v1181, %v1011
    %v1184 = vmul.f32 %v1181, %v1013
    %v1185 = vmul.f32 %v1181, %v1015
    %v1186 = vmul.f32 %v1181, %v1017
    %v1187 = vmul.f32 %v1181, %v1019
    %v1188 = vmul.f32 %v1181, %v1021
    %v1189 = vadd.f32 %v1125, %v1182
    %v1190 = vadd.f32 %v1126, %v1183
    %v1191 = vadd.f32 %v1127, %v1184
    %v1192 = vadd.f32 %v1128, %v1185
    %v1193 = vadd.f32 %v1129, %v1186
    %v1194 = vadd.f32 %v1130, %v1187
    %v1195 = vadd.f32 %v1131, %v1188
    %s1196 = sld [smem:[#allocation2 + $0x3a]]
    %v1197 = vstv %s1196
    %v1198 = vmul.f32 %v1197, %v1009
    %v1199 = vmul.f32 %v1197, %v1011
    %v1200 = vmul.f32 %v1197, %v1013
    %v1201 = vmul.f32 %v1197, %v1015
    %v1202 = vmul.f32 %v1197, %v1017
    %v1203 = vmul.f32 %v1197, %v1019
    %v1204 = vmul.f32 %v1197, %v1021
    %v1205 = vadd.f32 %v1141, %v1198
    %v1206 = vadd.f32 %v1142, %v1199
    %v1207 = vadd.f32 %v1143, %v1200
    %v1208 = vadd.f32 %v1144, %v1201
    %v1209 = vadd.f32 %v1145, %v1202
    %v1210 = vadd.f32 %v1146, %v1203
    %v1211 = vadd.f32 %v1147, %v1204
    %s1212 = sld [smem:[#allocation2 + $0x3b]]
    %v1213 = vstv %s1212
    %v1214 = vmul.f32 %v1213, %v1009
    %v1215 = vmul.f32 %v1213, %v1011
    %v1216 = vmul.f32 %v1213, %v1013
    %v1217 = vmul.f32 %v1213, %v1015
    %v1218 = vmul.f32 %v1213, %v1017
    %v1219 = vmul.f32 %v1213, %v1019
    %v1220 = vmul.f32 %v1213, %v1021
    %v1221 = vadd.f32 %v1157, %v1214
    %v1222 = vadd.f32 %v1158, %v1215
    %v1223 = vadd.f32 %v1159, %v1216
    %v1224 = vadd.f32 %v1160, %v1217
    %v1225 = vadd.f32 %v1161, %v1218
    %v1226 = vadd.f32 %v1162, %v1219
    %v1227 = vadd.f32 %v1163, %v1220
    %s1228 = sld [smem:[#allocation2 + $0x3c]]
    %v1229 = vstv %s1228
    %v1230 = vmul.f32 %v1229, %v1023
    %v1231 = vmul.f32 %v1229, %v1025
    %v1232 = vmul.f32 %v1229, %v1027
    %v1233 = vmul.f32 %v1229, %v1029
    %v1234 = vmul.f32 %v1229, %v1031
    %v1235 = vmul.f32 %v1229, %v1033
    %v1236 = vmul.f32 %v1229, %v1035
    %v1237 = vadd.f32 %v1173, %v1230
    %v1238 = vadd.f32 %v1174, %v1231
    %v1239 = vadd.f32 %v1175, %v1232
    %v1240 = vadd.f32 %v1176, %v1233
    %v1241 = vadd.f32 %v1177, %v1234
    %v1242 = vadd.f32 %v1178, %v1235
    %v1243 = vadd.f32 %v1179, %v1236
    %s1244 = sld [smem:[#allocation2 + $0x3d]]
    %v1245 = vstv %s1244
    %v1246 = vmul.f32 %v1245, %v1023
    %v1247 = vmul.f32 %v1245, %v1025
    %v1248 = vmul.f32 %v1245, %v1027
    %v1249 = vmul.f32 %v1245, %v1029
    %v1250 = vmul.f32 %v1245, %v1031
    %v1251 = vmul.f32 %v1245, %v1033
    %v1252 = vmul.f32 %v1245, %v1035
    %v1253 = vadd.f32 %v1189, %v1246
    %v1254 = vadd.f32 %v1190, %v1247
    %v1255 = vadd.f32 %v1191, %v1248
    %v1256 = vadd.f32 %v1192, %v1249
    %v1257 = vadd.f32 %v1193, %v1250
    %v1258 = vadd.f32 %v1194, %v1251
    %v1259 = vadd.f32 %v1195, %v1252
    %s1260 = sld [smem:[#allocation2 + $0x3e]]
    %v1261 = vstv %s1260
    %v1262 = vmul.f32 %v1261, %v1023
    %v1263 = vmul.f32 %v1261, %v1025
    %v1264 = vmul.f32 %v1261, %v1027
    %v1265 = vmul.f32 %v1261, %v1029
    %v1266 = vmul.f32 %v1261, %v1031
    %v1267 = vmul.f32 %v1261, %v1033
    %v1268 = vmul.f32 %v1261, %v1035
    %v1269 = vadd.f32 %v1205, %v1262
    %v1270 = vadd.f32 %v1206, %v1263
    %v1271 = vadd.f32 %v1207, %v1264
    %v1272 = vadd.f32 %v1208, %v1265
    %v1273 = vadd.f32 %v1209, %v1266
    %v1274 = vadd.f32 %v1210, %v1267
    %v1275 = vadd.f32 %v1211, %v1268
    %s1276 = sld [smem:[#allocation2 + $0x3f]]
    %v1277 = vstv %s1276
    %v1278 = vmul.f32 %v1277, %v1023
    %v1279 = vmul.f32 %v1277, %v1025
    %v1280 = vmul.f32 %v1277, %v1027
    %v1281 = vmul.f32 %v1277, %v1029
    %v1282 = vmul.f32 %v1277, %v1031
    %v1283 = vmul.f32 %v1277, %v1033
    %v1284 = vmul.f32 %v1277, %v1035
    %v1285 = vadd.f32 %v1221, %v1278
    %v1286 = vadd.f32 %v1222, %v1279
    %v1287 = vadd.f32 %v1223, %v1280
    %v1288 = vadd.f32 %v1224, %v1281
    %v1289 = vadd.f32 %v1225, %v1282
    %v1290 = vadd.f32 %v1226, %v1283
    %v1291 = vadd.f32 %v1227, %v1284
    %s1292 = scalar_lea.vmem %s980, 1
    %v1293 = vld [vmem:[%s1292] ss:$2 sm:$0x7f]
    %s1294 = scalar_lea.vmem %s980, 33
    %v1295 = vld [vmem:[%s1294] ss:$2 sm:$0x7f]
    %s1296 = scalar_lea.vmem %s980, 65
    %v1297 = vld [vmem:[%s1296] ss:$2 sm:$0x7f]
    %s1298 = scalar_lea.vmem %s980, 97
    %v1299 = vld [vmem:[%s1298] ss:$2 sm:$0x7f]
    %s1300 = scalar_lea.vmem %s980, 129
    %v1301 = vld [vmem:[%s1300] ss:$2 sm:$0x7f]
    %s1302 = scalar_lea.vmem %s980, 161
    %v1303 = vld [vmem:[%s1302] ss:$2 sm:$0x7f]
    %s1304 = scalar_lea.vmem %s980, 193
    %v1305 = vld [vmem:[%s1304] ss:$2 sm:$0x7f]
    %s1306 = scalar_lea.vmem %s980, 257
    %v1307 = vld [vmem:[%s1306] ss:$2 sm:$0x7f]
    %s1308 = scalar_lea.vmem %s980, 289
    %v1309 = vld [vmem:[%s1308] ss:$2 sm:$0x7f]
    %s1310 = scalar_lea.vmem %s980, 321
    %v1311 = vld [vmem:[%s1310] ss:$2 sm:$0x7f]
    %s1312 = scalar_lea.vmem %s980, 353
    %v1313 = vld [vmem:[%s1312] ss:$2 sm:$0x7f]
    %s1314 = scalar_lea.vmem %s980, 385
    %v1315 = vld [vmem:[%s1314] ss:$2 sm:$0x7f]
    %s1316 = scalar_lea.vmem %s980, 417
    %v1317 = vld [vmem:[%s1316] ss:$2 sm:$0x7f]
    %s1318 = scalar_lea.vmem %s980, 449
    %v1319 = vld [vmem:[%s1318] ss:$2 sm:$0x7f]
    %s1320 = scalar_lea.vmem %s980, 513
    %v1321 = vld [vmem:[%s1320] ss:$2 sm:$0x7f]
    %s1322 = scalar_lea.vmem %s980, 545
    %v1323 = vld [vmem:[%s1322] ss:$2 sm:$0x7f]
    %s1324 = scalar_lea.vmem %s980, 577
    %v1325 = vld [vmem:[%s1324] ss:$2 sm:$0x7f]
    %s1326 = scalar_lea.vmem %s980, 609
    %v1327 = vld [vmem:[%s1326] ss:$2 sm:$0x7f]
    %s1328 = scalar_lea.vmem %s980, 641
    %v1329 = vld [vmem:[%s1328] ss:$2 sm:$0x7f]
    %s1330 = scalar_lea.vmem %s980, 673
    %v1331 = vld [vmem:[%s1330] ss:$2 sm:$0x7f]
    %s1332 = scalar_lea.vmem %s980, 705
    %v1333 = vld [vmem:[%s1332] ss:$2 sm:$0x7f]
    %s1334 = scalar_lea.vmem %s980, 769
    %v1335 = vld [vmem:[%s1334] ss:$2 sm:$0x7f]
    %s1336 = scalar_lea.vmem %s980, 801
    %v1337 = vld [vmem:[%s1336] ss:$2 sm:$0x7f]
    %s1338 = scalar_lea.vmem %s980, 833
    %v1339 = vld [vmem:[%s1338] ss:$2 sm:$0x7f]
    %s1340 = scalar_lea.vmem %s980, 865
    %v1341 = vld [vmem:[%s1340] ss:$2 sm:$0x7f]
    %s1342 = scalar_lea.vmem %s980, 897
    %v1343 = vld [vmem:[%s1342] ss:$2 sm:$0x7f]
    %s1344 = scalar_lea.vmem %s980, 929
    %v1345 = vld [vmem:[%s1344] ss:$2 sm:$0x7f]
    %s1346 = scalar_lea.vmem %s980, 961
    %v1347 = vld [vmem:[%s1346] ss:$2 sm:$0x7f]
    %s1348 = sld [smem:[#allocation2 + $0x40]]
    %v1349 = vstv %s1348
    %v1350 = vmul.f32 %v1349, %v1293
    %v1351 = vmul.f32 %v1349, %v1295
    %v1352 = vmul.f32 %v1349, %v1297
    %v1353 = vmul.f32 %v1349, %v1299
    %v1354 = vmul.f32 %v1349, %v1301
    %v1355 = vmul.f32 %v1349, %v1303
    %v1356 = vmul.f32 %v1349, %v1305
    %v1357 = vadd.f32 %v1237, %v1350
    %v1358 = vadd.f32 %v1238, %v1351
    %v1359 = vadd.f32 %v1239, %v1352
    %v1360 = vadd.f32 %v1240, %v1353
    %v1361 = vadd.f32 %v1241, %v1354
    %v1362 = vadd.f32 %v1242, %v1355
    %v1363 = vadd.f32 %v1243, %v1356
    %s1364 = sld [smem:[#allocation2 + $0x41]]
    %v1365 = vstv %s1364
    %v1366 = vmul.f32 %v1365, %v1293
    %v1367 = vmul.f32 %v1365, %v1295
    %v1368 = vmul.f32 %v1365, %v1297
    %v1369 = vmul.f32 %v1365, %v1299
    %v1370 = vmul.f32 %v1365, %v1301
    %v1371 = vmul.f32 %v1365, %v1303
    %v1372 = vmul.f32 %v1365, %v1305
    %v1373 = vadd.f32 %v1253, %v1366
    %v1374 = vadd.f32 %v1254, %v1367
    %v1375 = vadd.f32 %v1255, %v1368
    %v1376 = vadd.f32 %v1256, %v1369
    %v1377 = vadd.f32 %v1257, %v1370
    %v1378 = vadd.f32 %v1258, %v1371
    %v1379 = vadd.f32 %v1259, %v1372
    %s1380 = sld [smem:[#allocation2 + $0x42]]
    %v1381 = vstv %s1380
    %v1382 = vmul.f32 %v1381, %v1293
    %v1383 = vmul.f32 %v1381, %v1295
    %v1384 = vmul.f32 %v1381, %v1297
    %v1385 = vmul.f32 %v1381, %v1299
    %v1386 = vmul.f32 %v1381, %v1301
    %v1387 = vmul.f32 %v1381, %v1303
    %v1388 = vmul.f32 %v1381, %v1305
    %v1389 = vadd.f32 %v1269, %v1382
    %v1390 = vadd.f32 %v1270, %v1383
    %v1391 = vadd.f32 %v1271, %v1384
    %v1392 = vadd.f32 %v1272, %v1385
    %v1393 = vadd.f32 %v1273, %v1386
    %v1394 = vadd.f32 %v1274, %v1387
    %v1395 = vadd.f32 %v1275, %v1388
    %s1396 = sld [smem:[#allocation2 + $0x43]]
    %v1397 = vstv %s1396
    %v1398 = vmul.f32 %v1397, %v1293
    %v1399 = vmul.f32 %v1397, %v1295
    %v1400 = vmul.f32 %v1397, %v1297
    %v1401 = vmul.f32 %v1397, %v1299
    %v1402 = vmul.f32 %v1397, %v1301
    %v1403 = vmul.f32 %v1397, %v1303
    %v1404 = vmul.f32 %v1397, %v1305
    %v1405 = vadd.f32 %v1285, %v1398
    %v1406 = vadd.f32 %v1286, %v1399
    %v1407 = vadd.f32 %v1287, %v1400
    %v1408 = vadd.f32 %v1288, %v1401
    %v1409 = vadd.f32 %v1289, %v1402
    %v1410 = vadd.f32 %v1290, %v1403
    %v1411 = vadd.f32 %v1291, %v1404
    %s1412 = sld [smem:[#allocation2 + $0x44]]
    %v1413 = vstv %s1412
    %v1414 = vmul.f32 %v1413, %v1307
    %v1415 = vmul.f32 %v1413, %v1309
    %v1416 = vmul.f32 %v1413, %v1311
    %v1417 = vmul.f32 %v1413, %v1313
    %v1418 = vmul.f32 %v1413, %v1315
    %v1419 = vmul.f32 %v1413, %v1317
    %v1420 = vmul.f32 %v1413, %v1319
    %v1421 = vadd.f32 %v1357, %v1414
    %v1422 = vadd.f32 %v1358, %v1415
    %v1423 = vadd.f32 %v1359, %v1416
    %v1424 = vadd.f32 %v1360, %v1417
    %v1425 = vadd.f32 %v1361, %v1418
    %v1426 = vadd.f32 %v1362, %v1419
    %v1427 = vadd.f32 %v1363, %v1420
    %s1428 = sld [smem:[#allocation2 + $0x45]]
    %v1429 = vstv %s1428
    %v1430 = vmul.f32 %v1429, %v1307
    %v1431 = vmul.f32 %v1429, %v1309
    %v1432 = vmul.f32 %v1429, %v1311
    %v1433 = vmul.f32 %v1429, %v1313
    %v1434 = vmul.f32 %v1429, %v1315
    %v1435 = vmul.f32 %v1429, %v1317
    %v1436 = vmul.f32 %v1429, %v1319
    %v1437 = vadd.f32 %v1373, %v1430
    %v1438 = vadd.f32 %v1374, %v1431
    %v1439 = vadd.f32 %v1375, %v1432
    %v1440 = vadd.f32 %v1376, %v1433
    %v1441 = vadd.f32 %v1377, %v1434
    %v1442 = vadd.f32 %v1378, %v1435
    %v1443 = vadd.f32 %v1379, %v1436
    %s1444 = sld [smem:[#allocation2 + $0x46]]
    %v1445 = vstv %s1444
    %v1446 = vmul.f32 %v1445, %v1307
    %v1447 = vmul.f32 %v1445, %v1309
    %v1448 = vmul.f32 %v1445, %v1311
    %v1449 = vmul.f32 %v1445, %v1313
    %v1450 = vmul.f32 %v1445, %v1315
    %v1451 = vmul.f32 %v1445, %v1317
    %v1452 = vmul.f32 %v1445, %v1319
    %v1453 = vadd.f32 %v1389, %v1446
    %v1454 = vadd.f32 %v1390, %v1447
    %v1455 = vadd.f32 %v1391, %v1448
    %v1456 = vadd.f32 %v1392, %v1449
    %v1457 = vadd.f32 %v1393, %v1450
    %v1458 = vadd.f32 %v1394, %v1451
    %v1459 = vadd.f32 %v1395, %v1452
    %s1460 = sld [smem:[#allocation2 + $0x47]]
    %v1461 = vstv %s1460
    %v1462 = vmul.f32 %v1461, %v1307
    %v1463 = vmul.f32 %v1461, %v1309
    %v1464 = vmul.f32 %v1461, %v1311
    %v1465 = vmul.f32 %v1461, %v1313
    %v1466 = vmul.f32 %v1461, %v1315
    %v1467 = vmul.f32 %v1461, %v1317
    %v1468 = vmul.f32 %v1461, %v1319
    %v1469 = vadd.f32 %v1405, %v1462
    %v1470 = vadd.f32 %v1406, %v1463
    %v1471 = vadd.f32 %v1407, %v1464
    %v1472 = vadd.f32 %v1408, %v1465
    %v1473 = vadd.f32 %v1409, %v1466
    %v1474 = vadd.f32 %v1410, %v1467
    %v1475 = vadd.f32 %v1411, %v1468
    %s1476 = sld [smem:[#allocation2 + $0x48]]
    %v1477 = vstv %s1476
    %v1478 = vmul.f32 %v1477, %v1321
    %v1479 = vmul.f32 %v1477, %v1323
    %v1480 = vmul.f32 %v1477, %v1325
    %v1481 = vmul.f32 %v1477, %v1327
    %v1482 = vmul.f32 %v1477, %v1329
    %v1483 = vmul.f32 %v1477, %v1331
    %v1484 = vmul.f32 %v1477, %v1333
    %v1485 = vadd.f32 %v1421, %v1478
    %v1486 = vadd.f32 %v1422, %v1479
    %v1487 = vadd.f32 %v1423, %v1480
    %v1488 = vadd.f32 %v1424, %v1481
    %v1489 = vadd.f32 %v1425, %v1482
    %v1490 = vadd.f32 %v1426, %v1483
    %v1491 = vadd.f32 %v1427, %v1484
    %s1492 = sld [smem:[#allocation2 + $0x49]]
    %v1493 = vstv %s1492
    %v1494 = vmul.f32 %v1493, %v1321
    %v1495 = vmul.f32 %v1493, %v1323
    %v1496 = vmul.f32 %v1493, %v1325
    %v1497 = vmul.f32 %v1493, %v1327
    %v1498 = vmul.f32 %v1493, %v1329
    %v1499 = vmul.f32 %v1493, %v1331
    %v1500 = vmul.f32 %v1493, %v1333
    %v1501 = vadd.f32 %v1437, %v1494
    %v1502 = vadd.f32 %v1438, %v1495
    %v1503 = vadd.f32 %v1439, %v1496
    %v1504 = vadd.f32 %v1440, %v1497
    %v1505 = vadd.f32 %v1441, %v1498
    %v1506 = vadd.f32 %v1442, %v1499
    %v1507 = vadd.f32 %v1443, %v1500
    %s1508 = sld [smem:[#allocation2 + $0x4a]]
    %v1509 = vstv %s1508
    %v1510 = vmul.f32 %v1509, %v1321
    %v1511 = vmul.f32 %v1509, %v1323
    %v1512 = vmul.f32 %v1509, %v1325
    %v1513 = vmul.f32 %v1509, %v1327
    %v1514 = vmul.f32 %v1509, %v1329
    %v1515 = vmul.f32 %v1509, %v1331
    %v1516 = vmul.f32 %v1509, %v1333
    %v1517 = vadd.f32 %v1453, %v1510
    %v1518 = vadd.f32 %v1454, %v1511
    %v1519 = vadd.f32 %v1455, %v1512
    %v1520 = vadd.f32 %v1456, %v1513
    %v1521 = vadd.f32 %v1457, %v1514
    %v1522 = vadd.f32 %v1458, %v1515
    %v1523 = vadd.f32 %v1459, %v1516
    %s1524 = sld [smem:[#allocation2 + $0x4b]]
    %v1525 = vstv %s1524
    %v1526 = vmul.f32 %v1525, %v1321
    %v1527 = vmul.f32 %v1525, %v1323
    %v1528 = vmul.f32 %v1525, %v1325
    %v1529 = vmul.f32 %v1525, %v1327
    %v1530 = vmul.f32 %v1525, %v1329
    %v1531 = vmul.f32 %v1525, %v1331
    %v1532 = vmul.f32 %v1525, %v1333
    %v1533 = vadd.f32 %v1469, %v1526
    %v1534 = vadd.f32 %v1470, %v1527
    %v1535 = vadd.f32 %v1471, %v1528
    %v1536 = vadd.f32 %v1472, %v1529
    %v1537 = vadd.f32 %v1473, %v1530
    %v1538 = vadd.f32 %v1474, %v1531
    %v1539 = vadd.f32 %v1475, %v1532
    %s1540 = sld [smem:[#allocation2 + $0x4c]]
    %v1541 = vstv %s1540
    %v1542 = vmul.f32 %v1541, %v1335
    %v1543 = vmul.f32 %v1541, %v1337
    %v1544 = vmul.f32 %v1541, %v1339
    %v1545 = vmul.f32 %v1541, %v1341
    %v1546 = vmul.f32 %v1541, %v1343
    %v1547 = vmul.f32 %v1541, %v1345
    %v1548 = vmul.f32 %v1541, %v1347
    %v1549 = vadd.f32 %v1485, %v1542
    %v1550 = vadd.f32 %v1486, %v1543
    %v1551 = vadd.f32 %v1487, %v1544
    %v1552 = vadd.f32 %v1488, %v1545
    %v1553 = vadd.f32 %v1489, %v1546
    %v1554 = vadd.f32 %v1490, %v1547
    %v1555 = vadd.f32 %v1491, %v1548
    %s1556 = sld [smem:[#allocation2 + $0x4d]]
    %v1557 = vstv %s1556
    %v1558 = vmul.f32 %v1557, %v1335
    %v1559 = vmul.f32 %v1557, %v1337
    %v1560 = vmul.f32 %v1557, %v1339
    %v1561 = vmul.f32 %v1557, %v1341
    %v1562 = vmul.f32 %v1557, %v1343
    %v1563 = vmul.f32 %v1557, %v1345
    %v1564 = vmul.f32 %v1557, %v1347
    %v1565 = vadd.f32 %v1501, %v1558
    %v1566 = vadd.f32 %v1502, %v1559
    %v1567 = vadd.f32 %v1503, %v1560
    %v1568 = vadd.f32 %v1504, %v1561
    %v1569 = vadd.f32 %v1505, %v1562
    %v1570 = vadd.f32 %v1506, %v1563
    %v1571 = vadd.f32 %v1507, %v1564
    %s1572 = sld [smem:[#allocation2 + $0x4e]]
    %v1573 = vstv %s1572
    %v1574 = vmul.f32 %v1573, %v1335
    %v1575 = vmul.f32 %v1573, %v1337
    %v1576 = vmul.f32 %v1573, %v1339
    %v1577 = vmul.f32 %v1573, %v1341
    %v1578 = vmul.f32 %v1573, %v1343
    %v1579 = vmul.f32 %v1573, %v1345
    %v1580 = vmul.f32 %v1573, %v1347
    %v1581 = vadd.f32 %v1517, %v1574
    %v1582 = vadd.f32 %v1518, %v1575
    %v1583 = vadd.f32 %v1519, %v1576
    %v1584 = vadd.f32 %v1520, %v1577
    %v1585 = vadd.f32 %v1521, %v1578
    %v1586 = vadd.f32 %v1522, %v1579
    %v1587 = vadd.f32 %v1523, %v1580
    %s1588 = sld [smem:[#allocation2 + $0x4f]]
    %v1589 = vstv %s1588
    %v1590 = vmul.f32 %v1589, %v1335
    %v1591 = vmul.f32 %v1589, %v1337
    %v1592 = vmul.f32 %v1589, %v1339
    %v1593 = vmul.f32 %v1589, %v1341
    %v1594 = vmul.f32 %v1589, %v1343
    %v1595 = vmul.f32 %v1589, %v1345
    %v1596 = vmul.f32 %v1589, %v1347
    %v1597 = vadd.f32 %v1533, %v1590
    %v1598 = vadd.f32 %v1534, %v1591
    %v1599 = vadd.f32 %v1535, %v1592
    %v1600 = vadd.f32 %v1536, %v1593
    %v1601 = vadd.f32 %v1537, %v1594
    %v1602 = vadd.f32 %v1538, %v1595
    %v1603 = vadd.f32 %v1539, %v1596
    %s1604 = scalar_lea.vmem %s980, 2
    %v1605 = vld [vmem:[%s1604] ss:$2 sm:$0x7f]
    %s1606 = scalar_lea.vmem %s980, 34
    %v1607 = vld [vmem:[%s1606] ss:$2 sm:$0x7f]
    %s1608 = scalar_lea.vmem %s980, 66
    %v1609 = vld [vmem:[%s1608] ss:$2 sm:$0x7f]
    %s1610 = scalar_lea.vmem %s980, 98
    %v1611 = vld [vmem:[%s1610] ss:$2 sm:$0x7f]
    %s1612 = scalar_lea.vmem %s980, 130
    %v1613 = vld [vmem:[%s1612] ss:$2 sm:$0x7f]
    %s1614 = scalar_lea.vmem %s980, 162
    %v1615 = vld [vmem:[%s1614] ss:$2 sm:$0x7f]
    %s1616 = scalar_lea.vmem %s980, 194
    %v1617 = vld [vmem:[%s1616] ss:$2 sm:$0x7f]
    %s1618 = scalar_lea.vmem %s980, 258
    %v1619 = vld [vmem:[%s1618] ss:$2 sm:$0x7f]
    %s1620 = scalar_lea.vmem %s980, 290
    %v1621 = vld [vmem:[%s1620] ss:$2 sm:$0x7f]
    %s1622 = scalar_lea.vmem %s980, 322
    %v1623 = vld [vmem:[%s1622] ss:$2 sm:$0x7f]
    %s1624 = scalar_lea.vmem %s980, 354
    %v1625 = vld [vmem:[%s1624] ss:$2 sm:$0x7f]
    %s1626 = scalar_lea.vmem %s980, 386
    %v1627 = vld [vmem:[%s1626] ss:$2 sm:$0x7f]
    %s1628 = scalar_lea.vmem %s980, 418
    %v1629 = vld [vmem:[%s1628] ss:$2 sm:$0x7f]
    %s1630 = scalar_lea.vmem %s980, 450
    %v1631 = vld [vmem:[%s1630] ss:$2 sm:$0x7f]
    %s1632 = scalar_lea.vmem %s980, 514
    %v1633 = vld [vmem:[%s1632] ss:$2 sm:$0x7f]
    %s1634 = scalar_lea.vmem %s980, 546
    %v1635 = vld [vmem:[%s1634] ss:$2 sm:$0x7f]
    %s1636 = scalar_lea.vmem %s980, 578
    %v1637 = vld [vmem:[%s1636] ss:$2 sm:$0x7f]
    %s1638 = scalar_lea.vmem %s980, 610
    %v1639 = vld [vmem:[%s1638] ss:$2 sm:$0x7f]
    %s1640 = scalar_lea.vmem %s980, 642
    %v1641 = vld [vmem:[%s1640] ss:$2 sm:$0x7f]
    %s1642 = scalar_lea.vmem %s980, 674
    %v1643 = vld [vmem:[%s1642] ss:$2 sm:$0x7f]
    %s1644 = scalar_lea.vmem %s980, 706
    %v1645 = vld [vmem:[%s1644] ss:$2 sm:$0x7f]
    %s1646 = scalar_lea.vmem %s980, 770
    %v1647 = vld [vmem:[%s1646] ss:$2 sm:$0x7f]
    %s1648 = scalar_lea.vmem %s980, 802
    %v1649 = vld [vmem:[%s1648] ss:$2 sm:$0x7f]
    %s1650 = scalar_lea.vmem %s980, 834
    %v1651 = vld [vmem:[%s1650] ss:$2 sm:$0x7f]
    %s1652 = scalar_lea.vmem %s980, 866
    %v1653 = vld [vmem:[%s1652] ss:$2 sm:$0x7f]
    %s1654 = scalar_lea.vmem %s980, 898
    %v1655 = vld [vmem:[%s1654] ss:$2 sm:$0x7f]
    %s1656 = scalar_lea.vmem %s980, 930
    %v1657 = vld [vmem:[%s1656] ss:$2 sm:$0x7f]
    %s1658 = scalar_lea.vmem %s980, 962
    %v1659 = vld [vmem:[%s1658] ss:$2 sm:$0x7f]
    %s1660 = sld [smem:[#allocation2 + $0x50]]
    %v1661 = vstv %s1660
    %v1662 = vmul.f32 %v1661, %v1605
    %v1663 = vmul.f32 %v1661, %v1607
    %v1664 = vmul.f32 %v1661, %v1609
    %v1665 = vmul.f32 %v1661, %v1611
    %v1666 = vmul.f32 %v1661, %v1613
    %v1667 = vmul.f32 %v1661, %v1615
    %v1668 = vmul.f32 %v1661, %v1617
    %v1669 = vadd.f32 %v1549, %v1662
    %v1670 = vadd.f32 %v1550, %v1663
    %v1671 = vadd.f32 %v1551, %v1664
    %v1672 = vadd.f32 %v1552, %v1665
    %v1673 = vadd.f32 %v1553, %v1666
    %v1674 = vadd.f32 %v1554, %v1667
    %v1675 = vadd.f32 %v1555, %v1668
    %s1676 = sld [smem:[#allocation2 + $0x51]]
    %v1677 = vstv %s1676
    %v1678 = vmul.f32 %v1677, %v1605
    %v1679 = vmul.f32 %v1677, %v1607
    %v1680 = vmul.f32 %v1677, %v1609
    %v1681 = vmul.f32 %v1677, %v1611
    %v1682 = vmul.f32 %v1677, %v1613
    %v1683 = vmul.f32 %v1677, %v1615
    %v1684 = vmul.f32 %v1677, %v1617
    %v1685 = vadd.f32 %v1565, %v1678
    %v1686 = vadd.f32 %v1566, %v1679
    %v1687 = vadd.f32 %v1567, %v1680
    %v1688 = vadd.f32 %v1568, %v1681
    %v1689 = vadd.f32 %v1569, %v1682
    %v1690 = vadd.f32 %v1570, %v1683
    %v1691 = vadd.f32 %v1571, %v1684
    %s1692 = sld [smem:[#allocation2 + $0x52]]
    %v1693 = vstv %s1692
    %v1694 = vmul.f32 %v1693, %v1605
    %v1695 = vmul.f32 %v1693, %v1607
    %v1696 = vmul.f32 %v1693, %v1609
    %v1697 = vmul.f32 %v1693, %v1611
    %v1698 = vmul.f32 %v1693, %v1613
    %v1699 = vmul.f32 %v1693, %v1615
    %v1700 = vmul.f32 %v1693, %v1617
    %v1701 = vadd.f32 %v1581, %v1694
    %v1702 = vadd.f32 %v1582, %v1695
    %v1703 = vadd.f32 %v1583, %v1696
    %v1704 = vadd.f32 %v1584, %v1697
    %v1705 = vadd.f32 %v1585, %v1698
    %v1706 = vadd.f32 %v1586, %v1699
    %v1707 = vadd.f32 %v1587, %v1700
    %s1708 = sld [smem:[#allocation2 + $0x53]]
    %v1709 = vstv %s1708
    %v1710 = vmul.f32 %v1709, %v1605
    %v1711 = vmul.f32 %v1709, %v1607
    %v1712 = vmul.f32 %v1709, %v1609
    %v1713 = vmul.f32 %v1709, %v1611
    %v1714 = vmul.f32 %v1709, %v1613
    %v1715 = vmul.f32 %v1709, %v1615
    %v1716 = vmul.f32 %v1709, %v1617
    %v1717 = vadd.f32 %v1597, %v1710
    %v1718 = vadd.f32 %v1598, %v1711
    %v1719 = vadd.f32 %v1599, %v1712
    %v1720 = vadd.f32 %v1600, %v1713
    %v1721 = vadd.f32 %v1601, %v1714
    %v1722 = vadd.f32 %v1602, %v1715
    %v1723 = vadd.f32 %v1603, %v1716
    %s1724 = sld [smem:[#allocation2 + $0x54]]
    %v1725 = vstv %s1724
    %v1726 = vmul.f32 %v1725, %v1619
    %v1727 = vmul.f32 %v1725, %v1621
    %v1728 = vmul.f32 %v1725, %v1623
    %v1729 = vmul.f32 %v1725, %v1625
    %v1730 = vmul.f32 %v1725, %v1627
    %v1731 = vmul.f32 %v1725, %v1629
    %v1732 = vmul.f32 %v1725, %v1631
    %v1733 = vadd.f32 %v1669, %v1726
    %v1734 = vadd.f32 %v1670, %v1727
    %v1735 = vadd.f32 %v1671, %v1728
    %v1736 = vadd.f32 %v1672, %v1729
    %v1737 = vadd.f32 %v1673, %v1730
    %v1738 = vadd.f32 %v1674, %v1731
    %v1739 = vadd.f32 %v1675, %v1732
    %s1740 = sld [smem:[#allocation2 + $0x55]]
    %v1741 = vstv %s1740
    %v1742 = vmul.f32 %v1741, %v1619
    %v1743 = vmul.f32 %v1741, %v1621
    %v1744 = vmul.f32 %v1741, %v1623
    %v1745 = vmul.f32 %v1741, %v1625
    %v1746 = vmul.f32 %v1741, %v1627
    %v1747 = vmul.f32 %v1741, %v1629
    %v1748 = vmul.f32 %v1741, %v1631
    %v1749 = vadd.f32 %v1685, %v1742
    %v1750 = vadd.f32 %v1686, %v1743
    %v1751 = vadd.f32 %v1687, %v1744
    %v1752 = vadd.f32 %v1688, %v1745
    %v1753 = vadd.f32 %v1689, %v1746
    %v1754 = vadd.f32 %v1690, %v1747
    %v1755 = vadd.f32 %v1691, %v1748
    %s1756 = sld [smem:[#allocation2 + $0x56]]
    %v1757 = vstv %s1756
    %v1758 = vmul.f32 %v1757, %v1619
    %v1759 = vmul.f32 %v1757, %v1621
    %v1760 = vmul.f32 %v1757, %v1623
    %v1761 = vmul.f32 %v1757, %v1625
    %v1762 = vmul.f32 %v1757, %v1627
    %v1763 = vmul.f32 %v1757, %v1629
    %v1764 = vmul.f32 %v1757, %v1631
    %v1765 = vadd.f32 %v1701, %v1758
    %v1766 = vadd.f32 %v1702, %v1759
    %v1767 = vadd.f32 %v1703, %v1760
    %v1768 = vadd.f32 %v1704, %v1761
    %v1769 = vadd.f32 %v1705, %v1762
    %v1770 = vadd.f32 %v1706, %v1763
    %v1771 = vadd.f32 %v1707, %v1764
    %s1772 = sld [smem:[#allocation2 + $0x57]]
    %v1773 = vstv %s1772
    %v1774 = vmul.f32 %v1773, %v1619
    %v1775 = vmul.f32 %v1773, %v1621
    %v1776 = vmul.f32 %v1773, %v1623
    %v1777 = vmul.f32 %v1773, %v1625
    %v1778 = vmul.f32 %v1773, %v1627
    %v1779 = vmul.f32 %v1773, %v1629
    %v1780 = vmul.f32 %v1773, %v1631
    %v1781 = vadd.f32 %v1717, %v1774
    %v1782 = vadd.f32 %v1718, %v1775
    %v1783 = vadd.f32 %v1719, %v1776
    %v1784 = vadd.f32 %v1720, %v1777
    %v1785 = vadd.f32 %v1721, %v1778
    %v1786 = vadd.f32 %v1722, %v1779
    %v1787 = vadd.f32 %v1723, %v1780
    %s1788 = sld [smem:[#allocation2 + $0x58]]
    %v1789 = vstv %s1788
    %v1790 = vmul.f32 %v1789, %v1633
    %v1791 = vmul.f32 %v1789, %v1635
    %v1792 = vmul.f32 %v1789, %v1637
    %v1793 = vmul.f32 %v1789, %v1639
    %v1794 = vmul.f32 %v1789, %v1641
    %v1795 = vmul.f32 %v1789, %v1643
    %v1796 = vmul.f32 %v1789, %v1645
    %v1797 = vadd.f32 %v1733, %v1790
    %v1798 = vadd.f32 %v1734, %v1791
    %v1799 = vadd.f32 %v1735, %v1792
    %v1800 = vadd.f32 %v1736, %v1793
    %v1801 = vadd.f32 %v1737, %v1794
    %v1802 = vadd.f32 %v1738, %v1795
    %v1803 = vadd.f32 %v1739, %v1796
    %s1804 = sld [smem:[#allocation2 + $0x59]]
    %v1805 = vstv %s1804
    %v1806 = vmul.f32 %v1805, %v1633
    %v1807 = vmul.f32 %v1805, %v1635
    %v1808 = vmul.f32 %v1805, %v1637
    %v1809 = vmul.f32 %v1805, %v1639
    %v1810 = vmul.f32 %v1805, %v1641
    %v1811 = vmul.f32 %v1805, %v1643
    %v1812 = vmul.f32 %v1805, %v1645
    %v1813 = vadd.f32 %v1749, %v1806
    %v1814 = vadd.f32 %v1750, %v1807
    %v1815 = vadd.f32 %v1751, %v1808
    %v1816 = vadd.f32 %v1752, %v1809
    %v1817 = vadd.f32 %v1753, %v1810
    %v1818 = vadd.f32 %v1754, %v1811
    %v1819 = vadd.f32 %v1755, %v1812
    %s1820 = sld [smem:[#allocation2 + $0x5a]]
    %v1821 = vstv %s1820
    %v1822 = vmul.f32 %v1821, %v1633
    %v1823 = vmul.f32 %v1821, %v1635
    %v1824 = vmul.f32 %v1821, %v1637
    %v1825 = vmul.f32 %v1821, %v1639
    %v1826 = vmul.f32 %v1821, %v1641
    %v1827 = vmul.f32 %v1821, %v1643
    %v1828 = vmul.f32 %v1821, %v1645
    %v1829 = vadd.f32 %v1765, %v1822
    %v1830 = vadd.f32 %v1766, %v1823
    %v1831 = vadd.f32 %v1767, %v1824
    %v1832 = vadd.f32 %v1768, %v1825
    %v1833 = vadd.f32 %v1769, %v1826
    %v1834 = vadd.f32 %v1770, %v1827
    %v1835 = vadd.f32 %v1771, %v1828
    %s1836 = sld [smem:[#allocation2 + $0x5b]]
    %v1837 = vstv %s1836
    %v1838 = vmul.f32 %v1837, %v1633
    %v1839 = vmul.f32 %v1837, %v1635
    %v1840 = vmul.f32 %v1837, %v1637
    %v1841 = vmul.f32 %v1837, %v1639
    %v1842 = vmul.f32 %v1837, %v1641
    %v1843 = vmul.f32 %v1837, %v1643
    %v1844 = vmul.f32 %v1837, %v1645
    %v1845 = vadd.f32 %v1781, %v1838
    %v1846 = vadd.f32 %v1782, %v1839
    %v1847 = vadd.f32 %v1783, %v1840
    %v1848 = vadd.f32 %v1784, %v1841
    %v1849 = vadd.f32 %v1785, %v1842
    %v1850 = vadd.f32 %v1786, %v1843
    %v1851 = vadd.f32 %v1787, %v1844
    %s1852 = sld [smem:[#allocation2 + $0x5c]]
    %v1853 = vstv %s1852
    %v1854 = vmul.f32 %v1853, %v1647
    %v1855 = vmul.f32 %v1853, %v1649
    %v1856 = vmul.f32 %v1853, %v1651
    %v1857 = vmul.f32 %v1853, %v1653
    %v1858 = vmul.f32 %v1853, %v1655
    %v1859 = vmul.f32 %v1853, %v1657
    %v1860 = vmul.f32 %v1853, %v1659
    %v1861 = vadd.f32 %v1797, %v1854
    %v1862 = vadd.f32 %v1798, %v1855
    %v1863 = vadd.f32 %v1799, %v1856
    %v1864 = vadd.f32 %v1800, %v1857
    %v1865 = vadd.f32 %v1801, %v1858
    %v1866 = vadd.f32 %v1802, %v1859
    %v1867 = vadd.f32 %v1803, %v1860
    %s1868 = sld [smem:[#allocation2 + $0x5d]]
    %v1869 = vstv %s1868
    %v1870 = vmul.f32 %v1869, %v1647
    %v1871 = vmul.f32 %v1869, %v1649
    %v1872 = vmul.f32 %v1869, %v1651
    %v1873 = vmul.f32 %v1869, %v1653
    %v1874 = vmul.f32 %v1869, %v1655
    %v1875 = vmul.f32 %v1869, %v1657
    %v1876 = vmul.f32 %v1869, %v1659
    %v1877 = vadd.f32 %v1813, %v1870
    %v1878 = vadd.f32 %v1814, %v1871
    %v1879 = vadd.f32 %v1815, %v1872
    %v1880 = vadd.f32 %v1816, %v1873
    %v1881 = vadd.f32 %v1817, %v1874
    %v1882 = vadd.f32 %v1818, %v1875
    %v1883 = vadd.f32 %v1819, %v1876
    %s1884 = sld [smem:[#allocation2 + $0x5e]]
    %v1885 = vstv %s1884
    %v1886 = vmul.f32 %v1885, %v1647
    %v1887 = vmul.f32 %v1885, %v1649
    %v1888 = vmul.f32 %v1885, %v1651
    %v1889 = vmul.f32 %v1885, %v1653
    %v1890 = vmul.f32 %v1885, %v1655
    %v1891 = vmul.f32 %v1885, %v1657
    %v1892 = vmul.f32 %v1885, %v1659
    %v1893 = vadd.f32 %v1829, %v1886
    %v1894 = vadd.f32 %v1830, %v1887
    %v1895 = vadd.f32 %v1831, %v1888
    %v1896 = vadd.f32 %v1832, %v1889
    %v1897 = vadd.f32 %v1833, %v1890
    %v1898 = vadd.f32 %v1834, %v1891
    %v1899 = vadd.f32 %v1835, %v1892
    %s1900 = sld [smem:[#allocation2 + $0x5f]]
    %v1901 = vstv %s1900
    %v1902 = vmul.f32 %v1901, %v1647
    %v1903 = vmul.f32 %v1901, %v1649
    %v1904 = vmul.f32 %v1901, %v1651
    %v1905 = vmul.f32 %v1901, %v1653
    %v1906 = vmul.f32 %v1901, %v1655
    %v1907 = vmul.f32 %v1901, %v1657
    %v1908 = vmul.f32 %v1901, %v1659
    %v1909 = vadd.f32 %v1845, %v1902
    %v1910 = vadd.f32 %v1846, %v1903
    %v1911 = vadd.f32 %v1847, %v1904
    %v1912 = vadd.f32 %v1848, %v1905
    %v1913 = vadd.f32 %v1849, %v1906
    %v1914 = vadd.f32 %v1850, %v1907
    %v1915 = vadd.f32 %v1851, %v1908
    %s1916 = scalar_lea.vmem %s0, 32
    %v1917 = vld [vmem:[%s1916] ss:$2 sm:$0x7f]
    %s1918 = scalar_lea.vmem %s1916, 32
    %v1919 = vld [vmem:[%s1918] ss:$2 sm:$0x7f]
    %s1920 = scalar_lea.vmem %s1916, 64
    %v1921 = vld [vmem:[%s1920] ss:$2 sm:$0x7f]
    %s1922 = scalar_lea.vmem %s1916, 96
    %v1923 = vld [vmem:[%s1922] ss:$2 sm:$0x7f]
    %s1924 = scalar_lea.vmem %s1916, 128
    %v1925 = vld [vmem:[%s1924] ss:$2 sm:$0x7f]
    %s1926 = scalar_lea.vmem %s1916, 160
    %v1927 = vld [vmem:[%s1926] ss:$2 sm:$0x7f]
    %s1928 = scalar_lea.vmem %s1916, 192
    %v1929 = vld [vmem:[%s1928] ss:$2 sm:$0x7f]
    %s1930 = scalar_lea.vmem %s1916, 256
    %v1931 = vld [vmem:[%s1930] ss:$2 sm:$0x7f]
    %s1932 = scalar_lea.vmem %s1916, 288
    %v1933 = vld [vmem:[%s1932] ss:$2 sm:$0x7f]
    %s1934 = scalar_lea.vmem %s1916, 320
    %v1935 = vld [vmem:[%s1934] ss:$2 sm:$0x7f]
    %s1936 = scalar_lea.vmem %s1916, 352
    %v1937 = vld [vmem:[%s1936] ss:$2 sm:$0x7f]
    %s1938 = scalar_lea.vmem %s1916, 384
    %v1939 = vld [vmem:[%s1938] ss:$2 sm:$0x7f]
    %s1940 = scalar_lea.vmem %s1916, 416
    %v1941 = vld [vmem:[%s1940] ss:$2 sm:$0x7f]
    %s1942 = scalar_lea.vmem %s1916, 448
    %v1943 = vld [vmem:[%s1942] ss:$2 sm:$0x7f]
    %s1944 = scalar_lea.vmem %s1916, 512
    %v1945 = vld [vmem:[%s1944] ss:$2 sm:$0x7f]
    %s1946 = scalar_lea.vmem %s1916, 544
    %v1947 = vld [vmem:[%s1946] ss:$2 sm:$0x7f]
    %s1948 = scalar_lea.vmem %s1916, 576
    %v1949 = vld [vmem:[%s1948] ss:$2 sm:$0x7f]
    %s1950 = scalar_lea.vmem %s1916, 608
    %v1951 = vld [vmem:[%s1950] ss:$2 sm:$0x7f]
    %s1952 = scalar_lea.vmem %s1916, 640
    %v1953 = vld [vmem:[%s1952] ss:$2 sm:$0x7f]
    %s1954 = scalar_lea.vmem %s1916, 672
    %v1955 = vld [vmem:[%s1954] ss:$2 sm:$0x7f]
    %s1956 = scalar_lea.vmem %s1916, 704
    %v1957 = vld [vmem:[%s1956] ss:$2 sm:$0x7f]
    %s1958 = scalar_lea.vmem %s1916, 768
    %v1959 = vld [vmem:[%s1958] ss:$2 sm:$0x7f]
    %s1960 = scalar_lea.vmem %s1916, 800
    %v1961 = vld [vmem:[%s1960] ss:$2 sm:$0x7f]
    %s1962 = scalar_lea.vmem %s1916, 832
    %v1963 = vld [vmem:[%s1962] ss:$2 sm:$0x7f]
    %s1964 = scalar_lea.vmem %s1916, 864
    %v1965 = vld [vmem:[%s1964] ss:$2 sm:$0x7f]
    %s1966 = scalar_lea.vmem %s1916, 896
    %v1967 = vld [vmem:[%s1966] ss:$2 sm:$0x7f]
    %s1968 = scalar_lea.vmem %s1916, 928
    %v1969 = vld [vmem:[%s1968] ss:$2 sm:$0x7f]
    %s1970 = scalar_lea.vmem %s1916, 960
    %v1971 = vld [vmem:[%s1970] ss:$2 sm:$0x7f]
    %s1972 = sld [smem:[#allocation2 + $0x60]]
    %v1973 = vstv %s1972
    %v1974 = vmul.f32 %v1973, %v1917
    %v1975 = vmul.f32 %v1973, %v1919
    %v1976 = vmul.f32 %v1973, %v1921
    %v1977 = vmul.f32 %v1973, %v1923
    %v1978 = vmul.f32 %v1973, %v1925
    %v1979 = vmul.f32 %v1973, %v1927
    %v1980 = vmul.f32 %v1973, %v1929
    %v1981 = vadd.f32 %v1861, %v1974
    %v1982 = vadd.f32 %v1862, %v1975
    %v1983 = vadd.f32 %v1863, %v1976
    %v1984 = vadd.f32 %v1864, %v1977
    %v1985 = vadd.f32 %v1865, %v1978
    %v1986 = vadd.f32 %v1866, %v1979
    %v1987 = vadd.f32 %v1867, %v1980
    %s1988 = sld [smem:[#allocation2 + $0x61]]
    %v1989 = vstv %s1988
    %v1990 = vmul.f32 %v1989, %v1917
    %v1991 = vmul.f32 %v1989, %v1919
    %v1992 = vmul.f32 %v1989, %v1921
    %v1993 = vmul.f32 %v1989, %v1923
    %v1994 = vmul.f32 %v1989, %v1925
    %v1995 = vmul.f32 %v1989, %v1927
    %v1996 = vmul.f32 %v1989, %v1929
    %v1997 = vadd.f32 %v1877, %v1990
    %v1998 = vadd.f32 %v1878, %v1991
    %v1999 = vadd.f32 %v1879, %v1992
    %v2000 = vadd.f32 %v1880, %v1993
    %v2001 = vadd.f32 %v1881, %v1994
    %v2002 = vadd.f32 %v1882, %v1995
    %v2003 = vadd.f32 %v1883, %v1996
    %s2004 = sld [smem:[#allocation2 + $0x62]]
    %v2005 = vstv %s2004
    %v2006 = vmul.f32 %v2005, %v1917
    %v2007 = vmul.f32 %v2005, %v1919
    %v2008 = vmul.f32 %v2005, %v1921
    %v2009 = vmul.f32 %v2005, %v1923
    %v2010 = vmul.f32 %v2005, %v1925
    %v2011 = vmul.f32 %v2005, %v1927
    %v2012 = vmul.f32 %v2005, %v1929
    %v2013 = vadd.f32 %v1893, %v2006
    %v2014 = vadd.f32 %v1894, %v2007
    %v2015 = vadd.f32 %v1895, %v2008
    %v2016 = vadd.f32 %v1896, %v2009
    %v2017 = vadd.f32 %v1897, %v2010
    %v2018 = vadd.f32 %v1898, %v2011
    %v2019 = vadd.f32 %v1899, %v2012
    %s2020 = sld [smem:[#allocation2 + $0x63]]
    %v2021 = vstv %s2020
    %v2022 = vmul.f32 %v2021, %v1917
    %v2023 = vmul.f32 %v2021, %v1919
    %v2024 = vmul.f32 %v2021, %v1921
    %v2025 = vmul.f32 %v2021, %v1923
    %v2026 = vmul.f32 %v2021, %v1925
    %v2027 = vmul.f32 %v2021, %v1927
    %v2028 = vmul.f32 %v2021, %v1929
    %v2029 = vadd.f32 %v1909, %v2022
    %v2030 = vadd.f32 %v1910, %v2023
    %v2031 = vadd.f32 %v1911, %v2024
    %v2032 = vadd.f32 %v1912, %v2025
    %v2033 = vadd.f32 %v1913, %v2026
    %v2034 = vadd.f32 %v1914, %v2027
    %v2035 = vadd.f32 %v1915, %v2028
    %s2036 = sld [smem:[#allocation2 + $0x64]]
    %v2037 = vstv %s2036
    %v2038 = vmul.f32 %v2037, %v1931
    %v2039 = vmul.f32 %v2037, %v1933
    %v2040 = vmul.f32 %v2037, %v1935
    %v2041 = vmul.f32 %v2037, %v1937
    %v2042 = vmul.f32 %v2037, %v1939
    %v2043 = vmul.f32 %v2037, %v1941
    %v2044 = vmul.f32 %v2037, %v1943
    %v2045 = vadd.f32 %v1981, %v2038
    %v2046 = vadd.f32 %v1982, %v2039
    %v2047 = vadd.f32 %v1983, %v2040
    %v2048 = vadd.f32 %v1984, %v2041
    %v2049 = vadd.f32 %v1985, %v2042
    %v2050 = vadd.f32 %v1986, %v2043
    %v2051 = vadd.f32 %v1987, %v2044
    %s2052 = sld [smem:[#allocation2 + $0x65]]
    %v2053 = vstv %s2052
    %v2054 = vmul.f32 %v2053, %v1931
    %v2055 = vmul.f32 %v2053, %v1933
    %v2056 = vmul.f32 %v2053, %v1935
    %v2057 = vmul.f32 %v2053, %v1937
    %v2058 = vmul.f32 %v2053, %v1939
    %v2059 = vmul.f32 %v2053, %v1941
    %v2060 = vmul.f32 %v2053, %v1943
    %v2061 = vadd.f32 %v1997, %v2054
    %v2062 = vadd.f32 %v1998, %v2055
    %v2063 = vadd.f32 %v1999, %v2056
    %v2064 = vadd.f32 %v2000, %v2057
    %v2065 = vadd.f32 %v2001, %v2058
    %v2066 = vadd.f32 %v2002, %v2059
    %v2067 = vadd.f32 %v2003, %v2060
    %s2068 = sld [smem:[#allocation2 + $0x66]]
    %v2069 = vstv %s2068
    %v2070 = vmul.f32 %v2069, %v1931
    %v2071 = vmul.f32 %v2069, %v1933
    %v2072 = vmul.f32 %v2069, %v1935
    %v2073 = vmul.f32 %v2069, %v1937
    %v2074 = vmul.f32 %v2069, %v1939
    %v2075 = vmul.f32 %v2069, %v1941
    %v2076 = vmul.f32 %v2069, %v1943
    %v2077 = vadd.f32 %v2013, %v2070
    %v2078 = vadd.f32 %v2014, %v2071
    %v2079 = vadd.f32 %v2015, %v2072
    %v2080 = vadd.f32 %v2016, %v2073
    %v2081 = vadd.f32 %v2017, %v2074
    %v2082 = vadd.f32 %v2018, %v2075
    %v2083 = vadd.f32 %v2019, %v2076
    %s2084 = sld [smem:[#allocation2 + $0x67]]
    %v2085 = vstv %s2084
    %v2086 = vmul.f32 %v2085, %v1931
    %v2087 = vmul.f32 %v2085, %v1933
    %v2088 = vmul.f32 %v2085, %v1935
    %v2089 = vmul.f32 %v2085, %v1937
    %v2090 = vmul.f32 %v2085, %v1939
    %v2091 = vmul.f32 %v2085, %v1941
    %v2092 = vmul.f32 %v2085, %v1943
    %v2093 = vadd.f32 %v2029, %v2086
    %v2094 = vadd.f32 %v2030, %v2087
    %v2095 = vadd.f32 %v2031, %v2088
    %v2096 = vadd.f32 %v2032, %v2089
    %v2097 = vadd.f32 %v2033, %v2090
    %v2098 = vadd.f32 %v2034, %v2091
    %v2099 = vadd.f32 %v2035, %v2092
    %s2100 = sld [smem:[#allocation2 + $0x68]]
    %v2101 = vstv %s2100
    %v2102 = vmul.f32 %v2101, %v1945
    %v2103 = vmul.f32 %v2101, %v1947
    %v2104 = vmul.f32 %v2101, %v1949
    %v2105 = vmul.f32 %v2101, %v1951
    %v2106 = vmul.f32 %v2101, %v1953
    %v2107 = vmul.f32 %v2101, %v1955
    %v2108 = vmul.f32 %v2101, %v1957
    %v2109 = vadd.f32 %v2045, %v2102
    %v2110 = vadd.f32 %v2046, %v2103
    %v2111 = vadd.f32 %v2047, %v2104
    %v2112 = vadd.f32 %v2048, %v2105
    %v2113 = vadd.f32 %v2049, %v2106
    %v2114 = vadd.f32 %v2050, %v2107
    %v2115 = vadd.f32 %v2051, %v2108
    %s2116 = sld [smem:[#allocation2 + $0x69]]
    %v2117 = vstv %s2116
    %v2118 = vmul.f32 %v2117, %v1945
    %v2119 = vmul.f32 %v2117, %v1947
    %v2120 = vmul.f32 %v2117, %v1949
    %v2121 = vmul.f32 %v2117, %v1951
    %v2122 = vmul.f32 %v2117, %v1953
    %v2123 = vmul.f32 %v2117, %v1955
    %v2124 = vmul.f32 %v2117, %v1957
    %v2125 = vadd.f32 %v2061, %v2118
    %v2126 = vadd.f32 %v2062, %v2119
    %v2127 = vadd.f32 %v2063, %v2120
    %v2128 = vadd.f32 %v2064, %v2121
    %v2129 = vadd.f32 %v2065, %v2122
    %v2130 = vadd.f32 %v2066, %v2123
    %v2131 = vadd.f32 %v2067, %v2124
    %s2132 = sld [smem:[#allocation2 + $0x6a]]
    %v2133 = vstv %s2132
    %v2134 = vmul.f32 %v2133, %v1945
    %v2135 = vmul.f32 %v2133, %v1947
    %v2136 = vmul.f32 %v2133, %v1949
    %v2137 = vmul.f32 %v2133, %v1951
    %v2138 = vmul.f32 %v2133, %v1953
    %v2139 = vmul.f32 %v2133, %v1955
    %v2140 = vmul.f32 %v2133, %v1957
    %v2141 = vadd.f32 %v2077, %v2134
    %v2142 = vadd.f32 %v2078, %v2135
    %v2143 = vadd.f32 %v2079, %v2136
    %v2144 = vadd.f32 %v2080, %v2137
    %v2145 = vadd.f32 %v2081, %v2138
    %v2146 = vadd.f32 %v2082, %v2139
    %v2147 = vadd.f32 %v2083, %v2140
    %s2148 = sld [smem:[#allocation2 + $0x6b]]
    %v2149 = vstv %s2148
    %v2150 = vmul.f32 %v2149, %v1945
    %v2151 = vmul.f32 %v2149, %v1947
    %v2152 = vmul.f32 %v2149, %v1949
    %v2153 = vmul.f32 %v2149, %v1951
    %v2154 = vmul.f32 %v2149, %v1953
    %v2155 = vmul.f32 %v2149, %v1955
    %v2156 = vmul.f32 %v2149, %v1957
    %v2157 = vadd.f32 %v2093, %v2150
    %v2158 = vadd.f32 %v2094, %v2151
    %v2159 = vadd.f32 %v2095, %v2152
    %v2160 = vadd.f32 %v2096, %v2153
    %v2161 = vadd.f32 %v2097, %v2154
    %v2162 = vadd.f32 %v2098, %v2155
    %v2163 = vadd.f32 %v2099, %v2156
    %s2164 = sld [smem:[#allocation2 + $0x6c]]
    %v2165 = vstv %s2164
    %v2166 = vmul.f32 %v2165, %v1959
    %v2167 = vmul.f32 %v2165, %v1961
    %v2168 = vmul.f32 %v2165, %v1963
    %v2169 = vmul.f32 %v2165, %v1965
    %v2170 = vmul.f32 %v2165, %v1967
    %v2171 = vmul.f32 %v2165, %v1969
    %v2172 = vmul.f32 %v2165, %v1971
    %v2173 = vadd.f32 %v2109, %v2166
    %v2174 = vadd.f32 %v2110, %v2167
    %v2175 = vadd.f32 %v2111, %v2168
    %v2176 = vadd.f32 %v2112, %v2169
    %v2177 = vadd.f32 %v2113, %v2170
    %v2178 = vadd.f32 %v2114, %v2171
    %v2179 = vadd.f32 %v2115, %v2172
    %s2180 = sld [smem:[#allocation2 + $0x6d]]
    %v2181 = vstv %s2180
    %v2182 = vmul.f32 %v2181, %v1959
    %v2183 = vmul.f32 %v2181, %v1961
    %v2184 = vmul.f32 %v2181, %v1963
    %v2185 = vmul.f32 %v2181, %v1965
    %v2186 = vmul.f32 %v2181, %v1967
    %v2187 = vmul.f32 %v2181, %v1969
    %v2188 = vmul.f32 %v2181, %v1971
    %v2189 = vadd.f32 %v2125, %v2182
    %v2190 = vadd.f32 %v2126, %v2183
    %v2191 = vadd.f32 %v2127, %v2184
    %v2192 = vadd.f32 %v2128, %v2185
    %v2193 = vadd.f32 %v2129, %v2186
    %v2194 = vadd.f32 %v2130, %v2187
    %v2195 = vadd.f32 %v2131, %v2188
    %s2196 = sld [smem:[#allocation2 + $0x6e]]
    %v2197 = vstv %s2196
    %v2198 = vmul.f32 %v2197, %v1959
    %v2199 = vmul.f32 %v2197, %v1961
    %v2200 = vmul.f32 %v2197, %v1963
    %v2201 = vmul.f32 %v2197, %v1965
    %v2202 = vmul.f32 %v2197, %v1967
    %v2203 = vmul.f32 %v2197, %v1969
    %v2204 = vmul.f32 %v2197, %v1971
    %v2205 = vadd.f32 %v2141, %v2198
    %v2206 = vadd.f32 %v2142, %v2199
    %v2207 = vadd.f32 %v2143, %v2200
    %v2208 = vadd.f32 %v2144, %v2201
    %v2209 = vadd.f32 %v2145, %v2202
    %v2210 = vadd.f32 %v2146, %v2203
    %v2211 = vadd.f32 %v2147, %v2204
    %s2212 = sld [smem:[#allocation2 + $0x6f]]
    %v2213 = vstv %s2212
    %v2214 = vmul.f32 %v2213, %v1959
    %v2215 = vmul.f32 %v2213, %v1961
    %v2216 = vmul.f32 %v2213, %v1963
    %v2217 = vmul.f32 %v2213, %v1965
    %v2218 = vmul.f32 %v2213, %v1967
    %v2219 = vmul.f32 %v2213, %v1969
    %v2220 = vmul.f32 %v2213, %v1971
    %v2221 = vadd.f32 %v2157, %v2214
    %v2222 = vadd.f32 %v2158, %v2215
    %v2223 = vadd.f32 %v2159, %v2216
    %v2224 = vadd.f32 %v2160, %v2217
    %v2225 = vadd.f32 %v2161, %v2218
    %v2226 = vadd.f32 %v2162, %v2219
    %v2227 = vadd.f32 %v2163, %v2220
    %s2228 = scalar_lea.vmem %s1916, 1
    %v2229 = vld [vmem:[%s2228] ss:$2 sm:$0x7f]
    %s2230 = scalar_lea.vmem %s1916, 33
    %v2231 = vld [vmem:[%s2230] ss:$2 sm:$0x7f]
    %s2232 = scalar_lea.vmem %s1916, 65
    %v2233 = vld [vmem:[%s2232] ss:$2 sm:$0x7f]
    %s2234 = scalar_lea.vmem %s1916, 97
    %v2235 = vld [vmem:[%s2234] ss:$2 sm:$0x7f]
    %s2236 = scalar_lea.vmem %s1916, 129
    %v2237 = vld [vmem:[%s2236] ss:$2 sm:$0x7f]
    %s2238 = scalar_lea.vmem %s1916, 161
    %v2239 = vld [vmem:[%s2238] ss:$2 sm:$0x7f]
    %s2240 = scalar_lea.vmem %s1916, 193
    %v2241 = vld [vmem:[%s2240] ss:$2 sm:$0x7f]
    %s2242 = scalar_lea.vmem %s1916, 257
    %v2243 = vld [vmem:[%s2242] ss:$2 sm:$0x7f]
    %s2244 = scalar_lea.vmem %s1916, 289
    %v2245 = vld [vmem:[%s2244] ss:$2 sm:$0x7f]
    %s2246 = scalar_lea.vmem %s1916, 321
    %v2247 = vld [vmem:[%s2246] ss:$2 sm:$0x7f]
    %s2248 = scalar_lea.vmem %s1916, 353
    %v2249 = vld [vmem:[%s2248] ss:$2 sm:$0x7f]
    %s2250 = scalar_lea.vmem %s1916, 385
    %v2251 = vld [vmem:[%s2250] ss:$2 sm:$0x7f]
    %s2252 = scalar_lea.vmem %s1916, 417
    %v2253 = vld [vmem:[%s2252] ss:$2 sm:$0x7f]
    %s2254 = scalar_lea.vmem %s1916, 449
    %v2255 = vld [vmem:[%s2254] ss:$2 sm:$0x7f]
    %s2256 = scalar_lea.vmem %s1916, 513
    %v2257 = vld [vmem:[%s2256] ss:$2 sm:$0x7f]
    %s2258 = scalar_lea.vmem %s1916, 545
    %v2259 = vld [vmem:[%s2258] ss:$2 sm:$0x7f]
    %s2260 = scalar_lea.vmem %s1916, 577
    %v2261 = vld [vmem:[%s2260] ss:$2 sm:$0x7f]
    %s2262 = scalar_lea.vmem %s1916, 609
    %v2263 = vld [vmem:[%s2262] ss:$2 sm:$0x7f]
    %s2264 = scalar_lea.vmem %s1916, 641
    %v2265 = vld [vmem:[%s2264] ss:$2 sm:$0x7f]
    %s2266 = scalar_lea.vmem %s1916, 673
    %v2267 = vld [vmem:[%s2266] ss:$2 sm:$0x7f]
    %s2268 = scalar_lea.vmem %s1916, 705
    %v2269 = vld [vmem:[%s2268] ss:$2 sm:$0x7f]
    %s2270 = scalar_lea.vmem %s1916, 769
    %v2271 = vld [vmem:[%s2270] ss:$2 sm:$0x7f]
    %s2272 = scalar_lea.vmem %s1916, 801
    %v2273 = vld [vmem:[%s2272] ss:$2 sm:$0x7f]
    %s2274 = scalar_lea.vmem %s1916, 833
    %v2275 = vld [vmem:[%s2274] ss:$2 sm:$0x7f]
    %s2276 = scalar_lea.vmem %s1916, 865
    %v2277 = vld [vmem:[%s2276] ss:$2 sm:$0x7f]
    %s2278 = scalar_lea.vmem %s1916, 897
    %v2279 = vld [vmem:[%s2278] ss:$2 sm:$0x7f]
    %s2280 = scalar_lea.vmem %s1916, 929
    %v2281 = vld [vmem:[%s2280] ss:$2 sm:$0x7f]
    %s2282 = scalar_lea.vmem %s1916, 961
    %v2283 = vld [vmem:[%s2282] ss:$2 sm:$0x7f]
    %s2284 = sld [smem:[#allocation2 + $0x70]]
    %v2285 = vstv %s2284
    %v2286 = vmul.f32 %v2285, %v2229
    %v2287 = vmul.f32 %v2285, %v2231
    %v2288 = vmul.f32 %v2285, %v2233
    %v2289 = vmul.f32 %v2285, %v2235
    %v2290 = vmul.f32 %v2285, %v2237
    %v2291 = vmul.f32 %v2285, %v2239
    %v2292 = vmul.f32 %v2285, %v2241
    %v2293 = vadd.f32 %v2173, %v2286
    %v2294 = vadd.f32 %v2174, %v2287
    %v2295 = vadd.f32 %v2175, %v2288
    %v2296 = vadd.f32 %v2176, %v2289
    %v2297 = vadd.f32 %v2177, %v2290
    %v2298 = vadd.f32 %v2178, %v2291
    %v2299 = vadd.f32 %v2179, %v2292
    %s2300 = sld [smem:[#allocation2 + $0x71]]
    %v2301 = vstv %s2300
    %v2302 = vmul.f32 %v2301, %v2229
    %v2303 = vmul.f32 %v2301, %v2231
    %v2304 = vmul.f32 %v2301, %v2233
    %v2305 = vmul.f32 %v2301, %v2235
    %v2306 = vmul.f32 %v2301, %v2237
    %v2307 = vmul.f32 %v2301, %v2239
    %v2308 = vmul.f32 %v2301, %v2241
    %v2309 = vadd.f32 %v2189, %v2302
    %v2310 = vadd.f32 %v2190, %v2303
    %v2311 = vadd.f32 %v2191, %v2304
    %v2312 = vadd.f32 %v2192, %v2305
    %v2313 = vadd.f32 %v2193, %v2306
    %v2314 = vadd.f32 %v2194, %v2307
    %v2315 = vadd.f32 %v2195, %v2308
    %s2316 = sld [smem:[#allocation2 + $0x72]]
    %v2317 = vstv %s2316
    %v2318 = vmul.f32 %v2317, %v2229
    %v2319 = vmul.f32 %v2317, %v2231
    %v2320 = vmul.f32 %v2317, %v2233
    %v2321 = vmul.f32 %v2317, %v2235
    %v2322 = vmul.f32 %v2317, %v2237
    %v2323 = vmul.f32 %v2317, %v2239
    %v2324 = vmul.f32 %v2317, %v2241
    %v2325 = vadd.f32 %v2205, %v2318
    %v2326 = vadd.f32 %v2206, %v2319
    %v2327 = vadd.f32 %v2207, %v2320
    %v2328 = vadd.f32 %v2208, %v2321
    %v2329 = vadd.f32 %v2209, %v2322
    %v2330 = vadd.f32 %v2210, %v2323
    %v2331 = vadd.f32 %v2211, %v2324
    %s2332 = sld [smem:[#allocation2 + $0x73]]
    %v2333 = vstv %s2332
    %v2334 = vmul.f32 %v2333, %v2229
    %v2335 = vmul.f32 %v2333, %v2231
    %v2336 = vmul.f32 %v2333, %v2233
    %v2337 = vmul.f32 %v2333, %v2235
    %v2338 = vmul.f32 %v2333, %v2237
    %v2339 = vmul.f32 %v2333, %v2239
    %v2340 = vmul.f32 %v2333, %v2241
    %v2341 = vadd.f32 %v2221, %v2334
    %v2342 = vadd.f32 %v2222, %v2335
    %v2343 = vadd.f32 %v2223, %v2336
    %v2344 = vadd.f32 %v2224, %v2337
    %v2345 = vadd.f32 %v2225, %v2338
    %v2346 = vadd.f32 %v2226, %v2339
    %v2347 = vadd.f32 %v2227, %v2340
    %s2348 = sld [smem:[#allocation2 + $0x74]]
    %v2349 = vstv %s2348
    %v2350 = vmul.f32 %v2349, %v2243
    %v2351 = vmul.f32 %v2349, %v2245
    %v2352 = vmul.f32 %v2349, %v2247
    %v2353 = vmul.f32 %v2349, %v2249
    %v2354 = vmul.f32 %v2349, %v2251
    %v2355 = vmul.f32 %v2349, %v2253
    %v2356 = vmul.f32 %v2349, %v2255
    %v2357 = vadd.f32 %v2293, %v2350
    %v2358 = vadd.f32 %v2294, %v2351
    %v2359 = vadd.f32 %v2295, %v2352
    %v2360 = vadd.f32 %v2296, %v2353
    %v2361 = vadd.f32 %v2297, %v2354
    %v2362 = vadd.f32 %v2298, %v2355
    %v2363 = vadd.f32 %v2299, %v2356
    %s2364 = sld [smem:[#allocation2 + $0x75]]
    %v2365 = vstv %s2364
    %v2366 = vmul.f32 %v2365, %v2243
    %v2367 = vmul.f32 %v2365, %v2245
    %v2368 = vmul.f32 %v2365, %v2247
    %v2369 = vmul.f32 %v2365, %v2249
    %v2370 = vmul.f32 %v2365, %v2251
    %v2371 = vmul.f32 %v2365, %v2253
    %v2372 = vmul.f32 %v2365, %v2255
    %v2373 = vadd.f32 %v2309, %v2366
    %v2374 = vadd.f32 %v2310, %v2367
    %v2375 = vadd.f32 %v2311, %v2368
    %v2376 = vadd.f32 %v2312, %v2369
    %v2377 = vadd.f32 %v2313, %v2370
    %v2378 = vadd.f32 %v2314, %v2371
    %v2379 = vadd.f32 %v2315, %v2372
    %s2380 = sld [smem:[#allocation2 + $0x76]]
    %v2381 = vstv %s2380
    %v2382 = vmul.f32 %v2381, %v2243
    %v2383 = vmul.f32 %v2381, %v2245
    %v2384 = vmul.f32 %v2381, %v2247
    %v2385 = vmul.f32 %v2381, %v2249
    %v2386 = vmul.f32 %v2381, %v2251
    %v2387 = vmul.f32 %v2381, %v2253
    %v2388 = vmul.f32 %v2381, %v2255
    %v2389 = vadd.f32 %v2325, %v2382
    %v2390 = vadd.f32 %v2326, %v2383
    %v2391 = vadd.f32 %v2327, %v2384
    %v2392 = vadd.f32 %v2328, %v2385
    %v2393 = vadd.f32 %v2329, %v2386
    %v2394 = vadd.f32 %v2330, %v2387
    %v2395 = vadd.f32 %v2331, %v2388
    %s2396 = sld [smem:[#allocation2 + $0x77]]
    %v2397 = vstv %s2396
    %v2398 = vmul.f32 %v2397, %v2243
    %v2399 = vmul.f32 %v2397, %v2245
    %v2400 = vmul.f32 %v2397, %v2247
    %v2401 = vmul.f32 %v2397, %v2249
    %v2402 = vmul.f32 %v2397, %v2251
    %v2403 = vmul.f32 %v2397, %v2253
    %v2404 = vmul.f32 %v2397, %v2255
    %v2405 = vadd.f32 %v2341, %v2398
    %v2406 = vadd.f32 %v2342, %v2399
    %v2407 = vadd.f32 %v2343, %v2400
    %v2408 = vadd.f32 %v2344, %v2401
    %v2409 = vadd.f32 %v2345, %v2402
    %v2410 = vadd.f32 %v2346, %v2403
    %v2411 = vadd.f32 %v2347, %v2404
    %s2412 = sld [smem:[#allocation2 + $0x78]]
    %v2413 = vstv %s2412
    %v2414 = vmul.f32 %v2413, %v2257
    %v2415 = vmul.f32 %v2413, %v2259
    %v2416 = vmul.f32 %v2413, %v2261
    %v2417 = vmul.f32 %v2413, %v2263
    %v2418 = vmul.f32 %v2413, %v2265
    %v2419 = vmul.f32 %v2413, %v2267
    %v2420 = vmul.f32 %v2413, %v2269
    %v2421 = vadd.f32 %v2357, %v2414
    %v2422 = vadd.f32 %v2358, %v2415
    %v2423 = vadd.f32 %v2359, %v2416
    %v2424 = vadd.f32 %v2360, %v2417
    %v2425 = vadd.f32 %v2361, %v2418
    %v2426 = vadd.f32 %v2362, %v2419
    %v2427 = vadd.f32 %v2363, %v2420
    %s2428 = sld [smem:[#allocation2 + $0x79]]
    %v2429 = vstv %s2428
    %v2430 = vmul.f32 %v2429, %v2257
    %v2431 = vmul.f32 %v2429, %v2259
    %v2432 = vmul.f32 %v2429, %v2261
    %v2433 = vmul.f32 %v2429, %v2263
    %v2434 = vmul.f32 %v2429, %v2265
    %v2435 = vmul.f32 %v2429, %v2267
    %v2436 = vmul.f32 %v2429, %v2269
    %v2437 = vadd.f32 %v2373, %v2430
    %v2438 = vadd.f32 %v2374, %v2431
    %v2439 = vadd.f32 %v2375, %v2432
    %v2440 = vadd.f32 %v2376, %v2433
    %v2441 = vadd.f32 %v2377, %v2434
    %v2442 = vadd.f32 %v2378, %v2435
    %v2443 = vadd.f32 %v2379, %v2436
    %s2444 = sld [smem:[#allocation2 + $0x7a]]
    %v2445 = vstv %s2444
    %v2446 = vmul.f32 %v2445, %v2257
    %v2447 = vmul.f32 %v2445, %v2259
    %v2448 = vmul.f32 %v2445, %v2261
    %v2449 = vmul.f32 %v2445, %v2263
    %v2450 = vmul.f32 %v2445, %v2265
    %v2451 = vmul.f32 %v2445, %v2267
    %v2452 = vmul.f32 %v2445, %v2269
    %v2453 = vadd.f32 %v2389, %v2446
    %v2454 = vadd.f32 %v2390, %v2447
    %v2455 = vadd.f32 %v2391, %v2448
    %v2456 = vadd.f32 %v2392, %v2449
    %v2457 = vadd.f32 %v2393, %v2450
    %v2458 = vadd.f32 %v2394, %v2451
    %v2459 = vadd.f32 %v2395, %v2452
    %s2460 = sld [smem:[#allocation2 + $0x7b]]
    %v2461 = vstv %s2460
    %v2462 = vmul.f32 %v2461, %v2257
    %v2463 = vmul.f32 %v2461, %v2259
    %v2464 = vmul.f32 %v2461, %v2261
    %v2465 = vmul.f32 %v2461, %v2263
    %v2466 = vmul.f32 %v2461, %v2265
    %v2467 = vmul.f32 %v2461, %v2267
    %v2468 = vmul.f32 %v2461, %v2269
    %v2469 = vadd.f32 %v2405, %v2462
    %v2470 = vadd.f32 %v2406, %v2463
    %v2471 = vadd.f32 %v2407, %v2464
    %v2472 = vadd.f32 %v2408, %v2465
    %v2473 = vadd.f32 %v2409, %v2466
    %v2474 = vadd.f32 %v2410, %v2467
    %v2475 = vadd.f32 %v2411, %v2468
    %s2476 = sld [smem:[#allocation2 + $0x7c]]
    %v2477 = vstv %s2476
    %v2478 = vmul.f32 %v2477, %v2271
    %v2479 = vmul.f32 %v2477, %v2273
    %v2480 = vmul.f32 %v2477, %v2275
    %v2481 = vmul.f32 %v2477, %v2277
    %v2482 = vmul.f32 %v2477, %v2279
    %v2483 = vmul.f32 %v2477, %v2281
    %v2484 = vmul.f32 %v2477, %v2283
    %v2485 = vadd.f32 %v2421, %v2478
    %v2486 = vadd.f32 %v2422, %v2479
    %v2487 = vadd.f32 %v2423, %v2480
    %v2488 = vadd.f32 %v2424, %v2481
    %v2489 = vadd.f32 %v2425, %v2482
    %v2490 = vadd.f32 %v2426, %v2483
    %v2491 = vadd.f32 %v2427, %v2484
    %s2492 = sld [smem:[#allocation2 + $0x7d]]
    %v2493 = vstv %s2492
    %v2494 = vmul.f32 %v2493, %v2271
    %v2495 = vmul.f32 %v2493, %v2273
    %v2496 = vmul.f32 %v2493, %v2275
    %v2497 = vmul.f32 %v2493, %v2277
    %v2498 = vmul.f32 %v2493, %v2279
    %v2499 = vmul.f32 %v2493, %v2281
    %v2500 = vmul.f32 %v2493, %v2283
    %v2501 = vadd.f32 %v2437, %v2494
    %v2502 = vadd.f32 %v2438, %v2495
    %v2503 = vadd.f32 %v2439, %v2496
    %v2504 = vadd.f32 %v2440, %v2497
    %v2505 = vadd.f32 %v2441, %v2498
    %v2506 = vadd.f32 %v2442, %v2499
    %v2507 = vadd.f32 %v2443, %v2500
    %s2508 = sld [smem:[#allocation2 + $0x7e]]
    %v2509 = vstv %s2508
    %v2510 = vmul.f32 %v2509, %v2271
    %v2511 = vmul.f32 %v2509, %v2273
    %v2512 = vmul.f32 %v2509, %v2275
    %v2513 = vmul.f32 %v2509, %v2277
    %v2514 = vmul.f32 %v2509, %v2279
    %v2515 = vmul.f32 %v2509, %v2281
    %v2516 = vmul.f32 %v2509, %v2283
    %v2517 = vadd.f32 %v2453, %v2510
    %v2518 = vadd.f32 %v2454, %v2511
    %v2519 = vadd.f32 %v2455, %v2512
    %v2520 = vadd.f32 %v2456, %v2513
    %v2521 = vadd.f32 %v2457, %v2514
    %v2522 = vadd.f32 %v2458, %v2515
    %v2523 = vadd.f32 %v2459, %v2516
    %s2524 = sld [smem:[#allocation2 + $0x7f]]
    %v2525 = vstv %s2524
    %v2526 = vmul.f32 %v2525, %v2271
    %v2527 = vmul.f32 %v2525, %v2273
    %v2528 = vmul.f32 %v2525, %v2275
    %v2529 = vmul.f32 %v2525, %v2277
    %v2530 = vmul.f32 %v2525, %v2279
    %v2531 = vmul.f32 %v2525, %v2281
    %v2532 = vmul.f32 %v2525, %v2283
    %v2533 = vadd.f32 %v2469, %v2526
    %v2534 = vadd.f32 %v2470, %v2527
    %v2535 = vadd.f32 %v2471, %v2528
    %v2536 = vadd.f32 %v2472, %v2529
    %v2537 = vadd.f32 %v2473, %v2530
    %v2538 = vadd.f32 %v2474, %v2531
    %v2539 = vadd.f32 %v2475, %v2532
    %s2540 = scalar_lea.vmem %s1916, 2
    %v2541 = vld [vmem:[%s2540] ss:$2 sm:$0x7f]
    %s2542 = scalar_lea.vmem %s1916, 34
    %v2543 = vld [vmem:[%s2542] ss:$2 sm:$0x7f]
    %s2544 = scalar_lea.vmem %s1916, 66
    %v2545 = vld [vmem:[%s2544] ss:$2 sm:$0x7f]
    %s2546 = scalar_lea.vmem %s1916, 98
    %v2547 = vld [vmem:[%s2546] ss:$2 sm:$0x7f]
    %s2548 = scalar_lea.vmem %s1916, 130
    %v2549 = vld [vmem:[%s2548] ss:$2 sm:$0x7f]
    %s2550 = scalar_lea.vmem %s1916, 162
    %v2551 = vld [vmem:[%s2550] ss:$2 sm:$0x7f]
    %s2552 = scalar_lea.vmem %s1916, 194
    %v2553 = vld [vmem:[%s2552] ss:$2 sm:$0x7f]
    %s2554 = scalar_lea.vmem %s1916, 258
    %v2555 = vld [vmem:[%s2554] ss:$2 sm:$0x7f]
    %s2556 = scalar_lea.vmem %s1916, 290
    %v2557 = vld [vmem:[%s2556] ss:$2 sm:$0x7f]
    %s2558 = scalar_lea.vmem %s1916, 322
    %v2559 = vld [vmem:[%s2558] ss:$2 sm:$0x7f]
    %s2560 = scalar_lea.vmem %s1916, 354
    %v2561 = vld [vmem:[%s2560] ss:$2 sm:$0x7f]
    %s2562 = scalar_lea.vmem %s1916, 386
    %v2563 = vld [vmem:[%s2562] ss:$2 sm:$0x7f]
    %s2564 = scalar_lea.vmem %s1916, 418
    %v2565 = vld [vmem:[%s2564] ss:$2 sm:$0x7f]
    %s2566 = scalar_lea.vmem %s1916, 450
    %v2567 = vld [vmem:[%s2566] ss:$2 sm:$0x7f]
    %s2568 = scalar_lea.vmem %s1916, 514
    %v2569 = vld [vmem:[%s2568] ss:$2 sm:$0x7f]
    %s2570 = scalar_lea.vmem %s1916, 546
    %v2571 = vld [vmem:[%s2570] ss:$2 sm:$0x7f]
    %s2572 = scalar_lea.vmem %s1916, 578
    %v2573 = vld [vmem:[%s2572] ss:$2 sm:$0x7f]
    %s2574 = scalar_lea.vmem %s1916, 610
    %v2575 = vld [vmem:[%s2574] ss:$2 sm:$0x7f]
    %s2576 = scalar_lea.vmem %s1916, 642
    %v2577 = vld [vmem:[%s2576] ss:$2 sm:$0x7f]
    %s2578 = scalar_lea.vmem %s1916, 674
    %v2579 = vld [vmem:[%s2578] ss:$2 sm:$0x7f]
    %s2580 = scalar_lea.vmem %s1916, 706
    %v2581 = vld [vmem:[%s2580] ss:$2 sm:$0x7f]
    %s2582 = scalar_lea.vmem %s1916, 770
    %v2583 = vld [vmem:[%s2582] ss:$2 sm:$0x7f]
    %s2584 = scalar_lea.vmem %s1916, 802
    %v2585 = vld [vmem:[%s2584] ss:$2 sm:$0x7f]
    %s2586 = scalar_lea.vmem %s1916, 834
    %v2587 = vld [vmem:[%s2586] ss:$2 sm:$0x7f]
    %s2588 = scalar_lea.vmem %s1916, 866
    %v2589 = vld [vmem:[%s2588] ss:$2 sm:$0x7f]
    %s2590 = scalar_lea.vmem %s1916, 898
    %v2591 = vld [vmem:[%s2590] ss:$2 sm:$0x7f]
    %s2592 = scalar_lea.vmem %s1916, 930
    %v2593 = vld [vmem:[%s2592] ss:$2 sm:$0x7f]
    %s2594 = scalar_lea.vmem %s1916, 962
    %v2595 = vld [vmem:[%s2594] ss:$2 sm:$0x7f]
    %s2596 = sld [smem:[#allocation2 + $0x80]]
    %v2597 = vstv %s2596
    %v2598 = vmul.f32 %v2597, %v2541
    %v2599 = vmul.f32 %v2597, %v2543
    %v2600 = vmul.f32 %v2597, %v2545
    %v2601 = vmul.f32 %v2597, %v2547
    %v2602 = vmul.f32 %v2597, %v2549
    %v2603 = vmul.f32 %v2597, %v2551
    %v2604 = vmul.f32 %v2597, %v2553
    %v2605 = vadd.f32 %v2485, %v2598
    %v2606 = vadd.f32 %v2486, %v2599
    %v2607 = vadd.f32 %v2487, %v2600
    %v2608 = vadd.f32 %v2488, %v2601
    %v2609 = vadd.f32 %v2489, %v2602
    %v2610 = vadd.f32 %v2490, %v2603
    %v2611 = vadd.f32 %v2491, %v2604
    %s2612 = sld [smem:[#allocation2 + $0x81]]
    %v2613 = vstv %s2612
    %v2614 = vmul.f32 %v2613, %v2541
    %v2615 = vmul.f32 %v2613, %v2543
    %v2616 = vmul.f32 %v2613, %v2545
    %v2617 = vmul.f32 %v2613, %v2547
    %v2618 = vmul.f32 %v2613, %v2549
    %v2619 = vmul.f32 %v2613, %v2551
    %v2620 = vmul.f32 %v2613, %v2553
    %v2621 = vadd.f32 %v2501, %v2614
    %v2622 = vadd.f32 %v2502, %v2615
    %v2623 = vadd.f32 %v2503, %v2616
    %v2624 = vadd.f32 %v2504, %v2617
    %v2625 = vadd.f32 %v2505, %v2618
    %v2626 = vadd.f32 %v2506, %v2619
    %v2627 = vadd.f32 %v2507, %v2620
    %s2628 = sld [smem:[#allocation2 + $0x82]]
    %v2629 = vstv %s2628
    %v2630 = vmul.f32 %v2629, %v2541
    %v2631 = vmul.f32 %v2629, %v2543
    %v2632 = vmul.f32 %v2629, %v2545
    %v2633 = vmul.f32 %v2629, %v2547
    %v2634 = vmul.f32 %v2629, %v2549
    %v2635 = vmul.f32 %v2629, %v2551
    %v2636 = vmul.f32 %v2629, %v2553
    %v2637 = vadd.f32 %v2517, %v2630
    %v2638 = vadd.f32 %v2518, %v2631
    %v2639 = vadd.f32 %v2519, %v2632
    %v2640 = vadd.f32 %v2520, %v2633
    %v2641 = vadd.f32 %v2521, %v2634
    %v2642 = vadd.f32 %v2522, %v2635
    %v2643 = vadd.f32 %v2523, %v2636
    %s2644 = sld [smem:[#allocation2 + $0x83]]
    %v2645 = vstv %s2644
    %v2646 = vmul.f32 %v2645, %v2541
    %v2647 = vmul.f32 %v2645, %v2543
    %v2648 = vmul.f32 %v2645, %v2545
    %v2649 = vmul.f32 %v2645, %v2547
    %v2650 = vmul.f32 %v2645, %v2549
    %v2651 = vmul.f32 %v2645, %v2551
    %v2652 = vmul.f32 %v2645, %v2553
    %v2653 = vadd.f32 %v2533, %v2646
    %v2654 = vadd.f32 %v2534, %v2647
    %v2655 = vadd.f32 %v2535, %v2648
    %v2656 = vadd.f32 %v2536, %v2649
    %v2657 = vadd.f32 %v2537, %v2650
    %v2658 = vadd.f32 %v2538, %v2651
    %v2659 = vadd.f32 %v2539, %v2652
    %s2660 = sld [smem:[#allocation2 + $0x84]]
    %v2661 = vstv %s2660
    %v2662 = vmul.f32 %v2661, %v2555
    %v2663 = vmul.f32 %v2661, %v2557
    %v2664 = vmul.f32 %v2661, %v2559
    %v2665 = vmul.f32 %v2661, %v2561
    %v2666 = vmul.f32 %v2661, %v2563
    %v2667 = vmul.f32 %v2661, %v2565
    %v2668 = vmul.f32 %v2661, %v2567
    %v2669 = vadd.f32 %v2605, %v2662
    %v2670 = vadd.f32 %v2606, %v2663
    %v2671 = vadd.f32 %v2607, %v2664
    %v2672 = vadd.f32 %v2608, %v2665
    %v2673 = vadd.f32 %v2609, %v2666
    %v2674 = vadd.f32 %v2610, %v2667
    %v2675 = vadd.f32 %v2611, %v2668
    %s2676 = sld [smem:[#allocation2 + $0x85]]
    %v2677 = vstv %s2676
    %v2678 = vmul.f32 %v2677, %v2555
    %v2679 = vmul.f32 %v2677, %v2557
    %v2680 = vmul.f32 %v2677, %v2559
    %v2681 = vmul.f32 %v2677, %v2561
    %v2682 = vmul.f32 %v2677, %v2563
    %v2683 = vmul.f32 %v2677, %v2565
    %v2684 = vmul.f32 %v2677, %v2567
    %v2685 = vadd.f32 %v2621, %v2678
    %v2686 = vadd.f32 %v2622, %v2679
    %v2687 = vadd.f32 %v2623, %v2680
    %v2688 = vadd.f32 %v2624, %v2681
    %v2689 = vadd.f32 %v2625, %v2682
    %v2690 = vadd.f32 %v2626, %v2683
    %v2691 = vadd.f32 %v2627, %v2684
    %s2692 = sld [smem:[#allocation2 + $0x86]]
    %v2693 = vstv %s2692
    %v2694 = vmul.f32 %v2693, %v2555
    %v2695 = vmul.f32 %v2693, %v2557
    %v2696 = vmul.f32 %v2693, %v2559
    %v2697 = vmul.f32 %v2693, %v2561
    %v2698 = vmul.f32 %v2693, %v2563
    %v2699 = vmul.f32 %v2693, %v2565
    %v2700 = vmul.f32 %v2693, %v2567
    %v2701 = vadd.f32 %v2637, %v2694
    %v2702 = vadd.f32 %v2638, %v2695
    %v2703 = vadd.f32 %v2639, %v2696
    %v2704 = vadd.f32 %v2640, %v2697
    %v2705 = vadd.f32 %v2641, %v2698
    %v2706 = vadd.f32 %v2642, %v2699
    %v2707 = vadd.f32 %v2643, %v2700
    %s2708 = sld [smem:[#allocation2 + $0x87]]
    %v2709 = vstv %s2708
    %v2710 = vmul.f32 %v2709, %v2555
    %v2711 = vmul.f32 %v2709, %v2557
    %v2712 = vmul.f32 %v2709, %v2559
    %v2713 = vmul.f32 %v2709, %v2561
    %v2714 = vmul.f32 %v2709, %v2563
    %v2715 = vmul.f32 %v2709, %v2565
    %v2716 = vmul.f32 %v2709, %v2567
    %v2717 = vadd.f32 %v2653, %v2710
    %v2718 = vadd.f32 %v2654, %v2711
    %v2719 = vadd.f32 %v2655, %v2712
    %v2720 = vadd.f32 %v2656, %v2713
    %v2721 = vadd.f32 %v2657, %v2714
    %v2722 = vadd.f32 %v2658, %v2715
    %v2723 = vadd.f32 %v2659, %v2716
    %s2724 = sld [smem:[#allocation2 + $0x88]]
    %v2725 = vstv %s2724
    %v2726 = vmul.f32 %v2725, %v2569
    %v2727 = vmul.f32 %v2725, %v2571
    %v2728 = vmul.f32 %v2725, %v2573
    %v2729 = vmul.f32 %v2725, %v2575
    %v2730 = vmul.f32 %v2725, %v2577
    %v2731 = vmul.f32 %v2725, %v2579
    %v2732 = vmul.f32 %v2725, %v2581
    %v2733 = vadd.f32 %v2669, %v2726
    %v2734 = vadd.f32 %v2670, %v2727
    %v2735 = vadd.f32 %v2671, %v2728
    %v2736 = vadd.f32 %v2672, %v2729
    %v2737 = vadd.f32 %v2673, %v2730
    %v2738 = vadd.f32 %v2674, %v2731
    %v2739 = vadd.f32 %v2675, %v2732
    %s2740 = sld [smem:[#allocation2 + $0x89]]
    %v2741 = vstv %s2740
    %v2742 = vmul.f32 %v2741, %v2569
    %v2743 = vmul.f32 %v2741, %v2571
    %v2744 = vmul.f32 %v2741, %v2573
    %v2745 = vmul.f32 %v2741, %v2575
    %v2746 = vmul.f32 %v2741, %v2577
    %v2747 = vmul.f32 %v2741, %v2579
    %v2748 = vmul.f32 %v2741, %v2581
    %v2749 = vadd.f32 %v2685, %v2742
    %v2750 = vadd.f32 %v2686, %v2743
    %v2751 = vadd.f32 %v2687, %v2744
    %v2752 = vadd.f32 %v2688, %v2745
    %v2753 = vadd.f32 %v2689, %v2746
    %v2754 = vadd.f32 %v2690, %v2747
    %v2755 = vadd.f32 %v2691, %v2748
    %s2756 = sld [smem:[#allocation2 + $0x8a]]
    %v2757 = vstv %s2756
    %v2758 = vmul.f32 %v2757, %v2569
    %v2759 = vmul.f32 %v2757, %v2571
    %v2760 = vmul.f32 %v2757, %v2573
    %v2761 = vmul.f32 %v2757, %v2575
    %v2762 = vmul.f32 %v2757, %v2577
    %v2763 = vmul.f32 %v2757, %v2579
    %v2764 = vmul.f32 %v2757, %v2581
    %v2765 = vadd.f32 %v2701, %v2758
    %v2766 = vadd.f32 %v2702, %v2759
    %v2767 = vadd.f32 %v2703, %v2760
    %v2768 = vadd.f32 %v2704, %v2761
    %v2769 = vadd.f32 %v2705, %v2762
    %v2770 = vadd.f32 %v2706, %v2763
    %v2771 = vadd.f32 %v2707, %v2764
    %s2772 = sld [smem:[#allocation2 + $0x8b]]
    %v2773 = vstv %s2772
    %v2774 = vmul.f32 %v2773, %v2569
    %v2775 = vmul.f32 %v2773, %v2571
    %v2776 = vmul.f32 %v2773, %v2573
    %v2777 = vmul.f32 %v2773, %v2575
    %v2778 = vmul.f32 %v2773, %v2577
    %v2779 = vmul.f32 %v2773, %v2579
    %v2780 = vmul.f32 %v2773, %v2581
    %v2781 = vadd.f32 %v2717, %v2774
    %v2782 = vadd.f32 %v2718, %v2775
    %v2783 = vadd.f32 %v2719, %v2776
    %v2784 = vadd.f32 %v2720, %v2777
    %v2785 = vadd.f32 %v2721, %v2778
    %v2786 = vadd.f32 %v2722, %v2779
    %v2787 = vadd.f32 %v2723, %v2780
    %s2788 = sld [smem:[#allocation2 + $0x8c]]
    %v2789 = vstv %s2788
    %v2790 = vmul.f32 %v2789, %v2583
    %v2791 = vmul.f32 %v2789, %v2585
    %v2792 = vmul.f32 %v2789, %v2587
    %v2793 = vmul.f32 %v2789, %v2589
    %v2794 = vmul.f32 %v2789, %v2591
    %v2795 = vmul.f32 %v2789, %v2593
    %v2796 = vmul.f32 %v2789, %v2595
    %v2797 = vadd.f32 %v2733, %v2790
    %v2798 = vadd.f32 %v2734, %v2791
    %v2799 = vadd.f32 %v2735, %v2792
    %v2800 = vadd.f32 %v2736, %v2793
    %v2801 = vadd.f32 %v2737, %v2794
    %v2802 = vadd.f32 %v2738, %v2795
    %v2803 = vadd.f32 %v2739, %v2796
    %s2804 = sld [smem:[#allocation2 + $0x8d]]
    %v2805 = vstv %s2804
    %v2806 = vmul.f32 %v2805, %v2583
    %v2807 = vmul.f32 %v2805, %v2585
    %v2808 = vmul.f32 %v2805, %v2587
    %v2809 = vmul.f32 %v2805, %v2589
    %v2810 = vmul.f32 %v2805, %v2591
    %v2811 = vmul.f32 %v2805, %v2593
    %v2812 = vmul.f32 %v2805, %v2595
    %v2813 = vadd.f32 %v2749, %v2806
    %v2814 = vadd.f32 %v2750, %v2807
    %v2815 = vadd.f32 %v2751, %v2808
    %v2816 = vadd.f32 %v2752, %v2809
    %v2817 = vadd.f32 %v2753, %v2810
    %v2818 = vadd.f32 %v2754, %v2811
    %v2819 = vadd.f32 %v2755, %v2812
    %s2820 = sld [smem:[#allocation2 + $0x8e]]
    %v2821 = vstv %s2820
    %v2822 = vmul.f32 %v2821, %v2583
    %v2823 = vmul.f32 %v2821, %v2585
    %v2824 = vmul.f32 %v2821, %v2587
    %v2825 = vmul.f32 %v2821, %v2589
    %v2826 = vmul.f32 %v2821, %v2591
    %v2827 = vmul.f32 %v2821, %v2593
    %v2828 = vmul.f32 %v2821, %v2595
    %v2829 = vadd.f32 %v2765, %v2822
    %v2830 = vadd.f32 %v2766, %v2823
    %v2831 = vadd.f32 %v2767, %v2824
    %v2832 = vadd.f32 %v2768, %v2825
    %v2833 = vadd.f32 %v2769, %v2826
    %v2834 = vadd.f32 %v2770, %v2827
    %v2835 = vadd.f32 %v2771, %v2828
    %s2836 = sld [smem:[#allocation2 + $0x8f]]
    %v2837 = vstv %s2836
    %v2838 = vmul.f32 %v2837, %v2583
    %v2839 = vmul.f32 %v2837, %v2585
    %v2840 = vmul.f32 %v2837, %v2587
    %v2841 = vmul.f32 %v2837, %v2589
    %v2842 = vmul.f32 %v2837, %v2591
    %v2843 = vmul.f32 %v2837, %v2593
    %v2844 = vmul.f32 %v2837, %v2595
    %v2845 = vadd.f32 %v2781, %v2838
    %v2846 = vadd.f32 %v2782, %v2839
    %v2847 = vadd.f32 %v2783, %v2840
    %v2848 = vadd.f32 %v2784, %v2841
    %v2849 = vadd.f32 %v2785, %v2842
    %v2850 = vadd.f32 %v2786, %v2843
    %v2851 = vadd.f32 %v2787, %v2844
    %s2852 = sld [smem:[#allocation4]]
    %v2853 = vstv %s2852
    %v2854 = vadd.f32 %v2797, %v2853
    %v2855 = vadd.f32 %v2798, %v2853
    %v2856 = vadd.f32 %v2799, %v2853
    %v2857 = vadd.f32 %v2800, %v2853
    %v2858 = vadd.f32 %v2801, %v2853
    %v2859 = vadd.f32 %v2802, %v2853
    %v2860 = vadd.f32 %v2803, %v2853
    %v2861 = vmax.f32 %v2854, 0.0
    %v2862 = vmax.f32 %v2855, 0.0
    %v2863 = vmax.f32 %v2856, 0.0
    %v2864 = vmax.f32 %v2857, 0.0
    %v2865 = vmax.f32 %v2858, 0.0
    %v2866 = vmax.f32 %v2859, 0.0
    %v2867 = vmax.f32 %v2860, 0.0
    %vm2868 = vcmask 14336
    %v2869 = vsel %vm2868, %v2861, 0.0
    %v2870 = vsel %vm2868, %v2862, 0.0
    %v2871 = vadd.f32 %v2869, %v2870
    %v2872 = vsel %vm2868, %v2863, 0.0
    %v2873 = vadd.f32 %v2871, %v2872
    %v2874 = vsel %vm2868, %v2864, 0.0
    %v2875 = vadd.f32 %v2873, %v2874
    %v2876 = vsel %vm2868, %v2865, 0.0
    %v2877 = vadd.f32 %v2875, %v2876
    %v2878 = vsel %vm2868, %v2866, 0.0
    %v2879 = vadd.f32 %v2877, %v2878
    %v2880 = vsel %vm2868, %v2867, 0.0
    %v2881 = vadd.f32 %v2879, %v2880
    %v2882 = vrot.slane %v2881, 4
    %v2883 = vadd.f32 %v2881, %v2882
    %v2884 = vrot.slane %v2883, 2
    %v2885 = vadd.f32 %v2883, %v2884
    %v2886 = vrot.slane %v2885, 1
    %v2887 = vadd.f32 %v2885, %v2886
    %v2888 = vmul.f32 %v2887, 0.020408163
    %s2889 = sld [smem:[#allocation4 + $0x1]]
    %v2890 = vstv %s2889
    %v2891 = vadd.f32 %v2813, %v2890
    %v2892 = vadd.f32 %v2814, %v2890
    %v2893 = vadd.f32 %v2815, %v2890
    %v2894 = vadd.f32 %v2816, %v2890
    %v2895 = vadd.f32 %v2817, %v2890
    %v2896 = vadd.f32 %v2818, %v2890
    %v2897 = vadd.f32 %v2819, %v2890
    %v2898 = vmax.f32 %v2891, 0.0
    %v2899 = vmax.f32 %v2892, 0.0
    %v2900 = vmax.f32 %v2893, 0.0
    %v2901 = vmax.f32 %v2894, 0.0
    %v2902 = vmax.f32 %v2895, 0.0
    %v2903 = vmax.f32 %v2896, 0.0
    %v2904 = vmax.f32 %v2897, 0.0
    %v2905 = vsel %vm2868, %v2898, 0.0
    %v2906 = vsel %vm2868, %v2899, 0.0
    %v2907 = vadd.f32 %v2905, %v2906
    %v2908 = vsel %vm2868, %v2900, 0.0
    %v2909 = vadd.f32 %v2907, %v2908
    %v2910 = vsel %vm2868, %v2901, 0.0
    %v2911 = vadd.f32 %v2909, %v2910
    %v2912 = vsel %vm2868, %v2902, 0.0
    %v2913 = vadd.f32 %v2911, %v2912
    %v2914 = vsel %vm2868, %v2903, 0.0
    %v2915 = vadd.f32 %v2913, %v2914
    %v2916 = vsel %vm2868, %v2904, 0.0
    %v2917 = vadd.f32 %v2915, %v2916
    %v2918 = vrot.slane %v2917, 4
    %v2919 = vadd.f32 %v2917, %v2918
    %v2920 = vrot.slane %v2919, 2
    %v2921 = vadd.f32 %v2919, %v2920
    %v2922 = vrot.slane %v2921, 1
    %v2923 = vadd.f32 %v2921, %v2922
    %v2924 = vmul.f32 %v2923, 0.020408163
    %s2925 = sld [smem:[#allocation4 + $0x2]]
    %v2926 = vstv %s2925
    %v2927 = vadd.f32 %v2829, %v2926
    %v2928 = vadd.f32 %v2830, %v2926
    %v2929 = vadd.f32 %v2831, %v2926
    %v2930 = vadd.f32 %v2832, %v2926
    %v2931 = vadd.f32 %v2833, %v2926
    %v2932 = vadd.f32 %v2834, %v2926
    %v2933 = vadd.f32 %v2835, %v2926
    %v2934 = vmax.f32 %v2927, 0.0
    %v2935 = vmax.f32 %v2928, 0.0
    %v2936 = vmax.f32 %v2929, 0.0
    %v2937 = vmax.f32 %v2930, 0.0
    %v2938 = vmax.f32 %v2931, 0.0
    %v2939 = vmax.f32 %v2932, 0.0
    %v2940 = vmax.f32 %v2933, 0.0
    %v2941 = vsel %vm2868, %v2934, 0.0
    %v2942 = vsel %vm2868, %v2935, 0.0
    %v2943 = vadd.f32 %v2941, %v2942
    %v2944 = vsel %vm2868, %v2936, 0.0
    %v2945 = vadd.f32 %v2943, %v2944
    %v2946 = vsel %vm2868, %v2937, 0.0
    %v2947 = vadd.f32 %v2945, %v2946
    %v2948 = vsel %vm2868, %v2938, 0.0
    %v2949 = vadd.f32 %v2947, %v2948
    %v2950 = vsel %vm2868, %v2939, 0.0
    %v2951 = vadd.f32 %v2949, %v2950
    %v2952 = vsel %vm2868, %v2940, 0.0
    %v2953 = vadd.f32 %v2951, %v2952
    %v2954 = vrot.slane %v2953, 4
    %v2955 = vadd.f32 %v2953, %v2954
    %v2956 = vrot.slane %v2955, 2
    %v2957 = vadd.f32 %v2955, %v2956
    %v2958 = vrot.slane %v2957, 1
    %v2959 = vadd.f32 %v2957, %v2958
    %v2960 = vmul.f32 %v2959, 0.020408163
    %s2961 = sld [smem:[#allocation4 + $0x3]]
    %v2962 = vstv %s2961
    %v2963 = vadd.f32 %v2845, %v2962
    %v2964 = vadd.f32 %v2846, %v2962
    %v2965 = vadd.f32 %v2847, %v2962
    %v2966 = vadd.f32 %v2848, %v2962
    %v2967 = vadd.f32 %v2849, %v2962
    %v2968 = vadd.f32 %v2850, %v2962
    %v2969 = vadd.f32 %v2851, %v2962
    %v2970 = vmax.f32 %v2963, 0.0
    %v2971 = vmax.f32 %v2964, 0.0
    %v2972 = vmax.f32 %v2965, 0.0
    %v2973 = vmax.f32 %v2966, 0.0
    %v2974 = vmax.f32 %v2967, 0.0
    %v2975 = vmax.f32 %v2968, 0.0
    %v2976 = vmax.f32 %v2969, 0.0
    %v2977 = vsel %vm2868, %v2970, 0.0
    %v2978 = vsel %vm2868, %v2971, 0.0
    %v2979 = vadd.f32 %v2977, %v2978
    %v2980 = vsel %vm2868, %v2972, 0.0
    %v2981 = vadd.f32 %v2979, %v2980
    %v2982 = vsel %vm2868, %v2973, 0.0
    %v2983 = vadd.f32 %v2981, %v2982
    %v2984 = vsel %vm2868, %v2974, 0.0
    %v2985 = vadd.f32 %v2983, %v2984
    %v2986 = vsel %vm2868, %v2975, 0.0
    %v2987 = vadd.f32 %v2985, %v2986
    %v2988 = vsel %vm2868, %v2976, 0.0
    %v2989 = vadd.f32 %v2987, %v2988
    %v2990 = vrot.slane %v2989, 4
    %v2991 = vadd.f32 %v2989, %v2990
    %v2992 = vrot.slane %v2991, 2
    %v2993 = vadd.f32 %v2991, %v2992
    %v2994 = vrot.slane %v2993, 1
    %v2995 = vadd.f32 %v2993, %v2994
    %v2996 = vmul.f32 %v2995, 0.020408163
    %vm2997 = vcmask 1040384
    %v2998 = vsel %vm2997, %v2888, %v2924
    %vm2999 = vcmask 1041408
    %v3000 = vsel %vm2999, %v2998, %v2960
    %vm3001 = vcmask 1042432
    %v3002 = vsel %vm3001, %v3000, %v2996
    %v3003 = vld [vmem:[%s3] sm:$0xf]
    %v3004 = vld [vmem:[%s4] sm:$0xf]
    %3006 = vset.pattern.permute.xlu0 0
    %3007 = vperm.xlu0 %3006, %v3004
    %v3008 = vpop.permute.xlu0 %3007
    %vm3010 = vcmask 31744
    %v3012 = vsel %vm3010, %v3003, 0
    %vm3014 = vcmask 1043456
    %v3016 = vsel %vm3014, %v3002, 0
    %3018 = vmatprep.subr.mxu0 0.0
    %3019 = vmatpush1.msra.mxu0 %v3016
    %3020 = vmatprep.subr.mxu0 0.0
    %3021 = vmatpush1.msra.mxu0 0.0
    %3022 = vmatprep.subr.mxu0 0.0
    %3023 = vmatpush1.msra.mxu0 0.0
    %3024 = vmatprep.subr.mxu0 0.0
    %3025 = vmatpush1.msra.mxu0 0.0
    %3026 = vmatprep.subr.mxu0 0.0
    %3027 = vmatpush1.msra.mxu0 0.0
    %3028 = vmatprep.subr.mxu0 0.0
    %3029 = vmatpush1.msra.mxu0 0.0
    %3030 = vmatprep.subr.mxu0 0.0
    %3031 = vmatpush1.msra.mxu0 0.0
    %3032 = vmatprep.subr.mxu0 0.0
    %3033 = vmatpush1.msra.mxu0 0.0
    %3034 = vmatprep.subr.mxu0 0.0
    %3035 = vmatpush1.msra.mxu0 0.0
    %3036 = vmatprep.subr.mxu0 0.0
    %3037 = vmatpush1.msra.mxu0 0.0
    %3038 = vmatprep.subr.mxu0 0.0
    %3039 = vmatpush1.msra.mxu0 0.0
    %3040 = vmatprep.subr.mxu0 0.0
    %3041 = vmatpush1.msra.mxu0 0.0
    %3042 = vmatprep.subr.mxu0 0.0
    %3043 = vmatpush1.msra.mxu0 0.0
    %3044 = vmatprep.subr.mxu0 0.0
    %3045 = vmatpush1.msra.mxu0 0.0
    %3046 = vmatprep.subr.mxu0 0.0
    %3047 = vmatpush1.msra.mxu0 0.0
    %3048 = vmatprep.subr.mxu0 0.0
    %3049 = vmatpush1.msra.mxu0 0.0
    %3050 = vmatprep.subr.mxu0 0.0
    %3051 = vmatpush1.msra.mxu0 0.0
    %3052 = vmatprep.subr.mxu0 0.0
    %3053 = vmatpush1.msra.mxu0 0.0
    %3054 = vmatprep.subr.mxu0 0.0
    %3055 = vmatpush1.msra.mxu0 0.0
    %3056 = vmatprep.subr.mxu0 0.0
    %3057 = vmatpush1.msra.mxu0 0.0
    %3058 = vmatprep.subr.mxu0 0.0
    %3059 = vmatpush1.msra.mxu0 0.0
    %3060 = vmatprep.subr.mxu0 0.0
    %3061 = vmatpush1.msra.mxu0 0.0
    %3062 = vmatprep.subr.mxu0 0.0
    %3063 = vmatpush1.msra.mxu0 0.0
    %3064 = vmatprep.subr.mxu0 0.0
    %3065 = vmatpush1.msra.mxu0 0.0
    %3066 = vmatprep.subr.mxu0 0.0
    %3067 = vmatpush1.msra.mxu0 0.0
    %3068 = vmatprep.subr.mxu0 0.0
    %3069 = vmatpush1.msra.mxu0 0.0
    %3070 = vmatprep.subr.mxu0 0.0
    %3071 = vmatpush1.msra.mxu0 0.0
    %3072 = vmatprep.subr.mxu0 0.0
    %3073 = vmatpush1.msra.mxu0 0.0
    %3074 = vmatprep.subr.mxu0 0.0
    %3075 = vmatpush1.msra.mxu0 0.0
    %3076 = vmatprep.subr.mxu0 0.0
    %3077 = vmatpush1.msra.mxu0 0.0
    %3078 = vmatprep.subr.mxu0 0.0
    %3079 = vmatpush1.msra.mxu0 0.0
    %3080 = vmatprep.subr.mxu0 0.0
    %3081 = vmatpush1.msra.mxu0 0.0
    %3082 = vmatprep.mubr.f32.mxu0 0.0
    %3083 = vmatmul.mubr.f32.gmra.mrb[0].mxu0 %v3012
    %v3084 = vpop.f32.mrb[0].mxu0
    %v3085 = vadd.f32 %v3008, %v3084
    %v3086 = vpop.f32.mrb[0].mxu0
    %3087 = vdwg.mxu0
    %v3088 = vmax.f32 %v3085, 0.0
    %v3089 = vxor.u32 %v3088, 2147483648
    %v3090 = vmul.f32 %v3089, 1.442695
    %v3091 = vpow.pop %v3090
    %v3092 = vadd.f32 %v3091, 1.0
    %v3093 = vrcp.pop %v3092
    %v3094 = vmul.f32 1.0, %v3093
    %v3095 = vround.ne.pseudo %v3094
    %vm3096 = vcmask 11264
    %3097 = vst.msk [vmem:[%s5] sm:$0xf] %vm3096, %v3095
    // Predicated region
    $region30: #{tpu_custom_call.1} parent=1 // pred_check
      _
    $region31: #{tpu_custom_call.1} parent=1 // pred_check_branch
      %3099 = sbr.rel (0) target = $region33
    $region32: #{tpu_custom_call.1} parent=1 // pred_region
      _
    $region33: #{tpu_custom_call.1} parent=1 // pred_fallthru
      _
    // Predicated region
    $region34: #{tpu_custom_call.1} parent=1 // pred_check
      _
    $region35: #{tpu_custom_call.1} parent=1 // pred_check_branch
      %3101 = sbr.rel (0) target = $region37
    $region36: #{tpu_custom_call.1} parent=1 // pred_region
      _
    $region37: #{tpu_custom_call.1} parent=1 // pred_fallthru
      _
    %3102 = vsyncpa [#allocation3], 1
    %3103 = vsyncpa [#allocation5], 1

</llo_original>
